<compile_context>
chip_gen: v6e
topology: v6e:2x2x1
jax: 0.10.0
libtpu: 0.0.40
codegen_flags: <defaults>
</compile_context>

<pallas_src>
import functools

import jax
import jax.numpy as jnp
from jax.experimental import pallas as pl
from jax.experimental.pallas import tpu as pltpu


# ----------------------------- kernels ---------------------------------------


def _edge_recon_fused_kernel(hs_ref, hd_ref, w1_ref, b1_ref, w2_ref, b2_ref, out_ref, *,
                             inv_two_d, dot_dtype):
    """Fused path for 2D <= 128 lanes: one K=2D matmul per layer (half the MXU passes)."""
    hs = hs_ref[...].astype(jnp.float32)                       # (TM, D)
    hd = hd_ref[...].astype(jnp.float32)                       # (TM, D)

    # h_edge tile: single-vreg lane concat; never materialized in HBM.
    hcat = jnp.concatenate([hs, hd], axis=-1)                  # (TM, 2D)

    z = (jnp.dot(hcat.astype(dot_dtype), w1_ref[...].astype(dot_dtype),
                 preferred_element_type=jnp.float32) + b1_ref[...])
    z = jnp.maximum(z, 0.0)
    hat = (jnp.dot(z.astype(dot_dtype), w2_ref[...].astype(dot_dtype),
                   preferred_element_type=jnp.float32) + b2_ref[...])

    d = hat - hcat
    per_edge = jnp.sum(d * d, axis=-1) * inv_two_d             # (TM,) mean over 2D features

    # Lane-dense store: edges live on the lane axis of a (1, TM) block.
    out_ref[...] = per_edge.reshape(1, -1)


def _edge_recon_split_kernel(hs_ref, hd_ref, w1a_ref, w1b_ref, b1_ref,
                             w2a_ref, w2b_ref, b2a_ref, b2b_ref, out_ref, *,
                             inv_two_d, dot_dtype):
    """Split-W path for 2D > 128 lanes: avoids a wide lane concat entirely."""
    hs = hs_ref[...].astype(jnp.float32)                       # (TM, D)
    hd = hd_ref[...].astype(jnp.float32)                       # (TM, D)
    hs_c = hs.astype(dot_dtype)
    hd_c = hd.astype(dot_dtype)

    # z = concat(hs, hd) @ W1 + b1, without materializing the concat:
    z = (jnp.dot(hs_c, w1a_ref[...].astype(dot_dtype), preferred_element_type=jnp.float32)
         + jnp.dot(hd_c, w1b_ref[...].astype(dot_dtype), preferred_element_type=jnp.float32)
         + b1_ref[...])                                        # (TM, 2D)
    z = jnp.maximum(z, 0.0)
    z_c = z.astype(dot_dtype)

    # h_edge_hat split into its first-D / last-D feature halves (column-split W2, b2):
    hat_a = jnp.dot(z_c, w2a_ref[...].astype(dot_dtype),
                    preferred_element_type=jnp.float32) + b2a_ref[...]
    hat_b = jnp.dot(z_c, w2b_ref[...].astype(dot_dtype),
                    preferred_element_type=jnp.float32) + b2b_ref[...]

    da = hat_a - hs
    db = hat_b - hd
    per_edge = (jnp.sum(da * da, axis=-1) + jnp.sum(db * db, axis=-1)) * inv_two_d  # (TM,)

    out_ref[...] = per_edge.reshape(1, -1)


# ----------------------------- wrapper ----------------------------------------


def _round_up(x, m):
    return ((x + m - 1) // m) * m


def _vmem_limit_bytes(tile_m, D):
    f32 = 4
    H2 = 2 * D
    inputs = 2 * 2 * tile_m * D * f32                 # h_src/h_dst tiles, double-buffered
    weights = 2 * (2 * H2 * H2 + 2 * H2) * f32        # W1, W2, b1, b2 (x2 pipeline buffers)
    out = 2 * tile_m * f32                            # (1, tile_m) output, double-buffered
    est = 2 * (inputs + weights + out) + (2 << 20)    # 2x safety margin + 2 MiB internal
    return int(min(max(est, 4 << 20), 48 << 20))      # well under v7x's 64 MiB per-TC VMEM


@functools.partial(jax.jit, static_argnames=("inference", "tile_m", "use_bf16_matmul"))
def edge_emb_reconstruction(h_src, h_dst, w1, b1, w2, b2, *, inference=False,
                            tile_m=None, use_bf16_matmul=False):
    N, D = h_src.shape
    assert h_dst.shape == (N, D)
    H2 = 2 * D
    assert w1.shape == (H2, H2) and w2.shape == (H2, H2)
    b1r = b1.reshape(1, H2)
    b2r = b2.reshape(1, H2)

    # Large tiles amortize per-step overhead; keep >= 4 grid steps so the "parallel" edge
    # axis can shard over v7x's 2 TensorCores; multiple of 128 keeps output stores
    # lane-dense and unmasked (except the single partial tail block).
    if tile_m is None:
        tile_m = min(4096, _round_up(pl.cdiv(N, 4), 128))
    num_tiles = pl.cdiv(N, tile_m)    # no wrapper-side jnp.pad: Pallas masks the tail block

    dot_dtype = jnp.bfloat16 if use_bf16_matmul else jnp.float32
    inv_two_d = 1.0 / float(H2)

    common = dict(
        out_shape=jax.ShapeDtypeStruct((1, N), jnp.float32),
        compiler_params=pltpu.CompilerParams(
            dimension_semantics=("parallel",),            # v7x: shard edge loop over 2 TCs
            vmem_limit_bytes=_vmem_limit_bytes(tile_m, D),
        ),
    )

    if H2 <= 128:
        # Fused path: concat fits a single vreg lane span, so one K=2D matmul per layer.
        kernel = functools.partial(_edge_recon_fused_kernel,
                                   inv_two_d=inv_two_d, dot_dtype=dot_dtype)
        per_edge = pl.pallas_call(
            kernel,
            grid_spec=pltpu.PrefetchScalarGridSpec(
                num_scalar_prefetch=0,
                grid=(num_tiles,),
                in_specs=[
                    pl.BlockSpec((tile_m, D), lambda i: (i, 0)),   # h_src tile
                    pl.BlockSpec((tile_m, D), lambda i: (i, 0)),   # h_dst tile
                    pl.BlockSpec((H2, H2), lambda i: (0, 0)),      # W1 (resident)
                    pl.BlockSpec((1, H2), lambda i: (0, 0)),       # b1
                    pl.BlockSpec((H2, H2), lambda i: (0, 0)),      # W2 (resident)
                    pl.BlockSpec((1, H2), lambda i: (0, 0)),       # b2
                ],
                out_specs=pl.BlockSpec((1, tile_m), lambda i: (0, i)),  # lane-dense loss
            ),
            **common,
        )(h_src, h_dst, w1, b1r, w2, b2r)
    else:
        # Wide embeddings (2D > 128): split W1 row-wise / W2,b2 column-wise in the wrapper
        # (pure layout plumbing) so h_edge never needs a wide in-kernel concat.
        w1a, w1b = w1[:D, :], w1[D:, :]
        w2a, w2b = w2[:, :D], w2[:, D:]
        b2a, b2b = b2r[:, :D], b2r[:, D:]
        kernel = functools.partial(_edge_recon_split_kernel,
                                   inv_two_d=inv_two_d, dot_dtype=dot_dtype)
        per_edge = pl.pallas_call(
            kernel,
            grid_spec=pltpu.PrefetchScalarGridSpec(
                num_scalar_prefetch=0,
                grid=(num_tiles,),
                in_specs=[
                    pl.BlockSpec((tile_m, D), lambda i: (i, 0)),   # h_src tile
                    pl.BlockSpec((tile_m, D), lambda i: (i, 0)),   # h_dst tile
                    pl.BlockSpec((D, H2), lambda i: (0, 0)),       # W1[:D]   (resident)
                    pl.BlockSpec((D, H2), lambda i: (0, 0)),       # W1[D:]   (resident)
                    pl.BlockSpec((1, H2), lambda i: (0, 0)),       # b1
                    pl.BlockSpec((H2, D), lambda i: (0, 0)),       # W2[:, :D] (resident)
                    pl.BlockSpec((H2, D), lambda i: (0, 0)),       # W2[:, D:] (resident)
                    pl.BlockSpec((1, D), lambda i: (0, 0)),        # b2[:, :D]
                    pl.BlockSpec((1, D), lambda i: (0, 0)),        # b2[:, D:]
                ],
                out_specs=pl.BlockSpec((1, tile_m), lambda i: (0, i)),
            ),
            **common,
        )(h_src, h_dst, w1a, w1b, b1r, w2a, w2b, b2a, b2b)

    per_edge = per_edge[0]                               # (N,) — no padded lanes to strip
    loss = per_edge if inference else jnp.mean(per_edge)
    return {"loss": loss}


# ----------------------------- reference & test -------------------------------


def _reference(h_src, h_dst, w1, b1, w2, b2, inference):
    h_edge = jnp.concatenate([h_src, h_dst], axis=-1).astype(jnp.float32)
    z = jnp.maximum(h_edge @ w1 + b1, 0.0)
    h_hat = z @ w2 + b2
    per_edge = jnp.mean((h_hat - h_edge) ** 2, axis=-1)
    return per_edge if inference else jnp.mean(per_edge)


def _make_inputs(N, D, key):
    H2 = 2 * D
    k_src, k_dst, k_w1, k_b1, k_w2, k_b2 = jax.random.split(key, 6)
    h_src = jax.random.normal(k_src, (N, D), dtype=jnp.float32)
    h_dst = jax.random.normal(k_dst, (N, D), dtype=jnp.float32)
    w1 = jax.random.normal(k_w1, (H2, H2), dtype=jnp.float32) * (1.0 / jnp.sqrt(H2))
    b1 = 0.1 * jax.random.normal(k_b1, (H2,), dtype=jnp.float32)
    w2 = jax.random.normal(k_w2, (H2, H2), dtype=jnp.float32) * (1.0 / jnp.sqrt(H2))
    b2 = 0.1 * jax.random.normal(k_b2, (H2,), dtype=jnp.float32)
    return h_src, h_dst, w1, b1, w2, b2


if __name__ == "__main__":
    root = jax.random.PRNGKey(0)
    k_small, k_wide = jax.random.split(root)

    # --- Small-embedding case (fused-matmul path, 2D = 64 <= 128 lanes) ------------
    N, D = 1024, 32
    h_src, h_dst, w1, b1, w2, b2 = _make_inputs(N, D, k_small)

    out_train = edge_emb_reconstruction(h_src, h_dst, w1, b1, w2, b2, inference=False)
    jax.block_until_ready(out_train["loss"])
    out_inf = edge_emb_reconstruction(h_src, h_dst, w1, b1, w2, b2, inference=True)
    jax.block_until_ready(out_inf["loss"])

    # Ragged edge count: exercises the partial tail tile (no wrapper-side padding).
    out_rag = edge_emb_reconstruction(h_src[: N - 100], h_dst[: N - 100], w1, b1, w2, b2,
                                      inference=True)
    jax.block_until_ready(out_rag["loss"])

    # Optional production mode: bf16 matmul operands, f32 accumulation/reduction.
    out_bf16 = edge_emb_reconstruction(h_src, h_dst, w1, b1, w2, b2,
                                       inference=True, use_bf16_matmul=True)
    jax.block_until_ready(out_bf16["loss"])

    ref_train = _reference(h_src, h_dst, w1, b1, w2, b2, inference=False)
    ref_inf = _reference(h_src, h_dst, w1, b1, w2, b2, inference=True)
    ref_rag = _reference(h_src[: N - 100], h_dst[: N - 100], w1, b1, w2, b2, inference=True)

    assert out_train["loss"].shape == ()
    assert out_inf["loss"].shape == (N,)
    assert out_rag["loss"].shape == (N - 100,)
    assert jnp.allclose(out_train["loss"], ref_train, rtol=1e-5, atol=1e-5)
    assert jnp.allclose(out_inf["loss"], ref_inf, rtol=1e-5, atol=1e-5)
    assert jnp.allclose(out_rag["loss"], ref_rag, rtol=1e-5, atol=1e-5)
    assert jnp.allclose(out_bf16["loss"], ref_inf, rtol=5e-2, atol=5e-2)

    # --- Wide-embedding case (split-W path, 2D = 256 > 128 lanes) ------------------
    Nw, Dw = 512, 128
    h_src_w, h_dst_w, w1_w, b1_w, w2_w, b2_w = _make_inputs(Nw, Dw, k_wide)

    out_w_train = edge_emb_reconstruction(h_src_w, h_dst_w, w1_w, b1_w, w2_w, b2_w,
                                          inference=False)
    out_w_inf = edge_emb_reconstruction(h_src_w, h_dst_w, w1_w, b1_w, w2_w, b2_w,
                                        inference=True)
    jax.block_until_ready(out_w_inf["loss"])

    ref_w_train = _reference(h_src_w, h_dst_w, w1_w, b1_w, w2_w, b2_w, inference=False)
    ref_w_inf = _reference(h_src_w, h_dst_w, w1_w, b1_w, w2_w, b2_w, inference=True)

    assert out_w_train["loss"].shape == ()
    assert out_w_inf["loss"].shape == (Nw,)
    assert jnp.allclose(out_w_train["loss"], ref_w_train, rtol=1e-5, atol=1e-5)
    assert jnp.allclose(out_w_inf["loss"], ref_w_inf, rtol=1e-5, atol=1e-5)

    print("KERNEL_OK")
</pallas_src>

<mosaic_0001>
module attributes {stable_mosaic.version = 11 : i64} {
  func.func @_edge_recon_fused_kernel(%arg0: i32, %arg1: memref<256x32xf32, #tpu.memory_space<vmem>>, %arg2: memref<256x32xf32, #tpu.memory_space<vmem>>, %arg3: memref<64x64xf32, #tpu.memory_space<vmem>>, %arg4: memref<1x64xf32, #tpu.memory_space<vmem>>, %arg5: memref<64x64xf32, #tpu.memory_space<vmem>>, %arg6: memref<1x64xf32, #tpu.memory_space<vmem>>, %arg7: memref<1x256xf32, #tpu.memory_space<vmem>>) attributes {dimension_semantics = [#tpu.dimension_semantics<parallel>], iteration_bounds = array<i64: 4>, scalar_prefetch = 0 : i64, scratch_operands = 0 : i64, tpu.core_type = #tpu.core_type<tc>, window_params = [{transform_indices = @transform_0, window_bounds = array<i64: 256, 32>}, {transform_indices = @transform_1, window_bounds = array<i64: 256, 32>}, {pipeline_mode = #tpu.pipeline_mode<synchronous>, transform_indices = @transform_2, window_bounds = array<i64: 64, 64>}, {pipeline_mode = #tpu.pipeline_mode<synchronous>, transform_indices = @transform_3, window_bounds = array<i64: 1, 64>}, {pipeline_mode = #tpu.pipeline_mode<synchronous>, transform_indices = @transform_4, window_bounds = array<i64: 64, 64>}, {pipeline_mode = #tpu.pipeline_mode<synchronous>, transform_indices = @transform_5, window_bounds = array<i64: 1, 64>}, {transform_indices = @transform_6, window_bounds = array<i64: 1, 256>}]} {
    %c0 = arith.constant 0 : index
    %c0_0 = arith.constant 0 : index
    %0 = vector.load %arg1[%c0, %c0_0] : memref<256x32xf32, #tpu.memory_space<vmem>>, vector<256x32xf32>
    %c0_1 = arith.constant 0 : index
    %c0_2 = arith.constant 0 : index
    %1 = vector.load %arg2[%c0_1, %c0_2] : memref<256x32xf32, #tpu.memory_space<vmem>>, vector<256x32xf32>
    %2 = tpu.concatenate %0, %1 in 1 : vector<256x32xf32>, vector<256x32xf32> -> vector<256x64xf32>
    %c0_3 = arith.constant 0 : index
    %c0_4 = arith.constant 0 : index
    %3 = vector.load %arg3[%c0_3, %c0_4] : memref<64x64xf32, #tpu.memory_space<vmem>>, vector<64x64xf32>
    %cst = arith.constant dense<0.000000e+00> : vector<256x64xf32>
    %4 = tpu.matmul %2, %3, %cst {dimension_numbers = #tpu.dot_dimension_numbers<[1], [0], [0], [1], [0, 0, 1, 1], [], []>} : vector<256x64xf32>, vector<64x64xf32>, vector<256x64xf32> -> vector<256x64xf32>
    %c0_5 = arith.constant 0 : index
    %c0_6 = arith.constant 0 : index
    %5 = vector.load %arg4[%c0_5, %c0_6] : memref<1x64xf32, #tpu.memory_space<vmem>>, vector<1x64xf32>
    %6 = vector.broadcast %5 : vector<1x64xf32> to vector<256x64xf32>
    %7 = arith.addf %4, %6 : vector<256x64xf32>
    %cst_7 = arith.constant 0.000000e+00 : f32
    %8 = vector.broadcast %cst_7 : f32 to vector<256x64xf32>
    %9 = arith.maximumf %7, %8 : vector<256x64xf32>
    %c0_8 = arith.constant 0 : index
    %c0_9 = arith.constant 0 : index
    %10 = vector.load %arg5[%c0_8, %c0_9] : memref<64x64xf32, #tpu.memory_space<vmem>>, vector<64x64xf32>
    %cst_10 = arith.constant dense<0.000000e+00> : vector<256x64xf32>
    %11 = tpu.matmul %9, %10, %cst_10 {dimension_numbers = #tpu.dot_dimension_numbers<[1], [0], [0], [1], [0, 0, 1, 1], [], []>} : vector<256x64xf32>, vector<64x64xf32>, vector<256x64xf32> -> vector<256x64xf32>
    %c0_11 = arith.constant 0 : index
    %c0_12 = arith.constant 0 : index
    %12 = vector.load %arg6[%c0_11, %c0_12] : memref<1x64xf32, #tpu.memory_space<vmem>>, vector<1x64xf32>
    %13 = vector.broadcast %12 : vector<1x64xf32> to vector<256x64xf32>
    %14 = arith.addf %11, %13 : vector<256x64xf32>
    %15 = arith.subf %14, %2 : vector<256x64xf32>
    %16 = arith.mulf %15, %15 : vector<256x64xf32>
    %cst_13 = arith.constant dense<0.000000e+00> : vector<256xf32>
    %17 = vector.multi_reduction <add>, %16, %cst_13 [1] : vector<256x64xf32> to vector<256xf32>
    %cst_14 = arith.constant 1.562500e-02 : f32
    %18 = vector.broadcast %cst_14 : f32 to vector<256xf32>
    %19 = arith.mulf %17, %18 : vector<256xf32>
    %20 = vector.shape_cast %19 : vector<256xf32> to vector<1x256xf32>
    %c0_15 = arith.constant 0 : index
    %c0_16 = arith.constant 0 : index
    %21 = vector.load %arg7[%c0_15, %c0_16] : memref<1x256xf32, #tpu.memory_space<vmem>>, vector<1x256xf32>
    tpu.vector_store %arg7[%c0_15, %c0_16], %20 {strides = array<i32>} : memref<1x256xf32, #tpu.memory_space<vmem>>, vector<1x256xf32>,
    return
  }
  func.func @transform_0(%arg0: i32) -> (i32, i32) {
    %c0_i32 = arith.constant 0 : i32
    %c0_i32_0 = arith.constant 0 : i32
    return %arg0, %c0_i32 : i32, i32
  }
  func.func @transform_1(%arg0: i32) -> (i32, i32) {
    %c0_i32 = arith.constant 0 : i32
    %c0_i32_0 = arith.constant 0 : i32
    return %arg0, %c0_i32 : i32, i32
  }
  func.func @transform_2(%arg0: i32) -> (i32, i32) {
    %c0_i32 = arith.constant 0 : i32
    %c0_i32_0 = arith.constant 0 : i32
    %c0_i32_1 = arith.constant 0 : i32
    return %c0_i32, %c0_i32_0 : i32, i32
  }
  func.func @transform_3(%arg0: i32) -> (i32, i32) {
    %c0_i32 = arith.constant 0 : i32
    %c0_i32_0 = arith.constant 0 : i32
    %c0_i32_1 = arith.constant 0 : i32
    return %c0_i32, %c0_i32_0 : i32, i32
  }
  func.func @transform_4(%arg0: i32) -> (i32, i32) {
    %c0_i32 = arith.constant 0 : i32
    %c0_i32_0 = arith.constant 0 : i32
    %c0_i32_1 = arith.constant 0 : i32
    return %c0_i32, %c0_i32_0 : i32, i32
  }
  func.func @transform_5(%arg0: i32) -> (i32, i32) {
    %c0_i32 = arith.constant 0 : i32
    %c0_i32_0 = arith.constant 0 : i32
    %c0_i32_1 = arith.constant 0 : i32
    return %c0_i32, %c0_i32_0 : i32, i32
  }
  func.func @transform_6(%arg0: i32) -> (i32, i32) {
    %c0_i32 = arith.constant 0 : i32
    %c0_i32_0 = arith.constant 0 : i32
    return %c0_i32, %arg0 : i32, i32
  }
}

</mosaic_0001>

<llo_original>
// kernel: edge_emb_reconstruction.1
$region0: #{edge_emb_reconstruction.1}
  #allocation0 [shape = 'u32[]', space=smem, size = 0x4, offset = 0x4, fixed_abs, tag = 'smem constant byte address 0x4 - core index']
  #allocation1 [shape = 'u32[144,128]{1,0:T(1,128)}', space=vmem, size = 0x12000, scoped, tag = 'internal scratch']
  %s0 = inlined_call_operand.vmem [shape: f32[1024,32], index: 0, kind: input, shape index: {}]
  %s1 = inlined_call_operand.vmem [shape: f32[1024,32], index: 1, kind: input, shape index: {}]
  %s2 = inlined_call_operand.vmem [shape: f32[64,64], index: 2, kind: input, shape index: {}]
  %s3 = inlined_call_operand.vmem [shape: f32[1,64], index: 3, kind: input, shape index: {}]
  %s4 = inlined_call_operand.vmem [shape: f32[64,64], index: 4, kind: input, shape index: {}]
  %s5 = inlined_call_operand.vmem [shape: f32[1,64], index: 5, kind: input, shape index: {}]
  %s6 = inlined_call_operand.vmem [shape: f32[1,1024], index: 6, kind: output, shape index: {}]
  %s7 = sld [smem:[#allocation0]]
  $region57: #{edge_emb_reconstruction.1} parent=0
    _
  %s9 = ssub.s32 1, %s7
  %s10 = scalar_select 0, %s9, %s7
  loop: start=0, step=1, limit=6
  $region2: #{edge_emb_reconstruction.1} parent=0 // loop_pre_header
    _
  $region3: #{edge_emb_reconstruction.1} parent=0 // loop_header
    %s12 = sphi 0, %s16
    %p13 = scmp.ge.s32.totalorder %s12, 6
    %s22 = sphi 0, %s24
    %s25 = sphi 0, %s22
    %s26 = sphi 0, %s25
    %s42 = sphi 0, %s26
    %s48 = sphi 0, %s50
    %s51 = sphi 0, %s48
    %s52 = sphi 0, %s51
    %s68 = sphi 0, %s52
    %s72 = sphi 0, %s72
    %s74 = sphi 0, %s72
    %s75 = sphi 0, %s74
    %s89 = sphi 0, %s75
    %s93 = sphi 0, %s93
    %s95 = sphi 0, %s93
    %s96 = sphi 0, %s95
    %s110 = sphi 0, %s96
    %s114 = sphi 0, %s114
    %s116 = sphi 0, %s114
    %s117 = sphi 0, %s116
    %s131 = sphi 0, %s117
    %s135 = sphi 0, %s135
    %s137 = sphi 0, %s135
    %s138 = sphi 0, %s137
    %s152 = sphi 0, %s138
    %s158 = sphi 0, %s160
    %s161 = sphi 0, %s158
    %s162 = sphi 0, %s161
    %s178 = sphi 0, %s162
  $region4: #{edge_emb_reconstruction.1} parent=0 // loop_header_branch
    %15 = sbr.rel (%p13) target = $region8
  $region5: #{edge_emb_reconstruction.1} parent=0 // loop_body
    %s17 = ssub.s32 %s12, 1
    %s18 = ssub.s32 %s12, 2
    %s19 = sadd.s32 %s12, 1
    %s20 = ssub.s32 %s12, %s19
    %p21 = scmp.eq.s32.totalorder %s20, 0
    %s23 = sadd.s32 %s22, 1
    %s24 = scalar_select %p21, %s22, %s23
    %p27 = pneg %p21
    %p28 = scmp.eq.s32.totalorder %s12, 3
    %p29 = por %p27, %p28
    %p30 = scmp.ne.s32.totalorder %s22, %s25
    %p31 = scmp.eq.s32.totalorder %s12, 0
    %p32 = por %p30, %p31
    %p33 = scmp.ne.s32.totalorder %s22, %s25
    %p34 = scmp.eq.s32.totalorder %s17, 3
    %p35 = por %p33, %p34
    %p36 = scmp.ne.s32.totalorder %s25, %s26
    %p37 = scmp.eq.s32.totalorder %s17, 0
    %p38 = por %p36, %p37
    %p39 = scmp.ne.s32.totalorder %s25, %s26
    %p40 = scmp.eq.s32.totalorder %s18, 3
    %p41 = por %p39, %p40
    %p43 = scmp.ne.s32.totalorder %s26, %s42
    %p44 = scmp.eq.s32.totalorder %s18, 0
    %p45 = por %p43, %p44
    %s46 = ssub.s32 %s12, %s19
    %p47 = scmp.eq.s32.totalorder %s46, 0
    %s49 = sadd.s32 %s48, 1
    %s50 = scalar_select %p47, %s48, %s49
    %p53 = pneg %p47
    %p54 = scmp.eq.s32.totalorder %s12, 3
    %p55 = por %p53, %p54
    %p56 = scmp.ne.s32.totalorder %s48, %s51
    %p57 = scmp.eq.s32.totalorder %s12, 0
    %p58 = por %p56, %p57
    %p59 = scmp.ne.s32.totalorder %s48, %s51
    %p60 = scmp.eq.s32.totalorder %s17, 3
    %p61 = por %p59, %p60
    %p62 = scmp.ne.s32.totalorder %s51, %s52
    %p63 = scmp.eq.s32.totalorder %s17, 0
    %p64 = por %p62, %p63
    %p65 = scmp.ne.s32.totalorder %s51, %s52
    %p66 = scmp.eq.s32.totalorder %s18, 3
    %p67 = por %p65, %p66
    %p69 = scmp.ne.s32.totalorder %s52, %s68
    %p70 = scmp.eq.s32.totalorder %s18, 0
    %p71 = por %p69, %p70
    %s73 = sadd.s32 %s72, 1
    %p76 = scmp.eq.s32.totalorder %s12, 3
    %p77 = scmp.ne.s32.totalorder %s72, %s74
    %p78 = scmp.eq.s32.totalorder %s12, 0
    %p79 = por %p77, %p78
    %p80 = scmp.ne.s32.totalorder %s72, %s74
    %p81 = scmp.eq.s32.totalorder %s17, 3
    %p82 = por %p80, %p81
    %p83 = scmp.ne.s32.totalorder %s74, %s75
    %p84 = scmp.eq.s32.totalorder %s17, 0
    %p85 = por %p83, %p84
    %p86 = scmp.ne.s32.totalorder %s74, %s75
    %p87 = scmp.eq.s32.totalorder %s18, 3
    %p88 = por %p86, %p87
    %p90 = scmp.ne.s32.totalorder %s75, %s89
    %p91 = scmp.eq.s32.totalorder %s18, 0
    %p92 = por %p90, %p91
    %s94 = sadd.s32 %s93, 1
    %p97 = scmp.eq.s32.totalorder %s12, 3
    %p98 = scmp.ne.s32.totalorder %s93, %s95
    %p99 = scmp.eq.s32.totalorder %s12, 0
    %p100 = por %p98, %p99
    %p101 = scmp.ne.s32.totalorder %s93, %s95
    %p102 = scmp.eq.s32.totalorder %s17, 3
    %p103 = por %p101, %p102
    %p104 = scmp.ne.s32.totalorder %s95, %s96
    %p105 = scmp.eq.s32.totalorder %s17, 0
    %p106 = por %p104, %p105
    %p107 = scmp.ne.s32.totalorder %s95, %s96
    %p108 = scmp.eq.s32.totalorder %s18, 3
    %p109 = por %p107, %p108
    %p111 = scmp.ne.s32.totalorder %s96, %s110
    %p112 = scmp.eq.s32.totalorder %s18, 0
    %p113 = por %p111, %p112
    %s115 = sadd.s32 %s114, 1
    %p118 = scmp.eq.s32.totalorder %s12, 3
    %p119 = scmp.ne.s32.totalorder %s114, %s116
    %p120 = scmp.eq.s32.totalorder %s12, 0
    %p121 = por %p119, %p120
    %p122 = scmp.ne.s32.totalorder %s114, %s116
    %p123 = scmp.eq.s32.totalorder %s17, 3
    %p124 = por %p122, %p123
    %p125 = scmp.ne.s32.totalorder %s116, %s117
    %p126 = scmp.eq.s32.totalorder %s17, 0
    %p127 = por %p125, %p126
    %p128 = scmp.ne.s32.totalorder %s116, %s117
    %p129 = scmp.eq.s32.totalorder %s18, 3
    %p130 = por %p128, %p129
    %p132 = scmp.ne.s32.totalorder %s117, %s131
    %p133 = scmp.eq.s32.totalorder %s18, 0
    %p134 = por %p132, %p133
    %s136 = sadd.s32 %s135, 1
    %p139 = scmp.eq.s32.totalorder %s12, 3
    %p140 = scmp.ne.s32.totalorder %s135, %s137
    %p141 = scmp.eq.s32.totalorder %s12, 0
    %p142 = por %p140, %p141
    %p143 = scmp.ne.s32.totalorder %s135, %s137
    %p144 = scmp.eq.s32.totalorder %s17, 3
    %p145 = por %p143, %p144
    %p146 = scmp.ne.s32.totalorder %s137, %s138
    %p147 = scmp.eq.s32.totalorder %s17, 0
    %p148 = por %p146, %p147
    %p149 = scmp.ne.s32.totalorder %s137, %s138
    %p150 = scmp.eq.s32.totalorder %s18, 3
    %p151 = por %p149, %p150
    %p153 = scmp.ne.s32.totalorder %s138, %s152
    %p154 = scmp.eq.s32.totalorder %s18, 0
    %p155 = por %p153, %p154
    %s156 = ssub.s32 %s12, %s19
    %p157 = scmp.eq.s32.totalorder %s156, 0
    %s159 = sadd.s32 %s158, 1
    %s160 = scalar_select %p157, %s158, %s159
    %p163 = pneg %p157
    %p164 = scmp.eq.s32.totalorder %s12, 3
    %p165 = por %p163, %p164
    %p166 = scmp.ne.s32.totalorder %s158, %s161
    %p167 = scmp.eq.s32.totalorder %s12, 0
    %p168 = por %p166, %p167
    %p169 = scmp.ne.s32.totalorder %s158, %s161
    %p170 = scmp.eq.s32.totalorder %s17, 3
    %p171 = por %p169, %p170
    %p172 = scmp.ne.s32.totalorder %s161, %s162
    %p173 = scmp.eq.s32.totalorder %s17, 0
    %p174 = por %p172, %p173
    %p175 = scmp.ne.s32.totalorder %s161, %s162
    %p176 = scmp.eq.s32.totalorder %s18, 3
    %p177 = por %p175, %p176
    %p179 = scmp.ne.s32.totalorder %s162, %s178
    %p180 = scmp.eq.s32.totalorder %s18, 0
    %p181 = por %p179, %p180
    %p182 = scmp.le.s32.totalorder 1, %s12
    %p183 = scmp.lt.s32.totalorder %s12, 5
    %p184 = pnand %p182, %p183
    %p185 = pneg %p184
    // Predicated region
    $region9: #{edge_emb_reconstruction.1} parent=5 // pred_check
      _
    $region10: #{edge_emb_reconstruction.1} parent=5 // pred_check_branch
      %187 = sbr.rel (%p184) target = $region12
    $region11: #{edge_emb_reconstruction.1} parent=5 // pred_region
      %s188 = ssub.s32 %s12, 1
      // Predicated region
      $region13: #{edge_emb_reconstruction.1} parent=11 // pred_check
        %p189 = pneg %p85
      $region14: #{edge_emb_reconstruction.1} parent=11 // pred_check_branch
        %191 = sbr.rel (%p189) target = $region16
      $region15: #{edge_emb_reconstruction.1} parent=11 // pred_region
        _
      $region16: #{edge_emb_reconstruction.1} parent=11 // pred_fallthru
        _
      // Predicated region
      $region17: #{edge_emb_reconstruction.1} parent=11 // pred_check
        %p192 = pneg %p106
      $region18: #{edge_emb_reconstruction.1} parent=11 // pred_check_branch
        %194 = sbr.rel (%p192) target = $region20
      $region19: #{edge_emb_reconstruction.1} parent=11 // pred_region
        _
      $region20: #{edge_emb_reconstruction.1} parent=11 // pred_fallthru
        _
      // Predicated region
      $region21: #{edge_emb_reconstruction.1} parent=11 // pred_check
        %p195 = pneg %p127
      $region22: #{edge_emb_reconstruction.1} parent=11 // pred_check_branch
        %197 = sbr.rel (%p195) target = $region24
      $region23: #{edge_emb_reconstruction.1} parent=11 // pred_region
        _
      $region24: #{edge_emb_reconstruction.1} parent=11 // pred_fallthru
        _
      // Predicated region
      $region25: #{edge_emb_reconstruction.1} parent=11 // pred_check
        %p198 = pneg %p148
      $region26: #{edge_emb_reconstruction.1} parent=11 // pred_check_branch
        %200 = sbr.rel (%p198) target = $region28
      $region27: #{edge_emb_reconstruction.1} parent=11 // pred_region
        _
      $region28: #{edge_emb_reconstruction.1} parent=11 // pred_fallthru
        _
    $region12: #{edge_emb_reconstruction.1} parent=5 // pred_fallthru
      _
    %p201 = scmp.lt.s32.totalorder %s12, 4
    // Predicated region
    $region29: #{edge_emb_reconstruction.1} parent=5 // pred_check
      %p202 = pneg %p201
    $region30: #{edge_emb_reconstruction.1} parent=5 // pred_check_branch
      %204 = sbr.rel (%p202) target = $region32
    $region31: #{edge_emb_reconstruction.1} parent=5 // pred_region
      // Predicated region
      $region33: #{edge_emb_reconstruction.1} parent=31 // pred_check
        %p205 = pneg %p32
      $region34: #{edge_emb_reconstruction.1} parent=31 // pred_check_branch
        %207 = sbr.rel (%p205) target = $region36
      $region35: #{edge_emb_reconstruction.1} parent=31 // pred_region
        %s208 = smul.u32 32, %s12
        %p209 = scmp.lt.s32.totalorder %s208, 127
        %s210 = scalar_select %p209, %s208, 127
        %s211 = smul.addr %s210, 8
        %s212 = scalar_lea.vmem %s0, %s211
        %s213 = smul.u32 32, %s12
      $region36: #{edge_emb_reconstruction.1} parent=31 // pred_fallthru
        _
      // Predicated region
      $region37: #{edge_emb_reconstruction.1} parent=31 // pred_check
        %p214 = pneg %p58
      $region38: #{edge_emb_reconstruction.1} parent=31 // pred_check_branch
        %216 = sbr.rel (%p214) target = $region40
      $region39: #{edge_emb_reconstruction.1} parent=31 // pred_region
        %s217 = smul.u32 32, %s12
        %p218 = scmp.lt.s32.totalorder %s217, 127
        %s219 = scalar_select %p218, %s217, 127
        %s220 = smul.addr %s219, 8
        %s221 = scalar_lea.vmem %s1, %s220
        %s222 = smul.u32 32, %s12
      $region40: #{edge_emb_reconstruction.1} parent=31 // pred_fallthru
        _
    $region32: #{edge_emb_reconstruction.1} parent=5 // pred_fallthru
      _
    %p223 = scmp.le.s32.totalorder 1, %s12
    %p224 = scmp.lt.s32.totalorder %s12, 5
    %p225 = pnand %p223, %p224
    %p226 = pneg %p225
    // Predicated region
    $region41: #{edge_emb_reconstruction.1} parent=5 // pred_check
      _
    $region42: #{edge_emb_reconstruction.1} parent=5 // pred_check_branch
      %228 = sbr.rel (%p225) target = $region44
    $region43: #{edge_emb_reconstruction.1} parent=5 // pred_region
      %s229 = ssub.s32 %s12, 1
      %s230 = smul.u32 32, %s17
      %p231 = scmp.lt.s32.totalorder %s230, 127
      %s232 = scalar_select %p231, %s230, 127
      %s233 = smul.addr %s232, 8
      %s234 = scalar_lea.vmem %s0, %s233
      %p235 = pneg %p38
      %p236 = pneg %p35
      %s237 = smul.u32 32, %s17
      %p238 = scmp.lt.s32.totalorder %s237, 127
      %s239 = scalar_select %p238, %s237, 127
      %s240 = smul.addr %s239, 8
      %s241 = scalar_lea.vmem %s1, %s240
      %p242 = pneg %p64
      %p243 = pneg %p61
      %p244 = pneg %p85
      %p245 = pneg %p82
      %p246 = pneg %p106
      %p247 = pneg %p103
      %p248 = pneg %p127
      %p249 = pneg %p124
      %p250 = pneg %p148
      %p251 = pneg %p145
      %p252 = pneg %p174
      %p253 = pneg %p171
      %s254 = smul.u32 2, %s17
      %p255 = scmp.lt.s32.totalorder %s254, 7
      %s256 = scalar_select %p255, %s254, 7
      %s257 = scalar_lea.vmem %s6, %s256
      %s258 = smul.u32 32, %s17
      %p259 = scmp.lt.s32.totalorder %s258, 127
      %s260 = scalar_select %p259, %s258, 127
      %s261 = smul.addr %s260, 8
      %s262 = scalar_lea.vmem %s0, %s261
      %s263 = smul.u32 32, %s17
      %s264 = smul.u32 32, %s17
      %p265 = scmp.lt.s32.totalorder %s264, 127
      %s266 = scalar_select %p265, %s264, 127
      %s267 = smul.addr %s266, 8
      %s268 = scalar_lea.vmem %s1, %s267
      %s269 = smul.u32 32, %s17
      %s270 = smul.u32 2, %s17
      %p271 = scmp.lt.s32.totalorder %s270, 7
      %s272 = scalar_select %p271, %s270, 7
      %s273 = scalar_lea.vmem %s6, %s272
      %s274 = smul.u32 2, %s17
      %v275 = vld [vmem:[%s262] sm:$0xff]
      %v276 = vld [vmem:[%s262 + $0x8] sm:$0xff]
      %v277 = vld [vmem:[%s262 + $0x10] sm:$0xff]
      %v278 = vld [vmem:[%s262 + $0x18] sm:$0xff]
      %v279 = vld [vmem:[%s262 + $0x20] sm:$0xff]
      %v280 = vld [vmem:[%s262 + $0x28] sm:$0xff]
      %v281 = vld [vmem:[%s262 + $0x30] sm:$0xff]
      %v282 = vld [vmem:[%s262 + $0x38] sm:$0xff]
      %v283 = vld [vmem:[%s262 + $0x40] sm:$0xff]
      %v284 = vld [vmem:[%s262 + $0x48] sm:$0xff]
      %v285 = vld [vmem:[%s262 + $0x50] sm:$0xff]
      %v286 = vld [vmem:[%s262 + $0x58] sm:$0xff]
      %v287 = vld [vmem:[%s262 + $0x60] sm:$0xff]
      %v288 = vld [vmem:[%s262 + $0x68] sm:$0xff]
      %v289 = vld [vmem:[%s262 + $0x70] sm:$0xff]
      %v290 = vld [vmem:[%s262 + $0x78] sm:$0xff]
      %v291 = vld [vmem:[%s262 + $0x80] sm:$0xff]
      %v292 = vld [vmem:[%s262 + $0x88] sm:$0xff]
      %v293 = vld [vmem:[%s262 + $0x90] sm:$0xff]
      %v294 = vld [vmem:[%s262 + $0x98] sm:$0xff]
      %v295 = vld [vmem:[%s262 + $0xa0] sm:$0xff]
      %v296 = vld [vmem:[%s262 + $0xa8] sm:$0xff]
      %v297 = vld [vmem:[%s262 + $0xb0] sm:$0xff]
      %v298 = vld [vmem:[%s262 + $0xb8] sm:$0xff]
      %v299 = vld [vmem:[%s262 + $0xc0] sm:$0xff]
      %v300 = vld [vmem:[%s262 + $0xc8] sm:$0xff]
      %v301 = vld [vmem:[%s262 + $0xd0] sm:$0xff]
      %v302 = vld [vmem:[%s262 + $0xd8] sm:$0xff]
      %v303 = vld [vmem:[%s262 + $0xe0] sm:$0xff]
      %v304 = vld [vmem:[%s262 + $0xe8] sm:$0xff]
      %v305 = vld [vmem:[%s262 + $0xf0] sm:$0xff]
      %v306 = vld [vmem:[%s262 + $0xf8] sm:$0xff]
      %v307 = vld [vmem:[%s268] sm:$0xff]
      %v308 = vld [vmem:[%s268 + $0x8] sm:$0xff]
      %v309 = vld [vmem:[%s268 + $0x10] sm:$0xff]
      %v310 = vld [vmem:[%s268 + $0x18] sm:$0xff]
      %v311 = vld [vmem:[%s268 + $0x20] sm:$0xff]
      %v312 = vld [vmem:[%s268 + $0x28] sm:$0xff]
      %v313 = vld [vmem:[%s268 + $0x30] sm:$0xff]
      %v314 = vld [vmem:[%s268 + $0x38] sm:$0xff]
      %v315 = vld [vmem:[%s268 + $0x40] sm:$0xff]
      %v316 = vld [vmem:[%s268 + $0x48] sm:$0xff]
      %v317 = vld [vmem:[%s268 + $0x50] sm:$0xff]
      %v318 = vld [vmem:[%s268 + $0x58] sm:$0xff]
      %v319 = vld [vmem:[%s268 + $0x60] sm:$0xff]
      %v320 = vld [vmem:[%s268 + $0x68] sm:$0xff]
      %v321 = vld [vmem:[%s268 + $0x70] sm:$0xff]
      %v322 = vld [vmem:[%s268 + $0x78] sm:$0xff]
      %v323 = vld [vmem:[%s268 + $0x80] sm:$0xff]
      %v324 = vld [vmem:[%s268 + $0x88] sm:$0xff]
      %v325 = vld [vmem:[%s268 + $0x90] sm:$0xff]
      %v326 = vld [vmem:[%s268 + $0x98] sm:$0xff]
      %v327 = vld [vmem:[%s268 + $0xa0] sm:$0xff]
      %v328 = vld [vmem:[%s268 + $0xa8] sm:$0xff]
      %v329 = vld [vmem:[%s268 + $0xb0] sm:$0xff]
      %v330 = vld [vmem:[%s268 + $0xb8] sm:$0xff]
      %v331 = vld [vmem:[%s268 + $0xc0] sm:$0xff]
      %v332 = vld [vmem:[%s268 + $0xc8] sm:$0xff]
      %v333 = vld [vmem:[%s268 + $0xd0] sm:$0xff]
      %v334 = vld [vmem:[%s268 + $0xd8] sm:$0xff]
      %v335 = vld [vmem:[%s268 + $0xe0] sm:$0xff]
      %v336 = vld [vmem:[%s268 + $0xe8] sm:$0xff]
      %v337 = vld [vmem:[%s268 + $0xf0] sm:$0xff]
      %v338 = vld [vmem:[%s268 + $0xf8] sm:$0xff]
      %371 = vrot.lane.b32.xlu0 %v307, 32
      %v372 = vpop.permute.xlu0 %371
      %373 = vrot.lane.b32.xlu0 %v308, 32
      %v374 = vpop.permute.xlu0 %373
      %375 = vrot.lane.b32.xlu0 %v309, 32
      %v376 = vpop.permute.xlu0 %375
      %377 = vrot.lane.b32.xlu0 %v310, 32
      %v378 = vpop.permute.xlu0 %377
      %379 = vrot.lane.b32.xlu0 %v311, 32
      %v380 = vpop.permute.xlu0 %379
      %381 = vrot.lane.b32.xlu0 %v312, 32
      %v382 = vpop.permute.xlu0 %381
      %383 = vrot.lane.b32.xlu0 %v313, 32
      %v384 = vpop.permute.xlu0 %383
      %385 = vrot.lane.b32.xlu0 %v314, 32
      %v386 = vpop.permute.xlu0 %385
      %387 = vrot.lane.b32.xlu0 %v315, 32
      %v388 = vpop.permute.xlu0 %387
      %389 = vrot.lane.b32.xlu0 %v316, 32
      %v390 = vpop.permute.xlu0 %389
      %391 = vrot.lane.b32.xlu0 %v317, 32
      %v392 = vpop.permute.xlu0 %391
      %393 = vrot.lane.b32.xlu0 %v318, 32
      %v394 = vpop.permute.xlu0 %393
      %395 = vrot.lane.b32.xlu0 %v319, 32
      %v396 = vpop.permute.xlu0 %395
      %397 = vrot.lane.b32.xlu0 %v320, 32
      %v398 = vpop.permute.xlu0 %397
      %399 = vrot.lane.b32.xlu0 %v321, 32
      %v400 = vpop.permute.xlu0 %399
      %401 = vrot.lane.b32.xlu0 %v322, 32
      %v402 = vpop.permute.xlu0 %401
      %403 = vrot.lane.b32.xlu0 %v323, 32
      %v404 = vpop.permute.xlu0 %403
      %405 = vrot.lane.b32.xlu0 %v324, 32
      %v406 = vpop.permute.xlu0 %405
      %407 = vrot.lane.b32.xlu0 %v325, 32
      %v408 = vpop.permute.xlu0 %407
      %409 = vrot.lane.b32.xlu0 %v326, 32
      %v410 = vpop.permute.xlu0 %409
      %411 = vrot.lane.b32.xlu0 %v327, 32
      %v412 = vpop.permute.xlu0 %411
      %413 = vrot.lane.b32.xlu0 %v328, 32
      %v414 = vpop.permute.xlu0 %413
      %415 = vrot.lane.b32.xlu0 %v329, 32
      %v416 = vpop.permute.xlu0 %415
      %417 = vrot.lane.b32.xlu0 %v330, 32
      %v418 = vpop.permute.xlu0 %417
      %419 = vrot.lane.b32.xlu0 %v331, 32
      %v420 = vpop.permute.xlu0 %419
      %421 = vrot.lane.b32.xlu0 %v332, 32
      %v422 = vpop.permute.xlu0 %421
      %423 = vrot.lane.b32.xlu0 %v333, 32
      %v424 = vpop.permute.xlu0 %423
      %425 = vrot.lane.b32.xlu0 %v334, 32
      %v426 = vpop.permute.xlu0 %425
      %427 = vrot.lane.b32.xlu0 %v335, 32
      %v428 = vpop.permute.xlu0 %427
      %429 = vrot.lane.b32.xlu0 %v336, 32
      %v430 = vpop.permute.xlu0 %429
      %431 = vrot.lane.b32.xlu0 %v337, 32
      %v432 = vpop.permute.xlu0 %431
      %433 = vrot.lane.b32.xlu0 %v338, 32
      %v434 = vpop.permute.xlu0 %433
      %vm467 = vcmask 261120
      %v468 = vsel %vm467, %v275, %v372
      %v469 = vsel %vm467, %v276, %v374
      %v470 = vsel %vm467, %v277, %v376
      %v471 = vsel %vm467, %v278, %v378
      %v472 = vsel %vm467, %v279, %v380
      %v473 = vsel %vm467, %v280, %v382
      %v474 = vsel %vm467, %v281, %v384
      %v475 = vsel %vm467, %v282, %v386
      %v476 = vsel %vm467, %v283, %v388
      %v477 = vsel %vm467, %v284, %v390
      %v478 = vsel %vm467, %v285, %v392
      %v479 = vsel %vm467, %v286, %v394
      %v480 = vsel %vm467, %v287, %v396
      %v481 = vsel %vm467, %v288, %v398
      %v482 = vsel %vm467, %v289, %v400
      %v483 = vsel %vm467, %v290, %v402
      %v484 = vsel %vm467, %v291, %v404
      %v485 = vsel %vm467, %v292, %v406
      %v486 = vsel %vm467, %v293, %v408
      %v487 = vsel %vm467, %v294, %v410
      %v488 = vsel %vm467, %v295, %v412
      %v489 = vsel %vm467, %v296, %v414
      %v490 = vsel %vm467, %v297, %v416
      %v491 = vsel %vm467, %v298, %v418
      %v492 = vsel %vm467, %v299, %v420
      %v493 = vsel %vm467, %v300, %v422
      %v494 = vsel %vm467, %v301, %v424
      %v495 = vsel %vm467, %v302, %v426
      %v496 = vsel %vm467, %v303, %v428
      %v497 = vsel %vm467, %v304, %v430
      %v498 = vsel %vm467, %v305, %v432
      %v499 = vsel %vm467, %v306, %v434
      %v500 = vld [vmem:[%s2] sm:$0xff]
      %v501 = vld [vmem:[%s2 + $0x8] sm:$0xff]
      %v502 = vld [vmem:[%s2 + $0x10] sm:$0xff]
      %v503 = vld [vmem:[%s2 + $0x18] sm:$0xff]
      %v504 = vld [vmem:[%s2 + $0x20] sm:$0xff]
      %v505 = vld [vmem:[%s2 + $0x28] sm:$0xff]
      %v506 = vld [vmem:[%s2 + $0x30] sm:$0xff]
      %v507 = vld [vmem:[%s2 + $0x38] sm:$0xff]
      %v508 = vld [vmem:[%s3] sm:$0x1]
      %v510 = vlaneseq
      %v511 = vshrl.u32 %v510, 7
      %v512 = vsub.s32 0, %v511
      %v513 = vrot.slane %v508, %v512
      %vm515 = vcmask 523264
      %v517 = vsel %vm515, %v468, 0
      %v520 = vsel %vm515, %v469, 0
      %v523 = vsel %vm515, %v470, 0
      %v526 = vsel %vm515, %v471, 0
      %v529 = vsel %vm515, %v472, 0
      %v532 = vsel %vm515, %v473, 0
      %v535 = vsel %vm515, %v474, 0
      %v538 = vsel %vm515, %v475, 0
      %v541 = vsel %vm515, %v476, 0
      %v544 = vsel %vm515, %v477, 0
      %v547 = vsel %vm515, %v478, 0
      %v550 = vsel %vm515, %v479, 0
      %v553 = vsel %vm515, %v480, 0
      %v556 = vsel %vm515, %v481, 0
      %v559 = vsel %vm515, %v482, 0
      %v562 = vsel %vm515, %v483, 0
      %v565 = vsel %vm515, %v484, 0
      %v568 = vsel %vm515, %v485, 0
      %v571 = vsel %vm515, %v486, 0
      %v574 = vsel %vm515, %v487, 0
      %v577 = vsel %vm515, %v488, 0
      %v580 = vsel %vm515, %v489, 0
      %v583 = vsel %vm515, %v490, 0
      %v586 = vsel %vm515, %v491, 0
      %v589 = vsel %vm515, %v492, 0
      %v592 = vsel %vm515, %v493, 0
      %v595 = vsel %vm515, %v494, 0
      %v598 = vsel %vm515, %v495, 0
      %v601 = vsel %vm515, %v496, 0
      %v604 = vsel %vm515, %v497, 0
      %v607 = vsel %vm515, %v498, 0
      %v610 = vsel %vm515, %v499, 0
      %612 = vmatprep.subr.mxu0 0.0
      %613 = vmatpush1.msra.mxu0 0.0
      %614 = vmatprep.subr.mxu0 0.0
      %615 = vmatpush1.msra.mxu0 0.0
      %616 = vmatprep.subr.mxu0 0.0
      %617 = vmatpush1.msra.mxu0 0.0
      %618 = vmatprep.subr.mxu0 0.0
      %619 = vmatpush1.msra.mxu0 0.0
      %620 = vmatprep.subr.mxu0 0.0
      %621 = vmatpush1.msra.mxu0 0.0
      %622 = vmatprep.subr.mxu0 0.0
      %623 = vmatpush1.msra.mxu0 0.0
      %624 = vmatprep.subr.mxu0 0.0
      %625 = vmatpush1.msra.mxu0 0.0
      %626 = vmatprep.subr.mxu0 0.0
      %627 = vmatpush1.msra.mxu0 0.0
      %628 = vmatprep.subr.mxu0 0.0
      %629 = vmatpush1.msra.mxu0 %v507
      %630 = vmatprep.subr.mxu0 0.0
      %631 = vmatpush1.msra.mxu0 %v506
      %632 = vmatprep.subr.mxu0 0.0
      %633 = vmatpush1.msra.mxu0 %v505
      %634 = vmatprep.subr.mxu0 0.0
      %635 = vmatpush1.msra.mxu0 %v504
      %636 = vmatprep.subr.mxu0 0.0
      %637 = vmatpush1.msra.mxu0 %v503
      %638 = vmatprep.subr.mxu0 0.0
      %639 = vmatpush1.msra.mxu0 %v502
      %640 = vmatprep.subr.mxu0 0.0
      %641 = vmatpush1.msra.mxu0 %v501
      %642 = vmatprep.subr.mxu0 0.0
      %643 = vmatpush1.msra.mxu0 %v500
      %644 = vmatprep.subr.mxu0 0.0
      %645 = vmatpush2.msra.mxu0 0.0
      %646 = vmatprep.subr.mxu0 0.0
      %647 = vmatpush2.msra.mxu0 0.0
      %648 = vmatprep.subr.mxu0 0.0
      %649 = vmatpush2.msra.mxu0 0.0
      %650 = vmatprep.subr.mxu0 0.0
      %651 = vmatpush2.msra.mxu0 0.0
      %652 = vmatprep.subr.mxu0 0.0
      %653 = vmatpush2.msra.mxu0 0.0
      %654 = vmatprep.subr.mxu0 0.0
      %655 = vmatpush2.msra.mxu0 0.0
      %656 = vmatprep.subr.mxu0 0.0
      %657 = vmatpush2.msra.mxu0 0.0
      %658 = vmatprep.subr.mxu0 0.0
      %659 = vmatpush2.msra.mxu0 0.0
      %660 = vmatprep.subr.mxu0 0.0
      %661 = vmatpush2.msra.mxu0 0.0
      %662 = vmatprep.subr.mxu0 0.0
      %663 = vmatpush2.msra.mxu0 0.0
      %664 = vmatprep.subr.mxu0 0.0
      %665 = vmatpush2.msra.mxu0 0.0
      %666 = vmatprep.subr.mxu0 0.0
      %667 = vmatpush2.msra.mxu0 0.0
      %668 = vmatprep.subr.mxu0 0.0
      %669 = vmatpush2.msra.mxu0 0.0
      %670 = vmatprep.subr.mxu0 0.0
      %671 = vmatpush2.msra.mxu0 0.0
      %672 = vmatprep.subr.mxu0 0.0
      %673 = vmatpush2.msra.mxu0 0.0
      %674 = vmatprep.subr.mxu0 0.0
      %675 = vmatpush2.msra.mxu0 0.0
      %676 = vmatprep.mubr.f32.mxu0 0.0
      %677 = vmatmul.mubr.f32.gmra.mxu0 %v517
      %v678 = vpop.f32.mrf.mxu0
      %v679 = vadd.f32 %v513, %v678
      %v680 = vpop.f32.mrf.mxu0
      %681 = vmatprep.mubr.f32.mxu0 0.0
      %682 = vmatmul.mubr.f32.gmra.mxu0 %v520
      %v683 = vpop.f32.mrf.mxu0
      %v684 = vadd.f32 %v513, %v683
      %v685 = vpop.f32.mrf.mxu0
      %686 = vmatprep.mubr.f32.mxu0 0.0
      %687 = vmatmul.mubr.f32.gmra.mxu0 %v523
      %v688 = vpop.f32.mrf.mxu0
      %v689 = vadd.f32 %v513, %v688
      %v690 = vpop.f32.mrf.mxu0
      %691 = vmatprep.mubr.f32.mxu0 0.0
      %692 = vmatmul.mubr.f32.gmra.mxu0 %v526
      %v693 = vpop.f32.mrf.mxu0
      %v694 = vadd.f32 %v513, %v693
      %v695 = vpop.f32.mrf.mxu0
      %696 = vmatprep.mubr.f32.mxu0 0.0
      %697 = vmatmul.mubr.f32.gmra.mxu0 %v529
      %v698 = vpop.f32.mrf.mxu0
      %v699 = vadd.f32 %v513, %v698
      %v700 = vpop.f32.mrf.mxu0
      %701 = vmatprep.mubr.f32.mxu0 0.0
      %702 = vmatmul.mubr.f32.gmra.mxu0 %v532
      %v703 = vpop.f32.mrf.mxu0
      %v704 = vadd.f32 %v513, %v703
      %v705 = vpop.f32.mrf.mxu0
      %706 = vmatprep.mubr.f32.mxu0 0.0
      %707 = vmatmul.mubr.f32.gmra.mxu0 %v535
      %v708 = vpop.f32.mrf.mxu0
      %v709 = vadd.f32 %v513, %v708
      %v710 = vpop.f32.mrf.mxu0
      %711 = vmatprep.mubr.f32.mxu0 0.0
      %712 = vmatmul.mubr.f32.gmra.mxu0 %v538
      %v713 = vpop.f32.mrf.mxu0
      %v714 = vadd.f32 %v513, %v713
      %v715 = vpop.f32.mrf.mxu0
      %716 = vmatprep.mubr.f32.mxu0 0.0
      %717 = vmatmul.mubr.f32.gmra.mxu0 %v541
      %v718 = vpop.f32.mrf.mxu0
      %v719 = vadd.f32 %v513, %v718
      %v720 = vpop.f32.mrf.mxu0
      %721 = vmatprep.mubr.f32.mxu0 0.0
      %722 = vmatmul.mubr.f32.gmra.mxu0 %v544
      %v723 = vpop.f32.mrf.mxu0
      %v724 = vadd.f32 %v513, %v723
      %v725 = vpop.f32.mrf.mxu0
      %726 = vmatprep.mubr.f32.mxu0 0.0
      %727 = vmatmul.mubr.f32.gmra.mxu0 %v547
      %v728 = vpop.f32.mrf.mxu0
      %v729 = vadd.f32 %v513, %v728
      %v730 = vpop.f32.mrf.mxu0
      %731 = vmatprep.mubr.f32.mxu0 0.0
      %732 = vmatmul.mubr.f32.gmra.mxu0 %v550
      %v733 = vpop.f32.mrf.mxu0
      %v734 = vadd.f32 %v513, %v733
      %v735 = vpop.f32.mrf.mxu0
      %736 = vmatprep.mubr.f32.mxu0 0.0
      %737 = vmatmul.mubr.f32.gmra.mxu0 %v553
      %v738 = vpop.f32.mrf.mxu0
      %v739 = vadd.f32 %v513, %v738
      %v740 = vpop.f32.mrf.mxu0
      %741 = vmatprep.mubr.f32.mxu0 0.0
      %742 = vmatmul.mubr.f32.gmra.mxu0 %v556
      %v743 = vpop.f32.mrf.mxu0
      %v744 = vadd.f32 %v513, %v743
      %v745 = vpop.f32.mrf.mxu0
      %746 = vmatprep.mubr.f32.mxu0 0.0
      %747 = vmatmul.mubr.f32.gmra.mxu0 %v559
      %v748 = vpop.f32.mrf.mxu0
      %v749 = vadd.f32 %v513, %v748
      %v750 = vpop.f32.mrf.mxu0
      %751 = vmatprep.mubr.f32.mxu0 0.0
      %752 = vmatmul.mubr.f32.gmra.mxu0 %v562
      %v753 = vpop.f32.mrf.mxu0
      %v754 = vadd.f32 %v513, %v753
      %v755 = vpop.f32.mrf.mxu0
      %756 = vmatprep.mubr.f32.mxu0 0.0
      %757 = vmatmul.mubr.f32.gmra.mxu0 %v565
      %v758 = vpop.f32.mrf.mxu0
      %v759 = vadd.f32 %v513, %v758
      %v760 = vpop.f32.mrf.mxu0
      %761 = vmatprep.mubr.f32.mxu0 0.0
      %762 = vmatmul.mubr.f32.gmra.mxu0 %v568
      %v763 = vpop.f32.mrf.mxu0
      %v764 = vadd.f32 %v513, %v763
      %v765 = vpop.f32.mrf.mxu0
      %766 = vmatprep.mubr.f32.mxu0 0.0
      %767 = vmatmul.mubr.f32.gmra.mxu0 %v571
      %v768 = vpop.f32.mrf.mxu0
      %v769 = vadd.f32 %v513, %v768
      %v770 = vpop.f32.mrf.mxu0
      %771 = vmatprep.mubr.f32.mxu0 0.0
      %772 = vmatmul.mubr.f32.gmra.mxu0 %v574
      %v773 = vpop.f32.mrf.mxu0
      %v774 = vadd.f32 %v513, %v773
      %v775 = vpop.f32.mrf.mxu0
      %776 = vmatprep.mubr.f32.mxu0 0.0
      %777 = vmatmul.mubr.f32.gmra.mxu0 %v577
      %v778 = vpop.f32.mrf.mxu0
      %v779 = vadd.f32 %v513, %v778
      %v780 = vpop.f32.mrf.mxu0
      %781 = vmatprep.mubr.f32.mxu0 0.0
      %782 = vmatmul.mubr.f32.gmra.mxu0 %v580
      %v783 = vpop.f32.mrf.mxu0
      %v784 = vadd.f32 %v513, %v783
      %v785 = vpop.f32.mrf.mxu0
      %786 = vmatprep.mubr.f32.mxu0 0.0
      %787 = vmatmul.mubr.f32.gmra.mxu0 %v583
      %v788 = vpop.f32.mrf.mxu0
      %v789 = vadd.f32 %v513, %v788
      %v790 = vpop.f32.mrf.mxu0
      %791 = vmatprep.mubr.f32.mxu0 0.0
      %792 = vmatmul.mubr.f32.gmra.mxu0 %v586
      %v793 = vpop.f32.mrf.mxu0
      %v794 = vadd.f32 %v513, %v793
      %v795 = vpop.f32.mrf.mxu0
      %796 = vmatprep.mubr.f32.mxu0 0.0
      %797 = vmatmul.mubr.f32.gmra.mxu0 %v589
      %v798 = vpop.f32.mrf.mxu0
      %v799 = vadd.f32 %v513, %v798
      %v800 = vpop.f32.mrf.mxu0
      %801 = vmatprep.mubr.f32.mxu0 0.0
      %802 = vmatmul.mubr.f32.gmra.mxu0 %v592
      %v803 = vpop.f32.mrf.mxu0
      %v804 = vadd.f32 %v513, %v803
      %v805 = vpop.f32.mrf.mxu0
      %806 = vmatprep.mubr.f32.mxu0 0.0
      %807 = vmatmul.mubr.f32.gmra.mxu0 %v595
      %v808 = vpop.f32.mrf.mxu0
      %v809 = vadd.f32 %v513, %v808
      %v810 = vpop.f32.mrf.mxu0
      %811 = vmatprep.mubr.f32.mxu0 0.0
      %812 = vmatmul.mubr.f32.gmra.mxu0 %v598
      %v813 = vpop.f32.mrf.mxu0
      %v814 = vadd.f32 %v513, %v813
      %v815 = vpop.f32.mrf.mxu0
      %816 = vmatprep.mubr.f32.mxu0 0.0
      %817 = vmatmul.mubr.f32.gmra.mxu0 %v601
      %v818 = vpop.f32.mrf.mxu0
      %v819 = vadd.f32 %v513, %v818
      %v820 = vpop.f32.mrf.mxu0
      %821 = vmatprep.mubr.f32.mxu0 0.0
      %822 = vmatmul.mubr.f32.gmra.mxu0 %v604
      %v823 = vpop.f32.mrf.mxu0
      %v824 = vadd.f32 %v513, %v823
      %v825 = vpop.f32.mrf.mxu0
      %826 = vmatprep.mubr.f32.mxu0 0.0
      %827 = vmatmul.mubr.f32.gmra.mxu0 %v607
      %v828 = vpop.f32.mrf.mxu0
      %v829 = vadd.f32 %v513, %v828
      %v830 = vpop.f32.mrf.mxu0
      %831 = vmatprep.mubr.f32.mxu0 0.0
      %832 = vmatmul.mubr.f32.gmra.mxu0 %v610
      %v833 = vpop.f32.mrf.mxu0
      %v834 = vadd.f32 %v513, %v833
      %v835 = vpop.f32.mrf.mxu0
      %836 = vdwg.mxu0
      %v837 = vmax.f32 %v679, 0.0
      %v838 = vmax.f32 %v684, 0.0
      %v839 = vmax.f32 %v689, 0.0
      %v840 = vmax.f32 %v694, 0.0
      %v841 = vmax.f32 %v699, 0.0
      %v842 = vmax.f32 %v704, 0.0
      %v843 = vmax.f32 %v709, 0.0
      %v844 = vmax.f32 %v714, 0.0
      %v845 = vmax.f32 %v719, 0.0
      %v846 = vmax.f32 %v724, 0.0
      %v847 = vmax.f32 %v729, 0.0
      %v848 = vmax.f32 %v734, 0.0
      %v849 = vmax.f32 %v739, 0.0
      %v850 = vmax.f32 %v744, 0.0
      %v851 = vmax.f32 %v749, 0.0
      %v852 = vmax.f32 %v754, 0.0
      %v853 = vmax.f32 %v759, 0.0
      %v854 = vmax.f32 %v764, 0.0
      %v855 = vmax.f32 %v769, 0.0
      %v856 = vmax.f32 %v774, 0.0
      %v857 = vmax.f32 %v779, 0.0
      %v858 = vmax.f32 %v784, 0.0
      %v859 = vmax.f32 %v789, 0.0
      %v860 = vmax.f32 %v794, 0.0
      %v861 = vmax.f32 %v799, 0.0
      %v862 = vmax.f32 %v804, 0.0
      %v863 = vmax.f32 %v809, 0.0
      %v864 = vmax.f32 %v814, 0.0
      %v865 = vmax.f32 %v819, 0.0
      %v866 = vmax.f32 %v824, 0.0
      %v867 = vmax.f32 %v829, 0.0
      %v868 = vmax.f32 %v834, 0.0
      %v869 = vld [vmem:[%s4] sm:$0xff]
      %v870 = vld [vmem:[%s4 + $0x8] sm:$0xff]
      %v871 = vld [vmem:[%s4 + $0x10] sm:$0xff]
      %v872 = vld [vmem:[%s4 + $0x18] sm:$0xff]
      %v873 = vld [vmem:[%s4 + $0x20] sm:$0xff]
      %v874 = vld [vmem:[%s4 + $0x28] sm:$0xff]
      %v875 = vld [vmem:[%s4 + $0x30] sm:$0xff]
      %v876 = vld [vmem:[%s4 + $0x38] sm:$0xff]
      %v877 = vld [vmem:[%s5] sm:$0x1]
      %v879 = vlaneseq
      %v880 = vshrl.u32 %v879, 7
      %v881 = vsub.s32 0, %v880
      %v882 = vrot.slane %v877, %v881
      %v885 = vsel %vm515, %v837, 0
      %v888 = vsel %vm515, %v838, 0
      %v891 = vsel %vm515, %v839, 0
      %v894 = vsel %vm515, %v840, 0
      %v897 = vsel %vm515, %v841, 0
      %v900 = vsel %vm515, %v842, 0
      %v903 = vsel %vm515, %v843, 0
      %v906 = vsel %vm515, %v844, 0
      %v909 = vsel %vm515, %v845, 0
      %v912 = vsel %vm515, %v846, 0
      %v915 = vsel %vm515, %v847, 0
      %v918 = vsel %vm515, %v848, 0
      %v921 = vsel %vm515, %v849, 0
      %v924 = vsel %vm515, %v850, 0
      %v927 = vsel %vm515, %v851, 0
      %v930 = vsel %vm515, %v852, 0
      %v933 = vsel %vm515, %v853, 0
      %v936 = vsel %vm515, %v854, 0
      %v939 = vsel %vm515, %v855, 0
      %v942 = vsel %vm515, %v856, 0
      %v945 = vsel %vm515, %v857, 0
      %v948 = vsel %vm515, %v858, 0
      %v951 = vsel %vm515, %v859, 0
      %v954 = vsel %vm515, %v860, 0
      %v957 = vsel %vm515, %v861, 0
      %v960 = vsel %vm515, %v862, 0
      %v963 = vsel %vm515, %v863, 0
      %v966 = vsel %vm515, %v864, 0
      %v969 = vsel %vm515, %v865, 0
      %v972 = vsel %vm515, %v866, 0
      %v975 = vsel %vm515, %v867, 0
      %v978 = vsel %vm515, %v868, 0
      %980 = vmatprep.subr.mxu0 0.0
      %981 = vmatpush1.msra.mxu0 0.0
      %982 = vmatprep.subr.mxu0 0.0
      %983 = vmatpush1.msra.mxu0 0.0
      %984 = vmatprep.subr.mxu0 0.0
      %985 = vmatpush1.msra.mxu0 0.0
      %986 = vmatprep.subr.mxu0 0.0
      %987 = vmatpush1.msra.mxu0 0.0
      %988 = vmatprep.subr.mxu0 0.0
      %989 = vmatpush1.msra.mxu0 0.0
      %990 = vmatprep.subr.mxu0 0.0
      %991 = vmatpush1.msra.mxu0 0.0
      %992 = vmatprep.subr.mxu0 0.0
      %993 = vmatpush1.msra.mxu0 0.0
      %994 = vmatprep.subr.mxu0 0.0
      %995 = vmatpush1.msra.mxu0 0.0
      %996 = vmatprep.subr.mxu0 0.0
      %997 = vmatpush1.msra.mxu0 %v876
      %998 = vmatprep.subr.mxu0 0.0
      %999 = vmatpush1.msra.mxu0 %v875
      %1000 = vmatprep.subr.mxu0 0.0
      %1001 = vmatpush1.msra.mxu0 %v874
      %1002 = vmatprep.subr.mxu0 0.0
      %1003 = vmatpush1.msra.mxu0 %v873
      %1004 = vmatprep.subr.mxu0 0.0
      %1005 = vmatpush1.msra.mxu0 %v872
      %1006 = vmatprep.subr.mxu0 0.0
      %1007 = vmatpush1.msra.mxu0 %v871
      %1008 = vmatprep.subr.mxu0 0.0
      %1009 = vmatpush1.msra.mxu0 %v870
      %1010 = vmatprep.subr.mxu0 0.0
      %1011 = vmatpush1.msra.mxu0 %v869
      %1012 = vmatprep.subr.mxu0 0.0
      %1013 = vmatpush2.msra.mxu0 0.0
      %1014 = vmatprep.subr.mxu0 0.0
      %1015 = vmatpush2.msra.mxu0 0.0
      %1016 = vmatprep.subr.mxu0 0.0
      %1017 = vmatpush2.msra.mxu0 0.0
      %1018 = vmatprep.subr.mxu0 0.0
      %1019 = vmatpush2.msra.mxu0 0.0
      %1020 = vmatprep.subr.mxu0 0.0
      %1021 = vmatpush2.msra.mxu0 0.0
      %1022 = vmatprep.subr.mxu0 0.0
      %1023 = vmatpush2.msra.mxu0 0.0
      %1024 = vmatprep.subr.mxu0 0.0
      %1025 = vmatpush2.msra.mxu0 0.0
      %1026 = vmatprep.subr.mxu0 0.0
      %1027 = vmatpush2.msra.mxu0 0.0
      %1028 = vmatprep.subr.mxu0 0.0
      %1029 = vmatpush2.msra.mxu0 0.0
      %1030 = vmatprep.subr.mxu0 0.0
      %1031 = vmatpush2.msra.mxu0 0.0
      %1032 = vmatprep.subr.mxu0 0.0
      %1033 = vmatpush2.msra.mxu0 0.0
      %1034 = vmatprep.subr.mxu0 0.0
      %1035 = vmatpush2.msra.mxu0 0.0
      %1036 = vmatprep.subr.mxu0 0.0
      %1037 = vmatpush2.msra.mxu0 0.0
      %1038 = vmatprep.subr.mxu0 0.0
      %1039 = vmatpush2.msra.mxu0 0.0
      %1040 = vmatprep.subr.mxu0 0.0
      %1041 = vmatpush2.msra.mxu0 0.0
      %1042 = vmatprep.subr.mxu0 0.0
      %1043 = vmatpush2.msra.mxu0 0.0
      %1044 = vmatprep.mubr.f32.mxu0 0.0
      %1045 = vmatmul.mubr.f32.gmra.mxu0 %v885
      %v1046 = vpop.f32.mrf.mxu0
      %v1047 = vadd.f32 %v882, %v1046
      %v1048 = vpop.f32.mrf.mxu0
      %1049 = vmatprep.mubr.f32.mxu0 0.0
      %1050 = vmatmul.mubr.f32.gmra.mxu0 %v888
      %v1051 = vpop.f32.mrf.mxu0
      %v1052 = vadd.f32 %v882, %v1051
      %v1053 = vpop.f32.mrf.mxu0
      %1054 = vmatprep.mubr.f32.mxu0 0.0
      %1055 = vmatmul.mubr.f32.gmra.mxu0 %v891
      %v1056 = vpop.f32.mrf.mxu0
      %v1057 = vadd.f32 %v882, %v1056
      %v1058 = vpop.f32.mrf.mxu0
      %1059 = vmatprep.mubr.f32.mxu0 0.0
      %1060 = vmatmul.mubr.f32.gmra.mxu0 %v894
      %v1061 = vpop.f32.mrf.mxu0
      %v1062 = vadd.f32 %v882, %v1061
      %v1063 = vpop.f32.mrf.mxu0
      %1064 = vmatprep.mubr.f32.mxu0 0.0
      %1065 = vmatmul.mubr.f32.gmra.mxu0 %v897
      %v1066 = vpop.f32.mrf.mxu0
      %v1067 = vadd.f32 %v882, %v1066
      %v1068 = vpop.f32.mrf.mxu0
      %1069 = vmatprep.mubr.f32.mxu0 0.0
      %1070 = vmatmul.mubr.f32.gmra.mxu0 %v900
      %v1071 = vpop.f32.mrf.mxu0
      %v1072 = vadd.f32 %v882, %v1071
      %v1073 = vpop.f32.mrf.mxu0
      %1074 = vmatprep.mubr.f32.mxu0 0.0
      %1075 = vmatmul.mubr.f32.gmra.mxu0 %v903
      %v1076 = vpop.f32.mrf.mxu0
      %v1077 = vadd.f32 %v882, %v1076
      %v1078 = vpop.f32.mrf.mxu0
      %1079 = vmatprep.mubr.f32.mxu0 0.0
      %1080 = vmatmul.mubr.f32.gmra.mxu0 %v906
      %v1081 = vpop.f32.mrf.mxu0
      %v1082 = vadd.f32 %v882, %v1081
      %v1083 = vpop.f32.mrf.mxu0
      %1084 = vmatprep.mubr.f32.mxu0 0.0
      %1085 = vmatmul.mubr.f32.gmra.mxu0 %v909
      %v1086 = vpop.f32.mrf.mxu0
      %v1087 = vadd.f32 %v882, %v1086
      %v1088 = vpop.f32.mrf.mxu0
      %1089 = vmatprep.mubr.f32.mxu0 0.0
      %1090 = vmatmul.mubr.f32.gmra.mxu0 %v912
      %v1091 = vpop.f32.mrf.mxu0
      %v1092 = vadd.f32 %v882, %v1091
      %v1093 = vpop.f32.mrf.mxu0
      %1094 = vmatprep.mubr.f32.mxu0 0.0
      %1095 = vmatmul.mubr.f32.gmra.mxu0 %v915
      %v1096 = vpop.f32.mrf.mxu0
      %v1097 = vadd.f32 %v882, %v1096
      %v1098 = vpop.f32.mrf.mxu0
      %1099 = vmatprep.mubr.f32.mxu0 0.0
      %1100 = vmatmul.mubr.f32.gmra.mxu0 %v918
      %v1101 = vpop.f32.mrf.mxu0
      %v1102 = vadd.f32 %v882, %v1101
      %v1103 = vpop.f32.mrf.mxu0
      %1104 = vmatprep.mubr.f32.mxu0 0.0
      %1105 = vmatmul.mubr.f32.gmra.mxu0 %v921
      %v1106 = vpop.f32.mrf.mxu0
      %v1107 = vadd.f32 %v882, %v1106
      %v1108 = vpop.f32.mrf.mxu0
      %1109 = vmatprep.mubr.f32.mxu0 0.0
      %1110 = vmatmul.mubr.f32.gmra.mxu0 %v924
      %v1111 = vpop.f32.mrf.mxu0
      %v1112 = vadd.f32 %v882, %v1111
      %v1113 = vpop.f32.mrf.mxu0
      %1114 = vmatprep.mubr.f32.mxu0 0.0
      %1115 = vmatmul.mubr.f32.gmra.mxu0 %v927
      %v1116 = vpop.f32.mrf.mxu0
      %v1117 = vadd.f32 %v882, %v1116
      %v1118 = vpop.f32.mrf.mxu0
      %1119 = vmatprep.mubr.f32.mxu0 0.0
      %1120 = vmatmul.mubr.f32.gmra.mxu0 %v930
      %v1121 = vpop.f32.mrf.mxu0
      %v1122 = vadd.f32 %v882, %v1121
      %v1123 = vpop.f32.mrf.mxu0
      %1124 = vmatprep.mubr.f32.mxu0 0.0
      %1125 = vmatmul.mubr.f32.gmra.mxu0 %v933
      %v1126 = vpop.f32.mrf.mxu0
      %v1127 = vadd.f32 %v882, %v1126
      %v1128 = vpop.f32.mrf.mxu0
      %1129 = vmatprep.mubr.f32.mxu0 0.0
      %1130 = vmatmul.mubr.f32.gmra.mxu0 %v936
      %v1131 = vpop.f32.mrf.mxu0
      %v1132 = vadd.f32 %v882, %v1131
      %v1133 = vpop.f32.mrf.mxu0
      %1134 = vmatprep.mubr.f32.mxu0 0.0
      %1135 = vmatmul.mubr.f32.gmra.mxu0 %v939
      %v1136 = vpop.f32.mrf.mxu0
      %v1137 = vadd.f32 %v882, %v1136
      %v1138 = vpop.f32.mrf.mxu0
      %1139 = vmatprep.mubr.f32.mxu0 0.0
      %1140 = vmatmul.mubr.f32.gmra.mxu0 %v942
      %v1141 = vpop.f32.mrf.mxu0
      %v1142 = vadd.f32 %v882, %v1141
      %v1143 = vpop.f32.mrf.mxu0
      %1144 = vmatprep.mubr.f32.mxu0 0.0
      %1145 = vmatmul.mubr.f32.gmra.mxu0 %v945
      %v1146 = vpop.f32.mrf.mxu0
      %v1147 = vadd.f32 %v882, %v1146
      %v1148 = vpop.f32.mrf.mxu0
      %1149 = vmatprep.mubr.f32.mxu0 0.0
      %1150 = vmatmul.mubr.f32.gmra.mxu0 %v948
      %v1151 = vpop.f32.mrf.mxu0
      %v1152 = vadd.f32 %v882, %v1151
      %v1153 = vpop.f32.mrf.mxu0
      %1154 = vmatprep.mubr.f32.mxu0 0.0
      %1155 = vmatmul.mubr.f32.gmra.mxu0 %v951
      %v1156 = vpop.f32.mrf.mxu0
      %v1157 = vadd.f32 %v882, %v1156
      %v1158 = vpop.f32.mrf.mxu0
      %1159 = vmatprep.mubr.f32.mxu0 0.0
      %1160 = vmatmul.mubr.f32.gmra.mxu0 %v954
      %v1161 = vpop.f32.mrf.mxu0
      %v1162 = vadd.f32 %v882, %v1161
      %v1163 = vpop.f32.mrf.mxu0
      %1164 = vmatprep.mubr.f32.mxu0 0.0
      %1165 = vmatmul.mubr.f32.gmra.mxu0 %v957
      %v1166 = vpop.f32.mrf.mxu0
      %v1167 = vadd.f32 %v882, %v1166
      %v1168 = vpop.f32.mrf.mxu0
      %1169 = vmatprep.mubr.f32.mxu0 0.0
      %1170 = vmatmul.mubr.f32.gmra.mxu0 %v960
      %v1171 = vpop.f32.mrf.mxu0
      %v1172 = vadd.f32 %v882, %v1171
      %v1173 = vpop.f32.mrf.mxu0
      %1174 = vmatprep.mubr.f32.mxu0 0.0
      %1175 = vmatmul.mubr.f32.gmra.mxu0 %v963
      %v1176 = vpop.f32.mrf.mxu0
      %v1177 = vadd.f32 %v882, %v1176
      %v1178 = vpop.f32.mrf.mxu0
      %1179 = vmatprep.mubr.f32.mxu0 0.0
      %1180 = vmatmul.mubr.f32.gmra.mxu0 %v966
      %v1181 = vpop.f32.mrf.mxu0
      %v1182 = vadd.f32 %v882, %v1181
      %v1183 = vpop.f32.mrf.mxu0
      %1184 = vmatprep.mubr.f32.mxu0 0.0
      %1185 = vmatmul.mubr.f32.gmra.mxu0 %v969
      %v1186 = vpop.f32.mrf.mxu0
      %v1187 = vadd.f32 %v882, %v1186
      %v1188 = vpop.f32.mrf.mxu0
      %1189 = vmatprep.mubr.f32.mxu0 0.0
      %1190 = vmatmul.mubr.f32.gmra.mxu0 %v972
      %v1191 = vpop.f32.mrf.mxu0
      %v1192 = vadd.f32 %v882, %v1191
      %v1193 = vpop.f32.mrf.mxu0
      %1194 = vmatprep.mubr.f32.mxu0 0.0
      %1195 = vmatmul.mubr.f32.gmra.mxu0 %v975
      %v1196 = vpop.f32.mrf.mxu0
      %v1197 = vadd.f32 %v882, %v1196
      %v1198 = vpop.f32.mrf.mxu0
      %1199 = vmatprep.mubr.f32.mxu0 0.0
      %1200 = vmatmul.mubr.f32.gmra.mxu0 %v978
      %v1201 = vpop.f32.mrf.mxu0
      %v1202 = vadd.f32 %v882, %v1201
      %v1203 = vpop.f32.mrf.mxu0
      %1204 = vdwg.mxu0
      %v1205 = vsub.f32 %v1047, %v468
      %v1206 = vsub.f32 %v1052, %v469
      %v1207 = vsub.f32 %v1057, %v470
      %v1208 = vsub.f32 %v1062, %v471
      %v1209 = vsub.f32 %v1067, %v472
      %v1210 = vsub.f32 %v1072, %v473
      %v1211 = vsub.f32 %v1077, %v474
      %v1212 = vsub.f32 %v1082, %v475
      %v1213 = vsub.f32 %v1087, %v476
      %v1214 = vsub.f32 %v1092, %v477
      %v1215 = vsub.f32 %v1097, %v478
      %v1216 = vsub.f32 %v1102, %v479
      %v1217 = vsub.f32 %v1107, %v480
      %v1218 = vsub.f32 %v1112, %v481
      %v1219 = vsub.f32 %v1117, %v482
      %v1220 = vsub.f32 %v1122, %v483
      %v1221 = vsub.f32 %v1127, %v484
      %v1222 = vsub.f32 %v1132, %v485
      %v1223 = vsub.f32 %v1137, %v486
      %v1224 = vsub.f32 %v1142, %v487
      %v1225 = vsub.f32 %v1147, %v488
      %v1226 = vsub.f32 %v1152, %v489
      %v1227 = vsub.f32 %v1157, %v490
      %v1228 = vsub.f32 %v1162, %v491
      %v1229 = vsub.f32 %v1167, %v492
      %v1230 = vsub.f32 %v1172, %v493
      %v1231 = vsub.f32 %v1177, %v494
      %v1232 = vsub.f32 %v1182, %v495
      %v1233 = vsub.f32 %v1187, %v496
      %v1234 = vsub.f32 %v1192, %v497
      %v1235 = vsub.f32 %v1197, %v498
      %v1236 = vsub.f32 %v1202, %v499
      %v1237 = vmul.f32 %v1205, %v1205
      %v1238 = vmul.f32 %v1206, %v1206
      %v1239 = vmul.f32 %v1207, %v1207
      %v1240 = vmul.f32 %v1208, %v1208
      %v1241 = vmul.f32 %v1209, %v1209
      %v1242 = vmul.f32 %v1210, %v1210
      %v1243 = vmul.f32 %v1211, %v1211
      %v1244 = vmul.f32 %v1212, %v1212
      %v1245 = vmul.f32 %v1213, %v1213
      %v1246 = vmul.f32 %v1214, %v1214
      %v1247 = vmul.f32 %v1215, %v1215
      %v1248 = vmul.f32 %v1216, %v1216
      %v1249 = vmul.f32 %v1217, %v1217
      %v1250 = vmul.f32 %v1218, %v1218
      %v1251 = vmul.f32 %v1219, %v1219
      %v1252 = vmul.f32 %v1220, %v1220
      %v1253 = vmul.f32 %v1221, %v1221
      %v1254 = vmul.f32 %v1222, %v1222
      %v1255 = vmul.f32 %v1223, %v1223
      %v1256 = vmul.f32 %v1224, %v1224
      %v1257 = vmul.f32 %v1225, %v1225
      %v1258 = vmul.f32 %v1226, %v1226
      %v1259 = vmul.f32 %v1227, %v1227
      %v1260 = vmul.f32 %v1228, %v1228
      %v1261 = vmul.f32 %v1229, %v1229
      %v1262 = vmul.f32 %v1230, %v1230
      %v1263 = vmul.f32 %v1231, %v1231
      %v1264 = vmul.f32 %v1232, %v1232
      %v1265 = vmul.f32 %v1233, %v1233
      %v1266 = vmul.f32 %v1234, %v1234
      %v1267 = vmul.f32 %v1235, %v1235
      %v1268 = vmul.f32 %v1236, %v1236
      %v1269 = vsel %vm515, %v1237, 0.0
      %1270 = vadd.xlane.f32.xlu0 %v1269
      %v1271 = vpop.xlane.xlu0 %1270
      %v1272 = vsel %vm515, %v1238, 0.0
      %1273 = vadd.xlane.f32.xlu0 %v1272
      %v1274 = vpop.xlane.xlu0 %1273
      %v1275 = vsel %vm515, %v1239, 0.0
      %1276 = vadd.xlane.f32.xlu0 %v1275
      %v1277 = vpop.xlane.xlu0 %1276
      %v1278 = vsel %vm515, %v1240, 0.0
      %1279 = vadd.xlane.f32.xlu0 %v1278
      %v1280 = vpop.xlane.xlu0 %1279
      %v1281 = vsel %vm515, %v1241, 0.0
      %1282 = vadd.xlane.f32.xlu0 %v1281
      %v1283 = vpop.xlane.xlu0 %1282
      %v1284 = vsel %vm515, %v1242, 0.0
      %1285 = vadd.xlane.f32.xlu0 %v1284
      %v1286 = vpop.xlane.xlu0 %1285
      %v1287 = vsel %vm515, %v1243, 0.0
      %1288 = vadd.xlane.f32.xlu0 %v1287
      %v1289 = vpop.xlane.xlu0 %1288
      %v1290 = vsel %vm515, %v1244, 0.0
      %1291 = vadd.xlane.f32.xlu0 %v1290
      %v1292 = vpop.xlane.xlu0 %1291
      %v1293 = vsel %vm515, %v1245, 0.0
      %1294 = vadd.xlane.f32.xlu0 %v1293
      %v1295 = vpop.xlane.xlu0 %1294
      %v1296 = vsel %vm515, %v1246, 0.0
      %1297 = vadd.xlane.f32.xlu0 %v1296
      %v1298 = vpop.xlane.xlu0 %1297
      %v1299 = vsel %vm515, %v1247, 0.0
      %1300 = vadd.xlane.f32.xlu0 %v1299
      %v1301 = vpop.xlane.xlu0 %1300
      %v1302 = vsel %vm515, %v1248, 0.0
      %1303 = vadd.xlane.f32.xlu0 %v1302
      %v1304 = vpop.xlane.xlu0 %1303
      %v1305 = vsel %vm515, %v1249, 0.0
      %1306 = vadd.xlane.f32.xlu0 %v1305
      %v1307 = vpop.xlane.xlu0 %1306
      %v1308 = vsel %vm515, %v1250, 0.0
      %1309 = vadd.xlane.f32.xlu0 %v1308
      %v1310 = vpop.xlane.xlu0 %1309
      %v1311 = vsel %vm515, %v1251, 0.0
      %1312 = vadd.xlane.f32.xlu0 %v1311
      %v1313 = vpop.xlane.xlu0 %1312
      %v1314 = vsel %vm515, %v1252, 0.0
      %1315 = vadd.xlane.f32.xlu0 %v1314
      %v1316 = vpop.xlane.xlu0 %1315
      %v1317 = vsel %vm515, %v1253, 0.0
      %1318 = vadd.xlane.f32.xlu0 %v1317
      %v1319 = vpop.xlane.xlu0 %1318
      %v1320 = vsel %vm515, %v1254, 0.0
      %1321 = vadd.xlane.f32.xlu0 %v1320
      %v1322 = vpop.xlane.xlu0 %1321
      %v1323 = vsel %vm515, %v1255, 0.0
      %1324 = vadd.xlane.f32.xlu0 %v1323
      %v1325 = vpop.xlane.xlu0 %1324
      %v1326 = vsel %vm515, %v1256, 0.0
      %1327 = vadd.xlane.f32.xlu0 %v1326
      %v1328 = vpop.xlane.xlu0 %1327
      %v1329 = vsel %vm515, %v1257, 0.0
      %1330 = vadd.xlane.f32.xlu0 %v1329
      %v1331 = vpop.xlane.xlu0 %1330
      %v1332 = vsel %vm515, %v1258, 0.0
      %1333 = vadd.xlane.f32.xlu0 %v1332
      %v1334 = vpop.xlane.xlu0 %1333
      %v1335 = vsel %vm515, %v1259, 0.0
      %1336 = vadd.xlane.f32.xlu0 %v1335
      %v1337 = vpop.xlane.xlu0 %1336
      %v1338 = vsel %vm515, %v1260, 0.0
      %1339 = vadd.xlane.f32.xlu0 %v1338
      %v1340 = vpop.xlane.xlu0 %1339
      %v1341 = vsel %vm515, %v1261, 0.0
      %1342 = vadd.xlane.f32.xlu0 %v1341
      %v1343 = vpop.xlane.xlu0 %1342
      %v1344 = vsel %vm515, %v1262, 0.0
      %1345 = vadd.xlane.f32.xlu0 %v1344
      %v1346 = vpop.xlane.xlu0 %1345
      %v1347 = vsel %vm515, %v1263, 0.0
      %1348 = vadd.xlane.f32.xlu0 %v1347
      %v1349 = vpop.xlane.xlu0 %1348
      %v1350 = vsel %vm515, %v1264, 0.0
      %1351 = vadd.xlane.f32.xlu0 %v1350
      %v1352 = vpop.xlane.xlu0 %1351
      %v1353 = vsel %vm515, %v1265, 0.0
      %1354 = vadd.xlane.f32.xlu0 %v1353
      %v1355 = vpop.xlane.xlu0 %1354
      %v1356 = vsel %vm515, %v1266, 0.0
      %1357 = vadd.xlane.f32.xlu0 %v1356
      %v1358 = vpop.xlane.xlu0 %1357
      %v1359 = vsel %vm515, %v1267, 0.0
      %1360 = vadd.xlane.f32.xlu0 %v1359
      %v1361 = vpop.xlane.xlu0 %1360
      %v1362 = vsel %vm515, %v1268, 0.0
      %1363 = vadd.xlane.f32.xlu0 %v1362
      %v1364 = vpop.xlane.xlu0 %1363
      %v1365 = vmul.f32 %v1271, 0.015625
      %v1366 = vmul.f32 %v1274, 0.015625
      %v1367 = vmul.f32 %v1277, 0.015625
      %v1368 = vmul.f32 %v1280, 0.015625
      %v1369 = vmul.f32 %v1283, 0.015625
      %v1370 = vmul.f32 %v1286, 0.015625
      %v1371 = vmul.f32 %v1289, 0.015625
      %v1372 = vmul.f32 %v1292, 0.015625
      %v1373 = vmul.f32 %v1295, 0.015625
      %v1374 = vmul.f32 %v1298, 0.015625
      %v1375 = vmul.f32 %v1301, 0.015625
      %v1376 = vmul.f32 %v1304, 0.015625
      %v1377 = vmul.f32 %v1307, 0.015625
      %v1378 = vmul.f32 %v1310, 0.015625
      %v1379 = vmul.f32 %v1313, 0.015625
      %v1380 = vmul.f32 %v1316, 0.015625
      %v1381 = vmul.f32 %v1319, 0.015625
      %v1382 = vmul.f32 %v1322, 0.015625
      %v1383 = vmul.f32 %v1325, 0.015625
      %v1384 = vmul.f32 %v1328, 0.015625
      %v1385 = vmul.f32 %v1331, 0.015625
      %v1386 = vmul.f32 %v1334, 0.015625
      %v1387 = vmul.f32 %v1337, 0.015625
      %v1388 = vmul.f32 %v1340, 0.015625
      %v1389 = vmul.f32 %v1343, 0.015625
      %v1390 = vmul.f32 %v1346, 0.015625
      %v1391 = vmul.f32 %v1349, 0.015625
      %v1392 = vmul.f32 %v1352, 0.015625
      %v1393 = vmul.f32 %v1355, 0.015625
      %v1394 = vmul.f32 %v1358, 0.015625
      %v1395 = vmul.f32 %v1361, 0.015625
      %v1396 = vmul.f32 %v1364, 0.015625
      %v1429 = vlaneseq
      %v1430 = vshrl.u32 %v1429, 7
      %v1431 = vsub.s32 0, %v1430
      %v1432 = vrot.slane %v1365, %v1431
      %v1433 = vlaneseq
      %v1434 = vshrl.u32 %v1433, 7
      %v1435 = vsub.s32 1, %v1434
      %v1436 = vrot.slane %v1365, %v1435
      %v1437 = vlaneseq
      %v1438 = vshrl.u32 %v1437, 7
      %v1439 = vsub.s32 2, %v1438
      %v1440 = vrot.slane %v1365, %v1439
      %v1441 = vlaneseq
      %v1442 = vshrl.u32 %v1441, 7
      %v1443 = vsub.s32 3, %v1442
      %v1444 = vrot.slane %v1365, %v1443
      %v1445 = vlaneseq
      %v1446 = vshrl.u32 %v1445, 7
      %v1447 = vsub.s32 4, %v1446
      %v1448 = vrot.slane %v1365, %v1447
      %v1449 = vlaneseq
      %v1450 = vshrl.u32 %v1449, 7
      %v1451 = vsub.s32 5, %v1450
      %v1452 = vrot.slane %v1365, %v1451
      %v1453 = vlaneseq
      %v1454 = vshrl.u32 %v1453, 7
      %v1455 = vsub.s32 6, %v1454
      %v1456 = vrot.slane %v1365, %v1455
      %v1457 = vlaneseq
      %v1458 = vshrl.u32 %v1457, 7
      %v1459 = vsub.s32 7, %v1458
      %v1460 = vrot.slane %v1365, %v1459
      %v1461 = vlaneseq
      %v1462 = vshrl.u32 %v1461, 7
      %v1463 = vsub.s32 0, %v1462
      %v1464 = vrot.slane %v1366, %v1463
      %v1465 = vlaneseq
      %v1466 = vshrl.u32 %v1465, 7
      %v1467 = vsub.s32 1, %v1466
      %v1468 = vrot.slane %v1366, %v1467
      %v1469 = vlaneseq
      %v1470 = vshrl.u32 %v1469, 7
      %v1471 = vsub.s32 2, %v1470
      %v1472 = vrot.slane %v1366, %v1471
      %v1473 = vlaneseq
      %v1474 = vshrl.u32 %v1473, 7
      %v1475 = vsub.s32 3, %v1474
      %v1476 = vrot.slane %v1366, %v1475
      %v1477 = vlaneseq
      %v1478 = vshrl.u32 %v1477, 7
      %v1479 = vsub.s32 4, %v1478
      %v1480 = vrot.slane %v1366, %v1479
      %v1481 = vlaneseq
      %v1482 = vshrl.u32 %v1481, 7
      %v1483 = vsub.s32 5, %v1482
      %v1484 = vrot.slane %v1366, %v1483
      %v1485 = vlaneseq
      %v1486 = vshrl.u32 %v1485, 7
      %v1487 = vsub.s32 6, %v1486
      %v1488 = vrot.slane %v1366, %v1487
      %v1489 = vlaneseq
      %v1490 = vshrl.u32 %v1489, 7
      %v1491 = vsub.s32 7, %v1490
      %v1492 = vrot.slane %v1366, %v1491
      %v1493 = vlaneseq
      %v1494 = vshrl.u32 %v1493, 7
      %v1495 = vsub.s32 0, %v1494
      %v1496 = vrot.slane %v1367, %v1495
      %v1497 = vlaneseq
      %v1498 = vshrl.u32 %v1497, 7
      %v1499 = vsub.s32 1, %v1498
      %v1500 = vrot.slane %v1367, %v1499
      %v1501 = vlaneseq
      %v1502 = vshrl.u32 %v1501, 7
      %v1503 = vsub.s32 2, %v1502
      %v1504 = vrot.slane %v1367, %v1503
      %v1505 = vlaneseq
      %v1506 = vshrl.u32 %v1505, 7
      %v1507 = vsub.s32 3, %v1506
      %v1508 = vrot.slane %v1367, %v1507
      %v1509 = vlaneseq
      %v1510 = vshrl.u32 %v1509, 7
      %v1511 = vsub.s32 4, %v1510
      %v1512 = vrot.slane %v1367, %v1511
      %v1513 = vlaneseq
      %v1514 = vshrl.u32 %v1513, 7
      %v1515 = vsub.s32 5, %v1514
      %v1516 = vrot.slane %v1367, %v1515
      %v1517 = vlaneseq
      %v1518 = vshrl.u32 %v1517, 7
      %v1519 = vsub.s32 6, %v1518
      %v1520 = vrot.slane %v1367, %v1519
      %v1521 = vlaneseq
      %v1522 = vshrl.u32 %v1521, 7
      %v1523 = vsub.s32 7, %v1522
      %v1524 = vrot.slane %v1367, %v1523
      %v1525 = vlaneseq
      %v1526 = vshrl.u32 %v1525, 7
      %v1527 = vsub.s32 0, %v1526
      %v1528 = vrot.slane %v1368, %v1527
      %v1529 = vlaneseq
      %v1530 = vshrl.u32 %v1529, 7
      %v1531 = vsub.s32 1, %v1530
      %v1532 = vrot.slane %v1368, %v1531
      %v1533 = vlaneseq
      %v1534 = vshrl.u32 %v1533, 7
      %v1535 = vsub.s32 2, %v1534
      %v1536 = vrot.slane %v1368, %v1535
      %v1537 = vlaneseq
      %v1538 = vshrl.u32 %v1537, 7
      %v1539 = vsub.s32 3, %v1538
      %v1540 = vrot.slane %v1368, %v1539
      %v1541 = vlaneseq
      %v1542 = vshrl.u32 %v1541, 7
      %v1543 = vsub.s32 4, %v1542
      %v1544 = vrot.slane %v1368, %v1543
      %v1545 = vlaneseq
      %v1546 = vshrl.u32 %v1545, 7
      %v1547 = vsub.s32 5, %v1546
      %v1548 = vrot.slane %v1368, %v1547
      %v1549 = vlaneseq
      %v1550 = vshrl.u32 %v1549, 7
      %v1551 = vsub.s32 6, %v1550
      %v1552 = vrot.slane %v1368, %v1551
      %v1553 = vlaneseq
      %v1554 = vshrl.u32 %v1553, 7
      %v1555 = vsub.s32 7, %v1554
      %v1556 = vrot.slane %v1368, %v1555
      %v1557 = vlaneseq
      %v1558 = vshrl.u32 %v1557, 7
      %v1559 = vsub.s32 0, %v1558
      %v1560 = vrot.slane %v1369, %v1559
      %v1561 = vlaneseq
      %v1562 = vshrl.u32 %v1561, 7
      %v1563 = vsub.s32 1, %v1562
      %v1564 = vrot.slane %v1369, %v1563
      %v1565 = vlaneseq
      %v1566 = vshrl.u32 %v1565, 7
      %v1567 = vsub.s32 2, %v1566
      %v1568 = vrot.slane %v1369, %v1567
      %v1569 = vlaneseq
      %v1570 = vshrl.u32 %v1569, 7
      %v1571 = vsub.s32 3, %v1570
      %v1572 = vrot.slane %v1369, %v1571
      %v1573 = vlaneseq
      %v1574 = vshrl.u32 %v1573, 7
      %v1575 = vsub.s32 4, %v1574
      %v1576 = vrot.slane %v1369, %v1575
      %v1577 = vlaneseq
      %v1578 = vshrl.u32 %v1577, 7
      %v1579 = vsub.s32 5, %v1578
      %v1580 = vrot.slane %v1369, %v1579
      %v1581 = vlaneseq
      %v1582 = vshrl.u32 %v1581, 7
      %v1583 = vsub.s32 6, %v1582
      %v1584 = vrot.slane %v1369, %v1583
      %v1585 = vlaneseq
      %v1586 = vshrl.u32 %v1585, 7
      %v1587 = vsub.s32 7, %v1586
      %v1588 = vrot.slane %v1369, %v1587
      %v1589 = vlaneseq
      %v1590 = vshrl.u32 %v1589, 7
      %v1591 = vsub.s32 0, %v1590
      %v1592 = vrot.slane %v1370, %v1591
      %v1593 = vlaneseq
      %v1594 = vshrl.u32 %v1593, 7
      %v1595 = vsub.s32 1, %v1594
      %v1596 = vrot.slane %v1370, %v1595
      %v1597 = vlaneseq
      %v1598 = vshrl.u32 %v1597, 7
      %v1599 = vsub.s32 2, %v1598
      %v1600 = vrot.slane %v1370, %v1599
      %v1601 = vlaneseq
      %v1602 = vshrl.u32 %v1601, 7
      %v1603 = vsub.s32 3, %v1602
      %v1604 = vrot.slane %v1370, %v1603
      %v1605 = vlaneseq
      %v1606 = vshrl.u32 %v1605, 7
      %v1607 = vsub.s32 4, %v1606
      %v1608 = vrot.slane %v1370, %v1607
      %v1609 = vlaneseq
      %v1610 = vshrl.u32 %v1609, 7
      %v1611 = vsub.s32 5, %v1610
      %v1612 = vrot.slane %v1370, %v1611
      %v1613 = vlaneseq
      %v1614 = vshrl.u32 %v1613, 7
      %v1615 = vsub.s32 6, %v1614
      %v1616 = vrot.slane %v1370, %v1615
      %v1617 = vlaneseq
      %v1618 = vshrl.u32 %v1617, 7
      %v1619 = vsub.s32 7, %v1618
      %v1620 = vrot.slane %v1370, %v1619
      %v1621 = vlaneseq
      %v1622 = vshrl.u32 %v1621, 7
      %v1623 = vsub.s32 0, %v1622
      %v1624 = vrot.slane %v1371, %v1623
      %v1625 = vlaneseq
      %v1626 = vshrl.u32 %v1625, 7
      %v1627 = vsub.s32 1, %v1626
      %v1628 = vrot.slane %v1371, %v1627
      %v1629 = vlaneseq
      %v1630 = vshrl.u32 %v1629, 7
      %v1631 = vsub.s32 2, %v1630
      %v1632 = vrot.slane %v1371, %v1631
      %v1633 = vlaneseq
      %v1634 = vshrl.u32 %v1633, 7
      %v1635 = vsub.s32 3, %v1634
      %v1636 = vrot.slane %v1371, %v1635
      %v1637 = vlaneseq
      %v1638 = vshrl.u32 %v1637, 7
      %v1639 = vsub.s32 4, %v1638
      %v1640 = vrot.slane %v1371, %v1639
      %v1641 = vlaneseq
      %v1642 = vshrl.u32 %v1641, 7
      %v1643 = vsub.s32 5, %v1642
      %v1644 = vrot.slane %v1371, %v1643
      %v1645 = vlaneseq
      %v1646 = vshrl.u32 %v1645, 7
      %v1647 = vsub.s32 6, %v1646
      %v1648 = vrot.slane %v1371, %v1647
      %v1649 = vlaneseq
      %v1650 = vshrl.u32 %v1649, 7
      %v1651 = vsub.s32 7, %v1650
      %v1652 = vrot.slane %v1371, %v1651
      %v1653 = vlaneseq
      %v1654 = vshrl.u32 %v1653, 7
      %v1655 = vsub.s32 0, %v1654
      %v1656 = vrot.slane %v1372, %v1655
      %v1657 = vlaneseq
      %v1658 = vshrl.u32 %v1657, 7
      %v1659 = vsub.s32 1, %v1658
      %v1660 = vrot.slane %v1372, %v1659
      %v1661 = vlaneseq
      %v1662 = vshrl.u32 %v1661, 7
      %v1663 = vsub.s32 2, %v1662
      %v1664 = vrot.slane %v1372, %v1663
      %v1665 = vlaneseq
      %v1666 = vshrl.u32 %v1665, 7
      %v1667 = vsub.s32 3, %v1666
      %v1668 = vrot.slane %v1372, %v1667
      %v1669 = vlaneseq
      %v1670 = vshrl.u32 %v1669, 7
      %v1671 = vsub.s32 4, %v1670
      %v1672 = vrot.slane %v1372, %v1671
      %v1673 = vlaneseq
      %v1674 = vshrl.u32 %v1673, 7
      %v1675 = vsub.s32 5, %v1674
      %v1676 = vrot.slane %v1372, %v1675
      %v1677 = vlaneseq
      %v1678 = vshrl.u32 %v1677, 7
      %v1679 = vsub.s32 6, %v1678
      %v1680 = vrot.slane %v1372, %v1679
      %v1681 = vlaneseq
      %v1682 = vshrl.u32 %v1681, 7
      %v1683 = vsub.s32 7, %v1682
      %v1684 = vrot.slane %v1372, %v1683
      %v1685 = vlaneseq
      %v1686 = vshrl.u32 %v1685, 7
      %v1687 = vsub.s32 0, %v1686
      %v1688 = vrot.slane %v1373, %v1687
      %v1689 = vlaneseq
      %v1690 = vshrl.u32 %v1689, 7
      %v1691 = vsub.s32 1, %v1690
      %v1692 = vrot.slane %v1373, %v1691
      %v1693 = vlaneseq
      %v1694 = vshrl.u32 %v1693, 7
      %v1695 = vsub.s32 2, %v1694
      %v1696 = vrot.slane %v1373, %v1695
      %v1697 = vlaneseq
      %v1698 = vshrl.u32 %v1697, 7
      %v1699 = vsub.s32 3, %v1698
      %v1700 = vrot.slane %v1373, %v1699
      %v1701 = vlaneseq
      %v1702 = vshrl.u32 %v1701, 7
      %v1703 = vsub.s32 4, %v1702
      %v1704 = vrot.slane %v1373, %v1703
      %v1705 = vlaneseq
      %v1706 = vshrl.u32 %v1705, 7
      %v1707 = vsub.s32 5, %v1706
      %v1708 = vrot.slane %v1373, %v1707
      %v1709 = vlaneseq
      %v1710 = vshrl.u32 %v1709, 7
      %v1711 = vsub.s32 6, %v1710
      %v1712 = vrot.slane %v1373, %v1711
      %v1713 = vlaneseq
      %v1714 = vshrl.u32 %v1713, 7
      %v1715 = vsub.s32 7, %v1714
      %v1716 = vrot.slane %v1373, %v1715
      %v1717 = vlaneseq
      %v1718 = vshrl.u32 %v1717, 7
      %v1719 = vsub.s32 0, %v1718
      %v1720 = vrot.slane %v1374, %v1719
      %v1721 = vlaneseq
      %v1722 = vshrl.u32 %v1721, 7
      %v1723 = vsub.s32 1, %v1722
      %v1724 = vrot.slane %v1374, %v1723
      %v1725 = vlaneseq
      %v1726 = vshrl.u32 %v1725, 7
      %v1727 = vsub.s32 2, %v1726
      %v1728 = vrot.slane %v1374, %v1727
      %v1729 = vlaneseq
      %v1730 = vshrl.u32 %v1729, 7
      %v1731 = vsub.s32 3, %v1730
      %v1732 = vrot.slane %v1374, %v1731
      %v1733 = vlaneseq
      %v1734 = vshrl.u32 %v1733, 7
      %v1735 = vsub.s32 4, %v1734
      %v1736 = vrot.slane %v1374, %v1735
      %v1737 = vlaneseq
      %v1738 = vshrl.u32 %v1737, 7
      %v1739 = vsub.s32 5, %v1738
      %v1740 = vrot.slane %v1374, %v1739
      %v1741 = vlaneseq
      %v1742 = vshrl.u32 %v1741, 7
      %v1743 = vsub.s32 6, %v1742
      %v1744 = vrot.slane %v1374, %v1743
      %v1745 = vlaneseq
      %v1746 = vshrl.u32 %v1745, 7
      %v1747 = vsub.s32 7, %v1746
      %v1748 = vrot.slane %v1374, %v1747
      %v1749 = vlaneseq
      %v1750 = vshrl.u32 %v1749, 7
      %v1751 = vsub.s32 0, %v1750
      %v1752 = vrot.slane %v1375, %v1751
      %v1753 = vlaneseq
      %v1754 = vshrl.u32 %v1753, 7
      %v1755 = vsub.s32 1, %v1754
      %v1756 = vrot.slane %v1375, %v1755
      %v1757 = vlaneseq
      %v1758 = vshrl.u32 %v1757, 7
      %v1759 = vsub.s32 2, %v1758
      %v1760 = vrot.slane %v1375, %v1759
      %v1761 = vlaneseq
      %v1762 = vshrl.u32 %v1761, 7
      %v1763 = vsub.s32 3, %v1762
      %v1764 = vrot.slane %v1375, %v1763
      %v1765 = vlaneseq
      %v1766 = vshrl.u32 %v1765, 7
      %v1767 = vsub.s32 4, %v1766
      %v1768 = vrot.slane %v1375, %v1767
      %v1769 = vlaneseq
      %v1770 = vshrl.u32 %v1769, 7
      %v1771 = vsub.s32 5, %v1770
      %v1772 = vrot.slane %v1375, %v1771
      %v1773 = vlaneseq
      %v1774 = vshrl.u32 %v1773, 7
      %v1775 = vsub.s32 6, %v1774
      %v1776 = vrot.slane %v1375, %v1775
      %v1777 = vlaneseq
      %v1778 = vshrl.u32 %v1777, 7
      %v1779 = vsub.s32 7, %v1778
      %v1780 = vrot.slane %v1375, %v1779
      %v1781 = vlaneseq
      %v1782 = vshrl.u32 %v1781, 7
      %v1783 = vsub.s32 0, %v1782
      %v1784 = vrot.slane %v1376, %v1783
      %v1785 = vlaneseq
      %v1786 = vshrl.u32 %v1785, 7
      %v1787 = vsub.s32 1, %v1786
      %v1788 = vrot.slane %v1376, %v1787
      %v1789 = vlaneseq
      %v1790 = vshrl.u32 %v1789, 7
      %v1791 = vsub.s32 2, %v1790
      %v1792 = vrot.slane %v1376, %v1791
      %v1793 = vlaneseq
      %v1794 = vshrl.u32 %v1793, 7
      %v1795 = vsub.s32 3, %v1794
      %v1796 = vrot.slane %v1376, %v1795
      %v1797 = vlaneseq
      %v1798 = vshrl.u32 %v1797, 7
      %v1799 = vsub.s32 4, %v1798
      %v1800 = vrot.slane %v1376, %v1799
      %v1801 = vlaneseq
      %v1802 = vshrl.u32 %v1801, 7
      %v1803 = vsub.s32 5, %v1802
      %v1804 = vrot.slane %v1376, %v1803
      %v1805 = vlaneseq
      %v1806 = vshrl.u32 %v1805, 7
      %v1807 = vsub.s32 6, %v1806
      %v1808 = vrot.slane %v1376, %v1807
      %v1809 = vlaneseq
      %v1810 = vshrl.u32 %v1809, 7
      %v1811 = vsub.s32 7, %v1810
      %v1812 = vrot.slane %v1376, %v1811
      %v1813 = vlaneseq
      %v1814 = vshrl.u32 %v1813, 7
      %v1815 = vsub.s32 0, %v1814
      %v1816 = vrot.slane %v1377, %v1815
      %v1817 = vlaneseq
      %v1818 = vshrl.u32 %v1817, 7
      %v1819 = vsub.s32 1, %v1818
      %v1820 = vrot.slane %v1377, %v1819
      %v1821 = vlaneseq
      %v1822 = vshrl.u32 %v1821, 7
      %v1823 = vsub.s32 2, %v1822
      %v1824 = vrot.slane %v1377, %v1823
      %v1825 = vlaneseq
      %v1826 = vshrl.u32 %v1825, 7
      %v1827 = vsub.s32 3, %v1826
      %v1828 = vrot.slane %v1377, %v1827
      %v1829 = vlaneseq
      %v1830 = vshrl.u32 %v1829, 7
      %v1831 = vsub.s32 4, %v1830
      %v1832 = vrot.slane %v1377, %v1831
      %v1833 = vlaneseq
      %v1834 = vshrl.u32 %v1833, 7
      %v1835 = vsub.s32 5, %v1834
      %v1836 = vrot.slane %v1377, %v1835
      %v1837 = vlaneseq
      %v1838 = vshrl.u32 %v1837, 7
      %v1839 = vsub.s32 6, %v1838
      %v1840 = vrot.slane %v1377, %v1839
      %v1841 = vlaneseq
      %v1842 = vshrl.u32 %v1841, 7
      %v1843 = vsub.s32 7, %v1842
      %v1844 = vrot.slane %v1377, %v1843
      %v1845 = vlaneseq
      %v1846 = vshrl.u32 %v1845, 7
      %v1847 = vsub.s32 0, %v1846
      %v1848 = vrot.slane %v1378, %v1847
      %v1849 = vlaneseq
      %v1850 = vshrl.u32 %v1849, 7
      %v1851 = vsub.s32 1, %v1850
      %v1852 = vrot.slane %v1378, %v1851
      %v1853 = vlaneseq
      %v1854 = vshrl.u32 %v1853, 7
      %v1855 = vsub.s32 2, %v1854
      %v1856 = vrot.slane %v1378, %v1855
      %v1857 = vlaneseq
      %v1858 = vshrl.u32 %v1857, 7
      %v1859 = vsub.s32 3, %v1858
      %v1860 = vrot.slane %v1378, %v1859
      %v1861 = vlaneseq
      %v1862 = vshrl.u32 %v1861, 7
      %v1863 = vsub.s32 4, %v1862
      %v1864 = vrot.slane %v1378, %v1863
      %v1865 = vlaneseq
      %v1866 = vshrl.u32 %v1865, 7
      %v1867 = vsub.s32 5, %v1866
      %v1868 = vrot.slane %v1378, %v1867
      %v1869 = vlaneseq
      %v1870 = vshrl.u32 %v1869, 7
      %v1871 = vsub.s32 6, %v1870
      %v1872 = vrot.slane %v1378, %v1871
      %v1873 = vlaneseq
      %v1874 = vshrl.u32 %v1873, 7
      %v1875 = vsub.s32 7, %v1874
      %v1876 = vrot.slane %v1378, %v1875
      %v1877 = vlaneseq
      %v1878 = vshrl.u32 %v1877, 7
      %v1879 = vsub.s32 0, %v1878
      %v1880 = vrot.slane %v1379, %v1879
      %v1881 = vlaneseq
      %v1882 = vshrl.u32 %v1881, 7
      %v1883 = vsub.s32 1, %v1882
      %v1884 = vrot.slane %v1379, %v1883
      %v1885 = vlaneseq
      %v1886 = vshrl.u32 %v1885, 7
      %v1887 = vsub.s32 2, %v1886
      %v1888 = vrot.slane %v1379, %v1887
      %v1889 = vlaneseq
      %v1890 = vshrl.u32 %v1889, 7
      %v1891 = vsub.s32 3, %v1890
      %v1892 = vrot.slane %v1379, %v1891
      %v1893 = vlaneseq
      %v1894 = vshrl.u32 %v1893, 7
      %v1895 = vsub.s32 4, %v1894
      %v1896 = vrot.slane %v1379, %v1895
      %v1897 = vlaneseq
      %v1898 = vshrl.u32 %v1897, 7
      %v1899 = vsub.s32 5, %v1898
      %v1900 = vrot.slane %v1379, %v1899
      %v1901 = vlaneseq
      %v1902 = vshrl.u32 %v1901, 7
      %v1903 = vsub.s32 6, %v1902
      %v1904 = vrot.slane %v1379, %v1903
      %v1905 = vlaneseq
      %v1906 = vshrl.u32 %v1905, 7
      %v1907 = vsub.s32 7, %v1906
      %v1908 = vrot.slane %v1379, %v1907
      %v1909 = vlaneseq
      %v1910 = vshrl.u32 %v1909, 7
      %v1911 = vsub.s32 0, %v1910
      %v1912 = vrot.slane %v1380, %v1911
      %v1913 = vlaneseq
      %v1914 = vshrl.u32 %v1913, 7
      %v1915 = vsub.s32 1, %v1914
      %v1916 = vrot.slane %v1380, %v1915
      %v1917 = vlaneseq
      %v1918 = vshrl.u32 %v1917, 7
      %v1919 = vsub.s32 2, %v1918
      %v1920 = vrot.slane %v1380, %v1919
      %v1921 = vlaneseq
      %v1922 = vshrl.u32 %v1921, 7
      %v1923 = vsub.s32 3, %v1922
      %v1924 = vrot.slane %v1380, %v1923
      %v1925 = vlaneseq
      %v1926 = vshrl.u32 %v1925, 7
      %v1927 = vsub.s32 4, %v1926
      %v1928 = vrot.slane %v1380, %v1927
      %v1929 = vlaneseq
      %v1930 = vshrl.u32 %v1929, 7
      %v1931 = vsub.s32 5, %v1930
      %v1932 = vrot.slane %v1380, %v1931
      %v1933 = vlaneseq
      %v1934 = vshrl.u32 %v1933, 7
      %v1935 = vsub.s32 6, %v1934
      %v1936 = vrot.slane %v1380, %v1935
      %v1937 = vlaneseq
      %v1938 = vshrl.u32 %v1937, 7
      %v1939 = vsub.s32 7, %v1938
      %v1940 = vrot.slane %v1380, %v1939
      %v1941 = vlaneseq
      %v1942 = vshrl.u32 %v1941, 7
      %v1943 = vsub.s32 0, %v1942
      %v1944 = vrot.slane %v1381, %v1943
      %v1945 = vlaneseq
      %v1946 = vshrl.u32 %v1945, 7
      %v1947 = vsub.s32 1, %v1946
      %v1948 = vrot.slane %v1381, %v1947
      %v1949 = vlaneseq
      %v1950 = vshrl.u32 %v1949, 7
      %v1951 = vsub.s32 2, %v1950
      %v1952 = vrot.slane %v1381, %v1951
      %v1953 = vlaneseq
      %v1954 = vshrl.u32 %v1953, 7
      %v1955 = vsub.s32 3, %v1954
      %v1956 = vrot.slane %v1381, %v1955
      %v1957 = vlaneseq
      %v1958 = vshrl.u32 %v1957, 7
      %v1959 = vsub.s32 4, %v1958
      %v1960 = vrot.slane %v1381, %v1959
      %v1961 = vlaneseq
      %v1962 = vshrl.u32 %v1961, 7
      %v1963 = vsub.s32 5, %v1962
      %v1964 = vrot.slane %v1381, %v1963
      %v1965 = vlaneseq
      %v1966 = vshrl.u32 %v1965, 7
      %v1967 = vsub.s32 6, %v1966
      %v1968 = vrot.slane %v1381, %v1967
      %v1969 = vlaneseq
      %v1970 = vshrl.u32 %v1969, 7
      %v1971 = vsub.s32 7, %v1970
      %v1972 = vrot.slane %v1381, %v1971
      %v1973 = vlaneseq
      %v1974 = vshrl.u32 %v1973, 7
      %v1975 = vsub.s32 0, %v1974
      %v1976 = vrot.slane %v1382, %v1975
      %v1977 = vlaneseq
      %v1978 = vshrl.u32 %v1977, 7
      %v1979 = vsub.s32 1, %v1978
      %v1980 = vrot.slane %v1382, %v1979
      %v1981 = vlaneseq
      %v1982 = vshrl.u32 %v1981, 7
      %v1983 = vsub.s32 2, %v1982
      %v1984 = vrot.slane %v1382, %v1983
      %v1985 = vlaneseq
      %v1986 = vshrl.u32 %v1985, 7
      %v1987 = vsub.s32 3, %v1986
      %v1988 = vrot.slane %v1382, %v1987
      %v1989 = vlaneseq
      %v1990 = vshrl.u32 %v1989, 7
      %v1991 = vsub.s32 4, %v1990
      %v1992 = vrot.slane %v1382, %v1991
      %v1993 = vlaneseq
      %v1994 = vshrl.u32 %v1993, 7
      %v1995 = vsub.s32 5, %v1994
      %v1996 = vrot.slane %v1382, %v1995
      %v1997 = vlaneseq
      %v1998 = vshrl.u32 %v1997, 7
      %v1999 = vsub.s32 6, %v1998
      %v2000 = vrot.slane %v1382, %v1999
      %v2001 = vlaneseq
      %v2002 = vshrl.u32 %v2001, 7
      %v2003 = vsub.s32 7, %v2002
      %v2004 = vrot.slane %v1382, %v2003
      %v2005 = vlaneseq
      %v2006 = vshrl.u32 %v2005, 7
      %v2007 = vsub.s32 0, %v2006
      %v2008 = vrot.slane %v1383, %v2007
      %v2009 = vlaneseq
      %v2010 = vshrl.u32 %v2009, 7
      %v2011 = vsub.s32 1, %v2010
      %v2012 = vrot.slane %v1383, %v2011
      %v2013 = vlaneseq
      %v2014 = vshrl.u32 %v2013, 7
      %v2015 = vsub.s32 2, %v2014
      %v2016 = vrot.slane %v1383, %v2015
      %v2017 = vlaneseq
      %v2018 = vshrl.u32 %v2017, 7
      %v2019 = vsub.s32 3, %v2018
      %v2020 = vrot.slane %v1383, %v2019
      %v2021 = vlaneseq
      %v2022 = vshrl.u32 %v2021, 7
      %v2023 = vsub.s32 4, %v2022
      %v2024 = vrot.slane %v1383, %v2023
      %v2025 = vlaneseq
      %v2026 = vshrl.u32 %v2025, 7
      %v2027 = vsub.s32 5, %v2026
      %v2028 = vrot.slane %v1383, %v2027
      %v2029 = vlaneseq
      %v2030 = vshrl.u32 %v2029, 7
      %v2031 = vsub.s32 6, %v2030
      %v2032 = vrot.slane %v1383, %v2031
      %v2033 = vlaneseq
      %v2034 = vshrl.u32 %v2033, 7
      %v2035 = vsub.s32 7, %v2034
      %v2036 = vrot.slane %v1383, %v2035
      %v2037 = vlaneseq
      %v2038 = vshrl.u32 %v2037, 7
      %v2039 = vsub.s32 0, %v2038
      %v2040 = vrot.slane %v1384, %v2039
      %v2041 = vlaneseq
      %v2042 = vshrl.u32 %v2041, 7
      %v2043 = vsub.s32 1, %v2042
      %v2044 = vrot.slane %v1384, %v2043
      %v2045 = vlaneseq
      %v2046 = vshrl.u32 %v2045, 7
      %v2047 = vsub.s32 2, %v2046
      %v2048 = vrot.slane %v1384, %v2047
      %v2049 = vlaneseq
      %v2050 = vshrl.u32 %v2049, 7
      %v2051 = vsub.s32 3, %v2050
      %v2052 = vrot.slane %v1384, %v2051
      %v2053 = vlaneseq
      %v2054 = vshrl.u32 %v2053, 7
      %v2055 = vsub.s32 4, %v2054
      %v2056 = vrot.slane %v1384, %v2055
      %v2057 = vlaneseq
      %v2058 = vshrl.u32 %v2057, 7
      %v2059 = vsub.s32 5, %v2058
      %v2060 = vrot.slane %v1384, %v2059
      %v2061 = vlaneseq
      %v2062 = vshrl.u32 %v2061, 7
      %v2063 = vsub.s32 6, %v2062
      %v2064 = vrot.slane %v1384, %v2063
      %v2065 = vlaneseq
      %v2066 = vshrl.u32 %v2065, 7
      %v2067 = vsub.s32 7, %v2066
      %v2068 = vrot.slane %v1384, %v2067
      %v2069 = vlaneseq
      %v2070 = vshrl.u32 %v2069, 7
      %v2071 = vsub.s32 0, %v2070
      %v2072 = vrot.slane %v1385, %v2071
      %v2073 = vlaneseq
      %v2074 = vshrl.u32 %v2073, 7
      %v2075 = vsub.s32 1, %v2074
      %v2076 = vrot.slane %v1385, %v2075
      %v2077 = vlaneseq
      %v2078 = vshrl.u32 %v2077, 7
      %v2079 = vsub.s32 2, %v2078
      %v2080 = vrot.slane %v1385, %v2079
      %v2081 = vlaneseq
      %v2082 = vshrl.u32 %v2081, 7
      %v2083 = vsub.s32 3, %v2082
      %v2084 = vrot.slane %v1385, %v2083
      %v2085 = vlaneseq
      %v2086 = vshrl.u32 %v2085, 7
      %v2087 = vsub.s32 4, %v2086
      %v2088 = vrot.slane %v1385, %v2087
      %v2089 = vlaneseq
      %v2090 = vshrl.u32 %v2089, 7
      %v2091 = vsub.s32 5, %v2090
      %v2092 = vrot.slane %v1385, %v2091
      %v2093 = vlaneseq
      %v2094 = vshrl.u32 %v2093, 7
      %v2095 = vsub.s32 6, %v2094
      %v2096 = vrot.slane %v1385, %v2095
      %v2097 = vlaneseq
      %v2098 = vshrl.u32 %v2097, 7
      %v2099 = vsub.s32 7, %v2098
      %v2100 = vrot.slane %v1385, %v2099
      %v2101 = vlaneseq
      %v2102 = vshrl.u32 %v2101, 7
      %v2103 = vsub.s32 0, %v2102
      %v2104 = vrot.slane %v1386, %v2103
      %v2105 = vlaneseq
      %v2106 = vshrl.u32 %v2105, 7
      %v2107 = vsub.s32 1, %v2106
      %v2108 = vrot.slane %v1386, %v2107
      %v2109 = vlaneseq
      %v2110 = vshrl.u32 %v2109, 7
      %v2111 = vsub.s32 2, %v2110
      %v2112 = vrot.slane %v1386, %v2111
      %v2113 = vlaneseq
      %v2114 = vshrl.u32 %v2113, 7
      %v2115 = vsub.s32 3, %v2114
      %v2116 = vrot.slane %v1386, %v2115
      %v2117 = vlaneseq
      %v2118 = vshrl.u32 %v2117, 7
      %v2119 = vsub.s32 4, %v2118
      %v2120 = vrot.slane %v1386, %v2119
      %v2121 = vlaneseq
      %v2122 = vshrl.u32 %v2121, 7
      %v2123 = vsub.s32 5, %v2122
      %v2124 = vrot.slane %v1386, %v2123
      %v2125 = vlaneseq
      %v2126 = vshrl.u32 %v2125, 7
      %v2127 = vsub.s32 6, %v2126
      %v2128 = vrot.slane %v1386, %v2127
      %v2129 = vlaneseq
      %v2130 = vshrl.u32 %v2129, 7
      %v2131 = vsub.s32 7, %v2130
      %v2132 = vrot.slane %v1386, %v2131
      %v2133 = vlaneseq
      %v2134 = vshrl.u32 %v2133, 7
      %v2135 = vsub.s32 0, %v2134
      %v2136 = vrot.slane %v1387, %v2135
      %v2137 = vlaneseq
      %v2138 = vshrl.u32 %v2137, 7
      %v2139 = vsub.s32 1, %v2138
      %v2140 = vrot.slane %v1387, %v2139
      %v2141 = vlaneseq
      %v2142 = vshrl.u32 %v2141, 7
      %v2143 = vsub.s32 2, %v2142
      %v2144 = vrot.slane %v1387, %v2143
      %v2145 = vlaneseq
      %v2146 = vshrl.u32 %v2145, 7
      %v2147 = vsub.s32 3, %v2146
      %v2148 = vrot.slane %v1387, %v2147
      %v2149 = vlaneseq
      %v2150 = vshrl.u32 %v2149, 7
      %v2151 = vsub.s32 4, %v2150
      %v2152 = vrot.slane %v1387, %v2151
      %v2153 = vlaneseq
      %v2154 = vshrl.u32 %v2153, 7
      %v2155 = vsub.s32 5, %v2154
      %v2156 = vrot.slane %v1387, %v2155
      %v2157 = vlaneseq
      %v2158 = vshrl.u32 %v2157, 7
      %v2159 = vsub.s32 6, %v2158
      %v2160 = vrot.slane %v1387, %v2159
      %v2161 = vlaneseq
      %v2162 = vshrl.u32 %v2161, 7
      %v2163 = vsub.s32 7, %v2162
      %v2164 = vrot.slane %v1387, %v2163
      %v2165 = vlaneseq
      %v2166 = vshrl.u32 %v2165, 7
      %v2167 = vsub.s32 0, %v2166
      %v2168 = vrot.slane %v1388, %v2167
      %v2169 = vlaneseq
      %v2170 = vshrl.u32 %v2169, 7
      %v2171 = vsub.s32 1, %v2170
      %v2172 = vrot.slane %v1388, %v2171
      %v2173 = vlaneseq
      %v2174 = vshrl.u32 %v2173, 7
      %v2175 = vsub.s32 2, %v2174
      %v2176 = vrot.slane %v1388, %v2175
      %v2177 = vlaneseq
      %v2178 = vshrl.u32 %v2177, 7
      %v2179 = vsub.s32 3, %v2178
      %v2180 = vrot.slane %v1388, %v2179
      %v2181 = vlaneseq
      %v2182 = vshrl.u32 %v2181, 7
      %v2183 = vsub.s32 4, %v2182
      %v2184 = vrot.slane %v1388, %v2183
      %v2185 = vlaneseq
      %v2186 = vshrl.u32 %v2185, 7
      %v2187 = vsub.s32 5, %v2186
      %v2188 = vrot.slane %v1388, %v2187
      %v2189 = vlaneseq
      %v2190 = vshrl.u32 %v2189, 7
      %v2191 = vsub.s32 6, %v2190
      %v2192 = vrot.slane %v1388, %v2191
      %v2193 = vlaneseq
      %v2194 = vshrl.u32 %v2193, 7
      %v2195 = vsub.s32 7, %v2194
      %v2196 = vrot.slane %v1388, %v2195
      %v2197 = vlaneseq
      %v2198 = vshrl.u32 %v2197, 7
      %v2199 = vsub.s32 0, %v2198
      %v2200 = vrot.slane %v1389, %v2199
      %v2201 = vlaneseq
      %v2202 = vshrl.u32 %v2201, 7
      %v2203 = vsub.s32 1, %v2202
      %v2204 = vrot.slane %v1389, %v2203
      %v2205 = vlaneseq
      %v2206 = vshrl.u32 %v2205, 7
      %v2207 = vsub.s32 2, %v2206
      %v2208 = vrot.slane %v1389, %v2207
      %v2209 = vlaneseq
      %v2210 = vshrl.u32 %v2209, 7
      %v2211 = vsub.s32 3, %v2210
      %v2212 = vrot.slane %v1389, %v2211
      %v2213 = vlaneseq
      %v2214 = vshrl.u32 %v2213, 7
      %v2215 = vsub.s32 4, %v2214
      %v2216 = vrot.slane %v1389, %v2215
      %v2217 = vlaneseq
      %v2218 = vshrl.u32 %v2217, 7
      %v2219 = vsub.s32 5, %v2218
      %v2220 = vrot.slane %v1389, %v2219
      %v2221 = vlaneseq
      %v2222 = vshrl.u32 %v2221, 7
      %v2223 = vsub.s32 6, %v2222
      %v2224 = vrot.slane %v1389, %v2223
      %v2225 = vlaneseq
      %v2226 = vshrl.u32 %v2225, 7
      %v2227 = vsub.s32 7, %v2226
      %v2228 = vrot.slane %v1389, %v2227
      %v2229 = vlaneseq
      %v2230 = vshrl.u32 %v2229, 7
      %v2231 = vsub.s32 0, %v2230
      %v2232 = vrot.slane %v1390, %v2231
      %v2233 = vlaneseq
      %v2234 = vshrl.u32 %v2233, 7
      %v2235 = vsub.s32 1, %v2234
      %v2236 = vrot.slane %v1390, %v2235
      %v2237 = vlaneseq
      %v2238 = vshrl.u32 %v2237, 7
      %v2239 = vsub.s32 2, %v2238
      %v2240 = vrot.slane %v1390, %v2239
      %v2241 = vlaneseq
      %v2242 = vshrl.u32 %v2241, 7
      %v2243 = vsub.s32 3, %v2242
      %v2244 = vrot.slane %v1390, %v2243
      %v2245 = vlaneseq
      %v2246 = vshrl.u32 %v2245, 7
      %v2247 = vsub.s32 4, %v2246
      %v2248 = vrot.slane %v1390, %v2247
      %v2249 = vlaneseq
      %v2250 = vshrl.u32 %v2249, 7
      %v2251 = vsub.s32 5, %v2250
      %v2252 = vrot.slane %v1390, %v2251
      %v2253 = vlaneseq
      %v2254 = vshrl.u32 %v2253, 7
      %v2255 = vsub.s32 6, %v2254
      %v2256 = vrot.slane %v1390, %v2255
      %v2257 = vlaneseq
      %v2258 = vshrl.u32 %v2257, 7
      %v2259 = vsub.s32 7, %v2258
      %v2260 = vrot.slane %v1390, %v2259
      %v2261 = vlaneseq
      %v2262 = vshrl.u32 %v2261, 7
      %v2263 = vsub.s32 0, %v2262
      %v2264 = vrot.slane %v1391, %v2263
      %v2265 = vlaneseq
      %v2266 = vshrl.u32 %v2265, 7
      %v2267 = vsub.s32 1, %v2266
      %v2268 = vrot.slane %v1391, %v2267
      %v2269 = vlaneseq
      %v2270 = vshrl.u32 %v2269, 7
      %v2271 = vsub.s32 2, %v2270
      %v2272 = vrot.slane %v1391, %v2271
      %v2273 = vlaneseq
      %v2274 = vshrl.u32 %v2273, 7
      %v2275 = vsub.s32 3, %v2274
      %v2276 = vrot.slane %v1391, %v2275
      %v2277 = vlaneseq
      %v2278 = vshrl.u32 %v2277, 7
      %v2279 = vsub.s32 4, %v2278
      %v2280 = vrot.slane %v1391, %v2279
      %v2281 = vlaneseq
      %v2282 = vshrl.u32 %v2281, 7
      %v2283 = vsub.s32 5, %v2282
      %v2284 = vrot.slane %v1391, %v2283
      %v2285 = vlaneseq
      %v2286 = vshrl.u32 %v2285, 7
      %v2287 = vsub.s32 6, %v2286
      %v2288 = vrot.slane %v1391, %v2287
      %v2289 = vlaneseq
      %v2290 = vshrl.u32 %v2289, 7
      %v2291 = vsub.s32 7, %v2290
      %v2292 = vrot.slane %v1391, %v2291
      %v2293 = vlaneseq
      %v2294 = vshrl.u32 %v2293, 7
      %v2295 = vsub.s32 0, %v2294
      %v2296 = vrot.slane %v1392, %v2295
      %v2297 = vlaneseq
      %v2298 = vshrl.u32 %v2297, 7
      %v2299 = vsub.s32 1, %v2298
      %v2300 = vrot.slane %v1392, %v2299
      %v2301 = vlaneseq
      %v2302 = vshrl.u32 %v2301, 7
      %v2303 = vsub.s32 2, %v2302
      %v2304 = vrot.slane %v1392, %v2303
      %v2305 = vlaneseq
      %v2306 = vshrl.u32 %v2305, 7
      %v2307 = vsub.s32 3, %v2306
      %v2308 = vrot.slane %v1392, %v2307
      %v2309 = vlaneseq
      %v2310 = vshrl.u32 %v2309, 7
      %v2311 = vsub.s32 4, %v2310
      %v2312 = vrot.slane %v1392, %v2311
      %v2313 = vlaneseq
      %v2314 = vshrl.u32 %v2313, 7
      %v2315 = vsub.s32 5, %v2314
      %v2316 = vrot.slane %v1392, %v2315
      %v2317 = vlaneseq
      %v2318 = vshrl.u32 %v2317, 7
      %v2319 = vsub.s32 6, %v2318
      %v2320 = vrot.slane %v1392, %v2319
      %v2321 = vlaneseq
      %v2322 = vshrl.u32 %v2321, 7
      %v2323 = vsub.s32 7, %v2322
      %v2324 = vrot.slane %v1392, %v2323
      %v2325 = vlaneseq
      %v2326 = vshrl.u32 %v2325, 7
      %v2327 = vsub.s32 0, %v2326
      %v2328 = vrot.slane %v1393, %v2327
      %v2329 = vlaneseq
      %v2330 = vshrl.u32 %v2329, 7
      %v2331 = vsub.s32 1, %v2330
      %v2332 = vrot.slane %v1393, %v2331
      %v2333 = vlaneseq
      %v2334 = vshrl.u32 %v2333, 7
      %v2335 = vsub.s32 2, %v2334
      %v2336 = vrot.slane %v1393, %v2335
      %v2337 = vlaneseq
      %v2338 = vshrl.u32 %v2337, 7
      %v2339 = vsub.s32 3, %v2338
      %v2340 = vrot.slane %v1393, %v2339
      %v2341 = vlaneseq
      %v2342 = vshrl.u32 %v2341, 7
      %v2343 = vsub.s32 4, %v2342
      %v2344 = vrot.slane %v1393, %v2343
      %v2345 = vlaneseq
      %v2346 = vshrl.u32 %v2345, 7
      %v2347 = vsub.s32 5, %v2346
      %v2348 = vrot.slane %v1393, %v2347
      %v2349 = vlaneseq
      %v2350 = vshrl.u32 %v2349, 7
      %v2351 = vsub.s32 6, %v2350
      %v2352 = vrot.slane %v1393, %v2351
      %v2353 = vlaneseq
      %v2354 = vshrl.u32 %v2353, 7
      %v2355 = vsub.s32 7, %v2354
      %v2356 = vrot.slane %v1393, %v2355
      %v2357 = vlaneseq
      %v2358 = vshrl.u32 %v2357, 7
      %v2359 = vsub.s32 0, %v2358
      %v2360 = vrot.slane %v1394, %v2359
      %v2361 = vlaneseq
      %v2362 = vshrl.u32 %v2361, 7
      %v2363 = vsub.s32 1, %v2362
      %v2364 = vrot.slane %v1394, %v2363
      %v2365 = vlaneseq
      %v2366 = vshrl.u32 %v2365, 7
      %v2367 = vsub.s32 2, %v2366
      %v2368 = vrot.slane %v1394, %v2367
      %v2369 = vlaneseq
      %v2370 = vshrl.u32 %v2369, 7
      %v2371 = vsub.s32 3, %v2370
      %v2372 = vrot.slane %v1394, %v2371
      %v2373 = vlaneseq
      %v2374 = vshrl.u32 %v2373, 7
      %v2375 = vsub.s32 4, %v2374
      %v2376 = vrot.slane %v1394, %v2375
      %v2377 = vlaneseq
      %v2378 = vshrl.u32 %v2377, 7
      %v2379 = vsub.s32 5, %v2378
      %v2380 = vrot.slane %v1394, %v2379
      %v2381 = vlaneseq
      %v2382 = vshrl.u32 %v2381, 7
      %v2383 = vsub.s32 6, %v2382
      %v2384 = vrot.slane %v1394, %v2383
      %v2385 = vlaneseq
      %v2386 = vshrl.u32 %v2385, 7
      %v2387 = vsub.s32 7, %v2386
      %v2388 = vrot.slane %v1394, %v2387
      %v2389 = vlaneseq
      %v2390 = vshrl.u32 %v2389, 7
      %v2391 = vsub.s32 0, %v2390
      %v2392 = vrot.slane %v1395, %v2391
      %v2393 = vlaneseq
      %v2394 = vshrl.u32 %v2393, 7
      %v2395 = vsub.s32 1, %v2394
      %v2396 = vrot.slane %v1395, %v2395
      %v2397 = vlaneseq
      %v2398 = vshrl.u32 %v2397, 7
      %v2399 = vsub.s32 2, %v2398
      %v2400 = vrot.slane %v1395, %v2399
      %v2401 = vlaneseq
      %v2402 = vshrl.u32 %v2401, 7
      %v2403 = vsub.s32 3, %v2402
      %v2404 = vrot.slane %v1395, %v2403
      %v2405 = vlaneseq
      %v2406 = vshrl.u32 %v2405, 7
      %v2407 = vsub.s32 4, %v2406
      %v2408 = vrot.slane %v1395, %v2407
      %v2409 = vlaneseq
      %v2410 = vshrl.u32 %v2409, 7
      %v2411 = vsub.s32 5, %v2410
      %v2412 = vrot.slane %v1395, %v2411
      %v2413 = vlaneseq
      %v2414 = vshrl.u32 %v2413, 7
      %v2415 = vsub.s32 6, %v2414
      %v2416 = vrot.slane %v1395, %v2415
      %v2417 = vlaneseq
      %v2418 = vshrl.u32 %v2417, 7
      %v2419 = vsub.s32 7, %v2418
      %v2420 = vrot.slane %v1395, %v2419
      %v2421 = vlaneseq
      %v2422 = vshrl.u32 %v2421, 7
      %v2423 = vsub.s32 0, %v2422
      %v2424 = vrot.slane %v1396, %v2423
      %v2425 = vlaneseq
      %v2426 = vshrl.u32 %v2425, 7
      %v2427 = vsub.s32 1, %v2426
      %v2428 = vrot.slane %v1396, %v2427
      %v2429 = vlaneseq
      %v2430 = vshrl.u32 %v2429, 7
      %v2431 = vsub.s32 2, %v2430
      %v2432 = vrot.slane %v1396, %v2431
      %v2433 = vlaneseq
      %v2434 = vshrl.u32 %v2433, 7
      %v2435 = vsub.s32 3, %v2434
      %v2436 = vrot.slane %v1396, %v2435
      %v2437 = vlaneseq
      %v2438 = vshrl.u32 %v2437, 7
      %v2439 = vsub.s32 4, %v2438
      %v2440 = vrot.slane %v1396, %v2439
      %v2441 = vlaneseq
      %v2442 = vshrl.u32 %v2441, 7
      %v2443 = vsub.s32 5, %v2442
      %v2444 = vrot.slane %v1396, %v2443
      %v2445 = vlaneseq
      %v2446 = vshrl.u32 %v2445, 7
      %v2447 = vsub.s32 6, %v2446
      %v2448 = vrot.slane %v1396, %v2447
      %v2449 = vlaneseq
      %v2450 = vshrl.u32 %v2449, 7
      %v2451 = vsub.s32 7, %v2450
      %v2452 = vrot.slane %v1396, %v2451
      %v2453 = vcombine.low %v1432, %v1436
      %v2454 = vcombine.low %v1440, %v1444
      %v2455 = vcombine.low %v1448, %v1452
      %v2456 = vcombine.low %v1456, %v1460
      %v2458 = vunpack.c.l.s4 1966171168
      %v2459 = vunpack.c.0.s8 %v2458
      %v2460 = vlaneseq
      %v2461 = vshrl.u32 %v2460, 7
      %v2462 = vsub.s32 %v2459, %v2461
      %v2463 = vrot.slane %v2453, %v2462
      %v2465 = vunpack.c.l.s4 1966171168
      %v2466 = vunpack.c.0.s8 %v2465
      %v2467 = vlaneseq
      %v2468 = vshrl.u32 %v2467, 7
      %v2469 = vsub.s32 %v2466, %v2468
      %v2470 = vrot.slane %v2454, %v2469
      %v2472 = vunpack.c.l.s4 1966171168
      %v2473 = vunpack.c.0.s8 %v2472
      %v2474 = vlaneseq
      %v2475 = vshrl.u32 %v2474, 7
      %v2476 = vsub.s32 %v2473, %v2475
      %v2477 = vrot.slane %v2455, %v2476
      %v2479 = vunpack.c.l.s4 1966171168
      %v2480 = vunpack.c.0.s8 %v2479
      %v2481 = vlaneseq
      %v2482 = vshrl.u32 %v2481, 7
      %v2483 = vsub.s32 %v2480, %v2482
      %v2484 = vrot.slane %v2456, %v2483
      %v2485 = vcombine.low %v2463, %v2470
      %v2486 = vcombine.low %v2477, %v2484
      %v2488 = vunpack.c.l.s4 1966171168
      %v2489 = vunpack.c.0.s8 %v2488
      %v2490 = vlaneseq
      %v2491 = vshrl.u32 %v2490, 7
      %v2492 = vsub.s32 %v2489, %v2491
      %v2493 = vrot.slane %v2485, %v2492
      %v2495 = vunpack.c.l.s4 1966171168
      %v2496 = vunpack.c.0.s8 %v2495
      %v2497 = vlaneseq
      %v2498 = vshrl.u32 %v2497, 7
      %v2499 = vsub.s32 %v2496, %v2498
      %v2500 = vrot.slane %v2486, %v2499
      %v2501 = vcombine.low %v2493, %v2500
      %v2502 = vcombine.low %v1464, %v1468
      %v2503 = vcombine.low %v1472, %v1476
      %v2504 = vcombine.low %v1480, %v1484
      %v2505 = vcombine.low %v1488, %v1492
      %v2507 = vunpack.c.l.s4 1966171168
      %v2508 = vunpack.c.0.s8 %v2507
      %v2509 = vlaneseq
      %v2510 = vshrl.u32 %v2509, 7
      %v2511 = vsub.s32 %v2508, %v2510
      %v2512 = vrot.slane %v2502, %v2511
      %v2514 = vunpack.c.l.s4 1966171168
      %v2515 = vunpack.c.0.s8 %v2514
      %v2516 = vlaneseq
      %v2517 = vshrl.u32 %v2516, 7
      %v2518 = vsub.s32 %v2515, %v2517
      %v2519 = vrot.slane %v2503, %v2518
      %v2521 = vunpack.c.l.s4 1966171168
      %v2522 = vunpack.c.0.s8 %v2521
      %v2523 = vlaneseq
      %v2524 = vshrl.u32 %v2523, 7
      %v2525 = vsub.s32 %v2522, %v2524
      %v2526 = vrot.slane %v2504, %v2525
      %v2528 = vunpack.c.l.s4 1966171168
      %v2529 = vunpack.c.0.s8 %v2528
      %v2530 = vlaneseq
      %v2531 = vshrl.u32 %v2530, 7
      %v2532 = vsub.s32 %v2529, %v2531
      %v2533 = vrot.slane %v2505, %v2532
      %v2534 = vcombine.low %v2512, %v2519
      %v2535 = vcombine.low %v2526, %v2533
      %v2537 = vunpack.c.l.s4 1966171168
      %v2538 = vunpack.c.0.s8 %v2537
      %v2539 = vlaneseq
      %v2540 = vshrl.u32 %v2539, 7
      %v2541 = vsub.s32 %v2538, %v2540
      %v2542 = vrot.slane %v2534, %v2541
      %v2544 = vunpack.c.l.s4 1966171168
      %v2545 = vunpack.c.0.s8 %v2544
      %v2546 = vlaneseq
      %v2547 = vshrl.u32 %v2546, 7
      %v2548 = vsub.s32 %v2545, %v2547
      %v2549 = vrot.slane %v2535, %v2548
      %v2550 = vcombine.low %v2542, %v2549
      %v2551 = vcombine.low %v1496, %v1500
      %v2552 = vcombine.low %v1504, %v1508
      %v2553 = vcombine.low %v1512, %v1516
      %v2554 = vcombine.low %v1520, %v1524
      %v2556 = vunpack.c.l.s4 1966171168
      %v2557 = vunpack.c.0.s8 %v2556
      %v2558 = vlaneseq
      %v2559 = vshrl.u32 %v2558, 7
      %v2560 = vsub.s32 %v2557, %v2559
      %v2561 = vrot.slane %v2551, %v2560
      %v2563 = vunpack.c.l.s4 1966171168
      %v2564 = vunpack.c.0.s8 %v2563
      %v2565 = vlaneseq
      %v2566 = vshrl.u32 %v2565, 7
      %v2567 = vsub.s32 %v2564, %v2566
      %v2568 = vrot.slane %v2552, %v2567
      %v2570 = vunpack.c.l.s4 1966171168
      %v2571 = vunpack.c.0.s8 %v2570
      %v2572 = vlaneseq
      %v2573 = vshrl.u32 %v2572, 7
      %v2574 = vsub.s32 %v2571, %v2573
      %v2575 = vrot.slane %v2553, %v2574
      %v2577 = vunpack.c.l.s4 1966171168
      %v2578 = vunpack.c.0.s8 %v2577
      %v2579 = vlaneseq
      %v2580 = vshrl.u32 %v2579, 7
      %v2581 = vsub.s32 %v2578, %v2580
      %v2582 = vrot.slane %v2554, %v2581
      %v2583 = vcombine.low %v2561, %v2568
      %v2584 = vcombine.low %v2575, %v2582
      %v2586 = vunpack.c.l.s4 1966171168
      %v2587 = vunpack.c.0.s8 %v2586
      %v2588 = vlaneseq
      %v2589 = vshrl.u32 %v2588, 7
      %v2590 = vsub.s32 %v2587, %v2589
      %v2591 = vrot.slane %v2583, %v2590
      %v2593 = vunpack.c.l.s4 1966171168
      %v2594 = vunpack.c.0.s8 %v2593
      %v2595 = vlaneseq
      %v2596 = vshrl.u32 %v2595, 7
      %v2597 = vsub.s32 %v2594, %v2596
      %v2598 = vrot.slane %v2584, %v2597
      %v2599 = vcombine.low %v2591, %v2598
      %v2600 = vcombine.low %v1528, %v1532
      %v2601 = vcombine.low %v1536, %v1540
      %v2602 = vcombine.low %v1544, %v1548
      %v2603 = vcombine.low %v1552, %v1556
      %v2605 = vunpack.c.l.s4 1966171168
      %v2606 = vunpack.c.0.s8 %v2605
      %v2607 = vlaneseq
      %v2608 = vshrl.u32 %v2607, 7
      %v2609 = vsub.s32 %v2606, %v2608
      %v2610 = vrot.slane %v2600, %v2609
      %v2612 = vunpack.c.l.s4 1966171168
      %v2613 = vunpack.c.0.s8 %v2612
      %v2614 = vlaneseq
      %v2615 = vshrl.u32 %v2614, 7
      %v2616 = vsub.s32 %v2613, %v2615
      %v2617 = vrot.slane %v2601, %v2616
      %v2619 = vunpack.c.l.s4 1966171168
      %v2620 = vunpack.c.0.s8 %v2619
      %v2621 = vlaneseq
      %v2622 = vshrl.u32 %v2621, 7
      %v2623 = vsub.s32 %v2620, %v2622
      %v2624 = vrot.slane %v2602, %v2623
      %v2626 = vunpack.c.l.s4 1966171168
      %v2627 = vunpack.c.0.s8 %v2626
      %v2628 = vlaneseq
      %v2629 = vshrl.u32 %v2628, 7
      %v2630 = vsub.s32 %v2627, %v2629
      %v2631 = vrot.slane %v2603, %v2630
      %v2632 = vcombine.low %v2610, %v2617
      %v2633 = vcombine.low %v2624, %v2631
      %v2635 = vunpack.c.l.s4 1966171168
      %v2636 = vunpack.c.0.s8 %v2635
      %v2637 = vlaneseq
      %v2638 = vshrl.u32 %v2637, 7
      %v2639 = vsub.s32 %v2636, %v2638
      %v2640 = vrot.slane %v2632, %v2639
      %v2642 = vunpack.c.l.s4 1966171168
      %v2643 = vunpack.c.0.s8 %v2642
      %v2644 = vlaneseq
      %v2645 = vshrl.u32 %v2644, 7
      %v2646 = vsub.s32 %v2643, %v2645
      %v2647 = vrot.slane %v2633, %v2646
      %v2648 = vcombine.low %v2640, %v2647
      %v2649 = vcombine.low %v1560, %v1564
      %v2650 = vcombine.low %v1568, %v1572
      %v2651 = vcombine.low %v1576, %v1580
      %v2652 = vcombine.low %v1584, %v1588
      %v2654 = vunpack.c.l.s4 1966171168
      %v2655 = vunpack.c.0.s8 %v2654
      %v2656 = vlaneseq
      %v2657 = vshrl.u32 %v2656, 7
      %v2658 = vsub.s32 %v2655, %v2657
      %v2659 = vrot.slane %v2649, %v2658
      %v2661 = vunpack.c.l.s4 1966171168
      %v2662 = vunpack.c.0.s8 %v2661
      %v2663 = vlaneseq
      %v2664 = vshrl.u32 %v2663, 7
      %v2665 = vsub.s32 %v2662, %v2664
      %v2666 = vrot.slane %v2650, %v2665
      %v2668 = vunpack.c.l.s4 1966171168
      %v2669 = vunpack.c.0.s8 %v2668
      %v2670 = vlaneseq
      %v2671 = vshrl.u32 %v2670, 7
      %v2672 = vsub.s32 %v2669, %v2671
      %v2673 = vrot.slane %v2651, %v2672
      %v2675 = vunpack.c.l.s4 1966171168
      %v2676 = vunpack.c.0.s8 %v2675
      %v2677 = vlaneseq
      %v2678 = vshrl.u32 %v2677, 7
      %v2679 = vsub.s32 %v2676, %v2678
      %v2680 = vrot.slane %v2652, %v2679
      %v2681 = vcombine.low %v2659, %v2666
      %v2682 = vcombine.low %v2673, %v2680
      %v2684 = vunpack.c.l.s4 1966171168
      %v2685 = vunpack.c.0.s8 %v2684
      %v2686 = vlaneseq
      %v2687 = vshrl.u32 %v2686, 7
      %v2688 = vsub.s32 %v2685, %v2687
      %v2689 = vrot.slane %v2681, %v2688
      %v2691 = vunpack.c.l.s4 1966171168
      %v2692 = vunpack.c.0.s8 %v2691
      %v2693 = vlaneseq
      %v2694 = vshrl.u32 %v2693, 7
      %v2695 = vsub.s32 %v2692, %v2694
      %v2696 = vrot.slane %v2682, %v2695
      %v2697 = vcombine.low %v2689, %v2696
      %v2698 = vcombine.low %v1592, %v1596
      %v2699 = vcombine.low %v1600, %v1604
      %v2700 = vcombine.low %v1608, %v1612
      %v2701 = vcombine.low %v1616, %v1620
      %v2703 = vunpack.c.l.s4 1966171168
      %v2704 = vunpack.c.0.s8 %v2703
      %v2705 = vlaneseq
      %v2706 = vshrl.u32 %v2705, 7
      %v2707 = vsub.s32 %v2704, %v2706
      %v2708 = vrot.slane %v2698, %v2707
      %v2710 = vunpack.c.l.s4 1966171168
      %v2711 = vunpack.c.0.s8 %v2710
      %v2712 = vlaneseq
      %v2713 = vshrl.u32 %v2712, 7
      %v2714 = vsub.s32 %v2711, %v2713
      %v2715 = vrot.slane %v2699, %v2714
      %v2717 = vunpack.c.l.s4 1966171168
      %v2718 = vunpack.c.0.s8 %v2717
      %v2719 = vlaneseq
      %v2720 = vshrl.u32 %v2719, 7
      %v2721 = vsub.s32 %v2718, %v2720
      %v2722 = vrot.slane %v2700, %v2721
      %v2724 = vunpack.c.l.s4 1966171168
      %v2725 = vunpack.c.0.s8 %v2724
      %v2726 = vlaneseq
      %v2727 = vshrl.u32 %v2726, 7
      %v2728 = vsub.s32 %v2725, %v2727
      %v2729 = vrot.slane %v2701, %v2728
      %v2730 = vcombine.low %v2708, %v2715
      %v2731 = vcombine.low %v2722, %v2729
      %v2733 = vunpack.c.l.s4 1966171168
      %v2734 = vunpack.c.0.s8 %v2733
      %v2735 = vlaneseq
      %v2736 = vshrl.u32 %v2735, 7
      %v2737 = vsub.s32 %v2734, %v2736
      %v2738 = vrot.slane %v2730, %v2737
      %v2740 = vunpack.c.l.s4 1966171168
      %v2741 = vunpack.c.0.s8 %v2740
      %v2742 = vlaneseq
      %v2743 = vshrl.u32 %v2742, 7
      %v2744 = vsub.s32 %v2741, %v2743
      %v2745 = vrot.slane %v2731, %v2744
      %v2746 = vcombine.low %v2738, %v2745
      %v2747 = vcombine.low %v1624, %v1628
      %v2748 = vcombine.low %v1632, %v1636
      %v2749 = vcombine.low %v1640, %v1644
      %v2750 = vcombine.low %v1648, %v1652
      %v2752 = vunpack.c.l.s4 1966171168
      %v2753 = vunpack.c.0.s8 %v2752
      %v2754 = vlaneseq
      %v2755 = vshrl.u32 %v2754, 7
      %v2756 = vsub.s32 %v2753, %v2755
      %v2757 = vrot.slane %v2747, %v2756
      %v2759 = vunpack.c.l.s4 1966171168
      %v2760 = vunpack.c.0.s8 %v2759
      %v2761 = vlaneseq
      %v2762 = vshrl.u32 %v2761, 7
      %v2763 = vsub.s32 %v2760, %v2762
      %v2764 = vrot.slane %v2748, %v2763
      %v2766 = vunpack.c.l.s4 1966171168
      %v2767 = vunpack.c.0.s8 %v2766
      %v2768 = vlaneseq
      %v2769 = vshrl.u32 %v2768, 7
      %v2770 = vsub.s32 %v2767, %v2769
      %v2771 = vrot.slane %v2749, %v2770
      %v2773 = vunpack.c.l.s4 1966171168
      %v2774 = vunpack.c.0.s8 %v2773
      %v2775 = vlaneseq
      %v2776 = vshrl.u32 %v2775, 7
      %v2777 = vsub.s32 %v2774, %v2776
      %v2778 = vrot.slane %v2750, %v2777
      %v2779 = vcombine.low %v2757, %v2764
      %v2780 = vcombine.low %v2771, %v2778
      %v2782 = vunpack.c.l.s4 1966171168
      %v2783 = vunpack.c.0.s8 %v2782
      %v2784 = vlaneseq
      %v2785 = vshrl.u32 %v2784, 7
      %v2786 = vsub.s32 %v2783, %v2785
      %v2787 = vrot.slane %v2779, %v2786
      %v2789 = vunpack.c.l.s4 1966171168
      %v2790 = vunpack.c.0.s8 %v2789
      %v2791 = vlaneseq
      %v2792 = vshrl.u32 %v2791, 7
      %v2793 = vsub.s32 %v2790, %v2792
      %v2794 = vrot.slane %v2780, %v2793
      %v2795 = vcombine.low %v2787, %v2794
      %v2796 = vcombine.low %v1656, %v1660
      %v2797 = vcombine.low %v1664, %v1668
      %v2798 = vcombine.low %v1672, %v1676
      %v2799 = vcombine.low %v1680, %v1684
      %v2801 = vunpack.c.l.s4 1966171168
      %v2802 = vunpack.c.0.s8 %v2801
      %v2803 = vlaneseq
      %v2804 = vshrl.u32 %v2803, 7
      %v2805 = vsub.s32 %v2802, %v2804
      %v2806 = vrot.slane %v2796, %v2805
      %v2808 = vunpack.c.l.s4 1966171168
      %v2809 = vunpack.c.0.s8 %v2808
      %v2810 = vlaneseq
      %v2811 = vshrl.u32 %v2810, 7
      %v2812 = vsub.s32 %v2809, %v2811
      %v2813 = vrot.slane %v2797, %v2812
      %v2815 = vunpack.c.l.s4 1966171168
      %v2816 = vunpack.c.0.s8 %v2815
      %v2817 = vlaneseq
      %v2818 = vshrl.u32 %v2817, 7
      %v2819 = vsub.s32 %v2816, %v2818
      %v2820 = vrot.slane %v2798, %v2819
      %v2822 = vunpack.c.l.s4 1966171168
      %v2823 = vunpack.c.0.s8 %v2822
      %v2824 = vlaneseq
      %v2825 = vshrl.u32 %v2824, 7
      %v2826 = vsub.s32 %v2823, %v2825
      %v2827 = vrot.slane %v2799, %v2826
      %v2828 = vcombine.low %v2806, %v2813
      %v2829 = vcombine.low %v2820, %v2827
      %v2831 = vunpack.c.l.s4 1966171168
      %v2832 = vunpack.c.0.s8 %v2831
      %v2833 = vlaneseq
      %v2834 = vshrl.u32 %v2833, 7
      %v2835 = vsub.s32 %v2832, %v2834
      %v2836 = vrot.slane %v2828, %v2835
      %v2838 = vunpack.c.l.s4 1966171168
      %v2839 = vunpack.c.0.s8 %v2838
      %v2840 = vlaneseq
      %v2841 = vshrl.u32 %v2840, 7
      %v2842 = vsub.s32 %v2839, %v2841
      %v2843 = vrot.slane %v2829, %v2842
      %v2844 = vcombine.low %v2836, %v2843
      %v2845 = vcombine.low %v1688, %v1692
      %v2846 = vcombine.low %v1696, %v1700
      %v2847 = vcombine.low %v1704, %v1708
      %v2848 = vcombine.low %v1712, %v1716
      %v2850 = vunpack.c.l.s4 1966171168
      %v2851 = vunpack.c.0.s8 %v2850
      %v2852 = vlaneseq
      %v2853 = vshrl.u32 %v2852, 7
      %v2854 = vsub.s32 %v2851, %v2853
      %v2855 = vrot.slane %v2845, %v2854
      %v2857 = vunpack.c.l.s4 1966171168
      %v2858 = vunpack.c.0.s8 %v2857
      %v2859 = vlaneseq
      %v2860 = vshrl.u32 %v2859, 7
      %v2861 = vsub.s32 %v2858, %v2860
      %v2862 = vrot.slane %v2846, %v2861
      %v2864 = vunpack.c.l.s4 1966171168
      %v2865 = vunpack.c.0.s8 %v2864
      %v2866 = vlaneseq
      %v2867 = vshrl.u32 %v2866, 7
      %v2868 = vsub.s32 %v2865, %v2867
      %v2869 = vrot.slane %v2847, %v2868
      %v2871 = vunpack.c.l.s4 1966171168
      %v2872 = vunpack.c.0.s8 %v2871
      %v2873 = vlaneseq
      %v2874 = vshrl.u32 %v2873, 7
      %v2875 = vsub.s32 %v2872, %v2874
      %v2876 = vrot.slane %v2848, %v2875
      %v2877 = vcombine.low %v2855, %v2862
      %v2878 = vcombine.low %v2869, %v2876
      %v2880 = vunpack.c.l.s4 1966171168
      %v2881 = vunpack.c.0.s8 %v2880
      %v2882 = vlaneseq
      %v2883 = vshrl.u32 %v2882, 7
      %v2884 = vsub.s32 %v2881, %v2883
      %v2885 = vrot.slane %v2877, %v2884
      %v2887 = vunpack.c.l.s4 1966171168
      %v2888 = vunpack.c.0.s8 %v2887
      %v2889 = vlaneseq
      %v2890 = vshrl.u32 %v2889, 7
      %v2891 = vsub.s32 %v2888, %v2890
      %v2892 = vrot.slane %v2878, %v2891
      %v2893 = vcombine.low %v2885, %v2892
      %v2894 = vcombine.low %v1720, %v1724
      %v2895 = vcombine.low %v1728, %v1732
      %v2896 = vcombine.low %v1736, %v1740
      %v2897 = vcombine.low %v1744, %v1748
      %v2899 = vunpack.c.l.s4 1966171168
      %v2900 = vunpack.c.0.s8 %v2899
      %v2901 = vlaneseq
      %v2902 = vshrl.u32 %v2901, 7
      %v2903 = vsub.s32 %v2900, %v2902
      %v2904 = vrot.slane %v2894, %v2903
      %v2906 = vunpack.c.l.s4 1966171168
      %v2907 = vunpack.c.0.s8 %v2906
      %v2908 = vlaneseq
      %v2909 = vshrl.u32 %v2908, 7
      %v2910 = vsub.s32 %v2907, %v2909
      %v2911 = vrot.slane %v2895, %v2910
      %v2913 = vunpack.c.l.s4 1966171168
      %v2914 = vunpack.c.0.s8 %v2913
      %v2915 = vlaneseq
      %v2916 = vshrl.u32 %v2915, 7
      %v2917 = vsub.s32 %v2914, %v2916
      %v2918 = vrot.slane %v2896, %v2917
      %v2920 = vunpack.c.l.s4 1966171168
      %v2921 = vunpack.c.0.s8 %v2920
      %v2922 = vlaneseq
      %v2923 = vshrl.u32 %v2922, 7
      %v2924 = vsub.s32 %v2921, %v2923
      %v2925 = vrot.slane %v2897, %v2924
      %v2926 = vcombine.low %v2904, %v2911
      %v2927 = vcombine.low %v2918, %v2925
      %v2929 = vunpack.c.l.s4 1966171168
      %v2930 = vunpack.c.0.s8 %v2929
      %v2931 = vlaneseq
      %v2932 = vshrl.u32 %v2931, 7
      %v2933 = vsub.s32 %v2930, %v2932
      %v2934 = vrot.slane %v2926, %v2933
      %v2936 = vunpack.c.l.s4 1966171168
      %v2937 = vunpack.c.0.s8 %v2936
      %v2938 = vlaneseq
      %v2939 = vshrl.u32 %v2938, 7
      %v2940 = vsub.s32 %v2937, %v2939
      %v2941 = vrot.slane %v2927, %v2940
      %v2942 = vcombine.low %v2934, %v2941
      %v2943 = vcombine.low %v1752, %v1756
      %v2944 = vcombine.low %v1760, %v1764
      %v2945 = vcombine.low %v1768, %v1772
      %v2946 = vcombine.low %v1776, %v1780
      %v2948 = vunpack.c.l.s4 1966171168
      %v2949 = vunpack.c.0.s8 %v2948
      %v2950 = vlaneseq
      %v2951 = vshrl.u32 %v2950, 7
      %v2952 = vsub.s32 %v2949, %v2951
      %v2953 = vrot.slane %v2943, %v2952
      %v2955 = vunpack.c.l.s4 1966171168
      %v2956 = vunpack.c.0.s8 %v2955
      %v2957 = vlaneseq
      %v2958 = vshrl.u32 %v2957, 7
      %v2959 = vsub.s32 %v2956, %v2958
      %v2960 = vrot.slane %v2944, %v2959
      %v2962 = vunpack.c.l.s4 1966171168
      %v2963 = vunpack.c.0.s8 %v2962
      %v2964 = vlaneseq
      %v2965 = vshrl.u32 %v2964, 7
      %v2966 = vsub.s32 %v2963, %v2965
      %v2967 = vrot.slane %v2945, %v2966
      %v2969 = vunpack.c.l.s4 1966171168
      %v2970 = vunpack.c.0.s8 %v2969
      %v2971 = vlaneseq
      %v2972 = vshrl.u32 %v2971, 7
      %v2973 = vsub.s32 %v2970, %v2972
      %v2974 = vrot.slane %v2946, %v2973
      %v2975 = vcombine.low %v2953, %v2960
      %v2976 = vcombine.low %v2967, %v2974
      %v2978 = vunpack.c.l.s4 1966171168
      %v2979 = vunpack.c.0.s8 %v2978
      %v2980 = vlaneseq
      %v2981 = vshrl.u32 %v2980, 7
      %v2982 = vsub.s32 %v2979, %v2981
      %v2983 = vrot.slane %v2975, %v2982
      %v2985 = vunpack.c.l.s4 1966171168
      %v2986 = vunpack.c.0.s8 %v2985
      %v2987 = vlaneseq
      %v2988 = vshrl.u32 %v2987, 7
      %v2989 = vsub.s32 %v2986, %v2988
      %v2990 = vrot.slane %v2976, %v2989
      %v2991 = vcombine.low %v2983, %v2990
      %v2992 = vcombine.low %v1784, %v1788
      %v2993 = vcombine.low %v1792, %v1796
      %v2994 = vcombine.low %v1800, %v1804
      %v2995 = vcombine.low %v1808, %v1812
      %v2997 = vunpack.c.l.s4 1966171168
      %v2998 = vunpack.c.0.s8 %v2997
      %v2999 = vlaneseq
      %v3000 = vshrl.u32 %v2999, 7
      %v3001 = vsub.s32 %v2998, %v3000
      %v3002 = vrot.slane %v2992, %v3001
      %v3004 = vunpack.c.l.s4 1966171168
      %v3005 = vunpack.c.0.s8 %v3004
      %v3006 = vlaneseq
      %v3007 = vshrl.u32 %v3006, 7
      %v3008 = vsub.s32 %v3005, %v3007
      %v3009 = vrot.slane %v2993, %v3008
      %v3011 = vunpack.c.l.s4 1966171168
      %v3012 = vunpack.c.0.s8 %v3011
      %v3013 = vlaneseq
      %v3014 = vshrl.u32 %v3013, 7
      %v3015 = vsub.s32 %v3012, %v3014
      %v3016 = vrot.slane %v2994, %v3015
      %v3018 = vunpack.c.l.s4 1966171168
      %v3019 = vunpack.c.0.s8 %v3018
      %v3020 = vlaneseq
      %v3021 = vshrl.u32 %v3020, 7
      %v3022 = vsub.s32 %v3019, %v3021
      %v3023 = vrot.slane %v2995, %v3022
      %v3024 = vcombine.low %v3002, %v3009
      %v3025 = vcombine.low %v3016, %v3023
      %v3027 = vunpack.c.l.s4 1966171168
      %v3028 = vunpack.c.0.s8 %v3027
      %v3029 = vlaneseq
      %v3030 = vshrl.u32 %v3029, 7
      %v3031 = vsub.s32 %v3028, %v3030
      %v3032 = vrot.slane %v3024, %v3031
      %v3034 = vunpack.c.l.s4 1966171168
      %v3035 = vunpack.c.0.s8 %v3034
      %v3036 = vlaneseq
      %v3037 = vshrl.u32 %v3036, 7
      %v3038 = vsub.s32 %v3035, %v3037
      %v3039 = vrot.slane %v3025, %v3038
      %v3040 = vcombine.low %v3032, %v3039
      %v3041 = vcombine.low %v1816, %v1820
      %v3042 = vcombine.low %v1824, %v1828
      %v3043 = vcombine.low %v1832, %v1836
      %v3044 = vcombine.low %v1840, %v1844
      %v3046 = vunpack.c.l.s4 1966171168
      %v3047 = vunpack.c.0.s8 %v3046
      %v3048 = vlaneseq
      %v3049 = vshrl.u32 %v3048, 7
      %v3050 = vsub.s32 %v3047, %v3049
      %v3051 = vrot.slane %v3041, %v3050
      %v3053 = vunpack.c.l.s4 1966171168
      %v3054 = vunpack.c.0.s8 %v3053
      %v3055 = vlaneseq
      %v3056 = vshrl.u32 %v3055, 7
      %v3057 = vsub.s32 %v3054, %v3056
      %v3058 = vrot.slane %v3042, %v3057
      %v3060 = vunpack.c.l.s4 1966171168
      %v3061 = vunpack.c.0.s8 %v3060
      %v3062 = vlaneseq
      %v3063 = vshrl.u32 %v3062, 7
      %v3064 = vsub.s32 %v3061, %v3063
      %v3065 = vrot.slane %v3043, %v3064
      %v3067 = vunpack.c.l.s4 1966171168
      %v3068 = vunpack.c.0.s8 %v3067
      %v3069 = vlaneseq
      %v3070 = vshrl.u32 %v3069, 7
      %v3071 = vsub.s32 %v3068, %v3070
      %v3072 = vrot.slane %v3044, %v3071
      %v3073 = vcombine.low %v3051, %v3058
      %v3074 = vcombine.low %v3065, %v3072
      %v3076 = vunpack.c.l.s4 1966171168
      %v3077 = vunpack.c.0.s8 %v3076
      %v3078 = vlaneseq
      %v3079 = vshrl.u32 %v3078, 7
      %v3080 = vsub.s32 %v3077, %v3079
      %v3081 = vrot.slane %v3073, %v3080
      %v3083 = vunpack.c.l.s4 1966171168
      %v3084 = vunpack.c.0.s8 %v3083
      %v3085 = vlaneseq
      %v3086 = vshrl.u32 %v3085, 7
      %v3087 = vsub.s32 %v3084, %v3086
      %v3088 = vrot.slane %v3074, %v3087
      %v3089 = vcombine.low %v3081, %v3088
      %v3090 = vcombine.low %v1848, %v1852
      %v3091 = vcombine.low %v1856, %v1860
      %v3092 = vcombine.low %v1864, %v1868
      %v3093 = vcombine.low %v1872, %v1876
      %v3095 = vunpack.c.l.s4 1966171168
      %v3096 = vunpack.c.0.s8 %v3095
      %v3097 = vlaneseq
      %v3098 = vshrl.u32 %v3097, 7
      %v3099 = vsub.s32 %v3096, %v3098
      %v3100 = vrot.slane %v3090, %v3099
      %v3102 = vunpack.c.l.s4 1966171168
      %v3103 = vunpack.c.0.s8 %v3102
      %v3104 = vlaneseq
      %v3105 = vshrl.u32 %v3104, 7
      %v3106 = vsub.s32 %v3103, %v3105
      %v3107 = vrot.slane %v3091, %v3106
      %v3109 = vunpack.c.l.s4 1966171168
      %v3110 = vunpack.c.0.s8 %v3109
      %v3111 = vlaneseq
      %v3112 = vshrl.u32 %v3111, 7
      %v3113 = vsub.s32 %v3110, %v3112
      %v3114 = vrot.slane %v3092, %v3113
      %v3116 = vunpack.c.l.s4 1966171168
      %v3117 = vunpack.c.0.s8 %v3116
      %v3118 = vlaneseq
      %v3119 = vshrl.u32 %v3118, 7
      %v3120 = vsub.s32 %v3117, %v3119
      %v3121 = vrot.slane %v3093, %v3120
      %v3122 = vcombine.low %v3100, %v3107
      %v3123 = vcombine.low %v3114, %v3121
      %v3125 = vunpack.c.l.s4 1966171168
      %v3126 = vunpack.c.0.s8 %v3125
      %v3127 = vlaneseq
      %v3128 = vshrl.u32 %v3127, 7
      %v3129 = vsub.s32 %v3126, %v3128
      %v3130 = vrot.slane %v3122, %v3129
      %v3132 = vunpack.c.l.s4 1966171168
      %v3133 = vunpack.c.0.s8 %v3132
      %v3134 = vlaneseq
      %v3135 = vshrl.u32 %v3134, 7
      %v3136 = vsub.s32 %v3133, %v3135
      %v3137 = vrot.slane %v3123, %v3136
      %v3138 = vcombine.low %v3130, %v3137
      %v3139 = vcombine.low %v1880, %v1884
      %v3140 = vcombine.low %v1888, %v1892
      %v3141 = vcombine.low %v1896, %v1900
      %v3142 = vcombine.low %v1904, %v1908
      %v3144 = vunpack.c.l.s4 1966171168
      %v3145 = vunpack.c.0.s8 %v3144
      %v3146 = vlaneseq
      %v3147 = vshrl.u32 %v3146, 7
      %v3148 = vsub.s32 %v3145, %v3147
      %v3149 = vrot.slane %v3139, %v3148
      %v3151 = vunpack.c.l.s4 1966171168
      %v3152 = vunpack.c.0.s8 %v3151
      %v3153 = vlaneseq
      %v3154 = vshrl.u32 %v3153, 7
      %v3155 = vsub.s32 %v3152, %v3154
      %v3156 = vrot.slane %v3140, %v3155
      %v3158 = vunpack.c.l.s4 1966171168
      %v3159 = vunpack.c.0.s8 %v3158
      %v3160 = vlaneseq
      %v3161 = vshrl.u32 %v3160, 7
      %v3162 = vsub.s32 %v3159, %v3161
      %v3163 = vrot.slane %v3141, %v3162
      %v3165 = vunpack.c.l.s4 1966171168
      %v3166 = vunpack.c.0.s8 %v3165
      %v3167 = vlaneseq
      %v3168 = vshrl.u32 %v3167, 7
      %v3169 = vsub.s32 %v3166, %v3168
      %v3170 = vrot.slane %v3142, %v3169
      %v3171 = vcombine.low %v3149, %v3156
      %v3172 = vcombine.low %v3163, %v3170
      %v3174 = vunpack.c.l.s4 1966171168
      %v3175 = vunpack.c.0.s8 %v3174
      %v3176 = vlaneseq
      %v3177 = vshrl.u32 %v3176, 7
      %v3178 = vsub.s32 %v3175, %v3177
      %v3179 = vrot.slane %v3171, %v3178
      %v3181 = vunpack.c.l.s4 1966171168
      %v3182 = vunpack.c.0.s8 %v3181
      %v3183 = vlaneseq
      %v3184 = vshrl.u32 %v3183, 7
      %v3185 = vsub.s32 %v3182, %v3184
      %v3186 = vrot.slane %v3172, %v3185
      %v3187 = vcombine.low %v3179, %v3186
      %v3188 = vcombine.low %v1912, %v1916
      %v3189 = vcombine.low %v1920, %v1924
      %v3190 = vcombine.low %v1928, %v1932
      %v3191 = vcombine.low %v1936, %v1940
      %v3193 = vunpack.c.l.s4 1966171168
      %v3194 = vunpack.c.0.s8 %v3193
      %v3195 = vlaneseq
      %v3196 = vshrl.u32 %v3195, 7
      %v3197 = vsub.s32 %v3194, %v3196
      %v3198 = vrot.slane %v3188, %v3197
      %v3200 = vunpack.c.l.s4 1966171168
      %v3201 = vunpack.c.0.s8 %v3200
      %v3202 = vlaneseq
      %v3203 = vshrl.u32 %v3202, 7
      %v3204 = vsub.s32 %v3201, %v3203
      %v3205 = vrot.slane %v3189, %v3204
      %v3207 = vunpack.c.l.s4 1966171168
      %v3208 = vunpack.c.0.s8 %v3207
      %v3209 = vlaneseq
      %v3210 = vshrl.u32 %v3209, 7
      %v3211 = vsub.s32 %v3208, %v3210
      %v3212 = vrot.slane %v3190, %v3211
      %v3214 = vunpack.c.l.s4 1966171168
      %v3215 = vunpack.c.0.s8 %v3214
      %v3216 = vlaneseq
      %v3217 = vshrl.u32 %v3216, 7
      %v3218 = vsub.s32 %v3215, %v3217
      %v3219 = vrot.slane %v3191, %v3218
      %v3220 = vcombine.low %v3198, %v3205
      %v3221 = vcombine.low %v3212, %v3219
      %v3223 = vunpack.c.l.s4 1966171168
      %v3224 = vunpack.c.0.s8 %v3223
      %v3225 = vlaneseq
      %v3226 = vshrl.u32 %v3225, 7
      %v3227 = vsub.s32 %v3224, %v3226
      %v3228 = vrot.slane %v3220, %v3227
      %v3230 = vunpack.c.l.s4 1966171168
      %v3231 = vunpack.c.0.s8 %v3230
      %v3232 = vlaneseq
      %v3233 = vshrl.u32 %v3232, 7
      %v3234 = vsub.s32 %v3231, %v3233
      %v3235 = vrot.slane %v3221, %v3234
      %v3236 = vcombine.low %v3228, %v3235
      %v3237 = vcombine.low %v1944, %v1948
      %v3238 = vcombine.low %v1952, %v1956
      %v3239 = vcombine.low %v1960, %v1964
      %v3240 = vcombine.low %v1968, %v1972
      %v3242 = vunpack.c.l.s4 1966171168
      %v3243 = vunpack.c.0.s8 %v3242
      %v3244 = vlaneseq
      %v3245 = vshrl.u32 %v3244, 7
      %v3246 = vsub.s32 %v3243, %v3245
      %v3247 = vrot.slane %v3237, %v3246
      %v3249 = vunpack.c.l.s4 1966171168
      %v3250 = vunpack.c.0.s8 %v3249
      %v3251 = vlaneseq
      %v3252 = vshrl.u32 %v3251, 7
      %v3253 = vsub.s32 %v3250, %v3252
      %v3254 = vrot.slane %v3238, %v3253
      %v3256 = vunpack.c.l.s4 1966171168
      %v3257 = vunpack.c.0.s8 %v3256
      %v3258 = vlaneseq
      %v3259 = vshrl.u32 %v3258, 7
      %v3260 = vsub.s32 %v3257, %v3259
      %v3261 = vrot.slane %v3239, %v3260
      %v3263 = vunpack.c.l.s4 1966171168
      %v3264 = vunpack.c.0.s8 %v3263
      %v3265 = vlaneseq
      %v3266 = vshrl.u32 %v3265, 7
      %v3267 = vsub.s32 %v3264, %v3266
      %v3268 = vrot.slane %v3240, %v3267
      %v3269 = vcombine.low %v3247, %v3254
      %v3270 = vcombine.low %v3261, %v3268
      %v3272 = vunpack.c.l.s4 1966171168
      %v3273 = vunpack.c.0.s8 %v3272
      %v3274 = vlaneseq
      %v3275 = vshrl.u32 %v3274, 7
      %v3276 = vsub.s32 %v3273, %v3275
      %v3277 = vrot.slane %v3269, %v3276
      %v3279 = vunpack.c.l.s4 1966171168
      %v3280 = vunpack.c.0.s8 %v3279
      %v3281 = vlaneseq
      %v3282 = vshrl.u32 %v3281, 7
      %v3283 = vsub.s32 %v3280, %v3282
      %v3284 = vrot.slane %v3270, %v3283
      %v3285 = vcombine.low %v3277, %v3284
      %v3286 = vcombine.low %v1976, %v1980
      %v3287 = vcombine.low %v1984, %v1988
      %v3288 = vcombine.low %v1992, %v1996
      %v3289 = vcombine.low %v2000, %v2004
      %v3291 = vunpack.c.l.s4 1966171168
      %v3292 = vunpack.c.0.s8 %v3291
      %v3293 = vlaneseq
      %v3294 = vshrl.u32 %v3293, 7
      %v3295 = vsub.s32 %v3292, %v3294
      %v3296 = vrot.slane %v3286, %v3295
      %v3298 = vunpack.c.l.s4 1966171168
      %v3299 = vunpack.c.0.s8 %v3298
      %v3300 = vlaneseq
      %v3301 = vshrl.u32 %v3300, 7
      %v3302 = vsub.s32 %v3299, %v3301
      %v3303 = vrot.slane %v3287, %v3302
      %v3305 = vunpack.c.l.s4 1966171168
      %v3306 = vunpack.c.0.s8 %v3305
      %v3307 = vlaneseq
      %v3308 = vshrl.u32 %v3307, 7
      %v3309 = vsub.s32 %v3306, %v3308
      %v3310 = vrot.slane %v3288, %v3309
      %v3312 = vunpack.c.l.s4 1966171168
      %v3313 = vunpack.c.0.s8 %v3312
      %v3314 = vlaneseq
      %v3315 = vshrl.u32 %v3314, 7
      %v3316 = vsub.s32 %v3313, %v3315
      %v3317 = vrot.slane %v3289, %v3316
      %v3318 = vcombine.low %v3296, %v3303
      %v3319 = vcombine.low %v3310, %v3317
      %v3321 = vunpack.c.l.s4 1966171168
      %v3322 = vunpack.c.0.s8 %v3321
      %v3323 = vlaneseq
      %v3324 = vshrl.u32 %v3323, 7
      %v3325 = vsub.s32 %v3322, %v3324
      %v3326 = vrot.slane %v3318, %v3325
      %v3328 = vunpack.c.l.s4 1966171168
      %v3329 = vunpack.c.0.s8 %v3328
      %v3330 = vlaneseq
      %v3331 = vshrl.u32 %v3330, 7
      %v3332 = vsub.s32 %v3329, %v3331
      %v3333 = vrot.slane %v3319, %v3332
      %v3334 = vcombine.low %v3326, %v3333
      %v3335 = vcombine.low %v2008, %v2012
      %v3336 = vcombine.low %v2016, %v2020
      %v3337 = vcombine.low %v2024, %v2028
      %v3338 = vcombine.low %v2032, %v2036
      %v3340 = vunpack.c.l.s4 1966171168
      %v3341 = vunpack.c.0.s8 %v3340
      %v3342 = vlaneseq
      %v3343 = vshrl.u32 %v3342, 7
      %v3344 = vsub.s32 %v3341, %v3343
      %v3345 = vrot.slane %v3335, %v3344
      %v3347 = vunpack.c.l.s4 1966171168
      %v3348 = vunpack.c.0.s8 %v3347
      %v3349 = vlaneseq
      %v3350 = vshrl.u32 %v3349, 7
      %v3351 = vsub.s32 %v3348, %v3350
      %v3352 = vrot.slane %v3336, %v3351
      %v3354 = vunpack.c.l.s4 1966171168
      %v3355 = vunpack.c.0.s8 %v3354
      %v3356 = vlaneseq
      %v3357 = vshrl.u32 %v3356, 7
      %v3358 = vsub.s32 %v3355, %v3357
      %v3359 = vrot.slane %v3337, %v3358
      %v3361 = vunpack.c.l.s4 1966171168
      %v3362 = vunpack.c.0.s8 %v3361
      %v3363 = vlaneseq
      %v3364 = vshrl.u32 %v3363, 7
      %v3365 = vsub.s32 %v3362, %v3364
      %v3366 = vrot.slane %v3338, %v3365
      %v3367 = vcombine.low %v3345, %v3352
      %v3368 = vcombine.low %v3359, %v3366
      %v3370 = vunpack.c.l.s4 1966171168
      %v3371 = vunpack.c.0.s8 %v3370
      %v3372 = vlaneseq
      %v3373 = vshrl.u32 %v3372, 7
      %v3374 = vsub.s32 %v3371, %v3373
      %v3375 = vrot.slane %v3367, %v3374
      %v3377 = vunpack.c.l.s4 1966171168
      %v3378 = vunpack.c.0.s8 %v3377
      %v3379 = vlaneseq
      %v3380 = vshrl.u32 %v3379, 7
      %v3381 = vsub.s32 %v3378, %v3380
      %v3382 = vrot.slane %v3368, %v3381
      %v3383 = vcombine.low %v3375, %v3382
      %v3384 = vcombine.low %v2040, %v2044
      %v3385 = vcombine.low %v2048, %v2052
      %v3386 = vcombine.low %v2056, %v2060
      %v3387 = vcombine.low %v2064, %v2068
      %v3389 = vunpack.c.l.s4 1966171168
      %v3390 = vunpack.c.0.s8 %v3389
      %v3391 = vlaneseq
      %v3392 = vshrl.u32 %v3391, 7
      %v3393 = vsub.s32 %v3390, %v3392
      %v3394 = vrot.slane %v3384, %v3393
      %v3396 = vunpack.c.l.s4 1966171168
      %v3397 = vunpack.c.0.s8 %v3396
      %v3398 = vlaneseq
      %v3399 = vshrl.u32 %v3398, 7
      %v3400 = vsub.s32 %v3397, %v3399
      %v3401 = vrot.slane %v3385, %v3400
      %v3403 = vunpack.c.l.s4 1966171168
      %v3404 = vunpack.c.0.s8 %v3403
      %v3405 = vlaneseq
      %v3406 = vshrl.u32 %v3405, 7
      %v3407 = vsub.s32 %v3404, %v3406
      %v3408 = vrot.slane %v3386, %v3407
      %v3410 = vunpack.c.l.s4 1966171168
      %v3411 = vunpack.c.0.s8 %v3410
      %v3412 = vlaneseq
      %v3413 = vshrl.u32 %v3412, 7
      %v3414 = vsub.s32 %v3411, %v3413
      %v3415 = vrot.slane %v3387, %v3414
      %v3416 = vcombine.low %v3394, %v3401
      %v3417 = vcombine.low %v3408, %v3415
      %v3419 = vunpack.c.l.s4 1966171168
      %v3420 = vunpack.c.0.s8 %v3419
      %v3421 = vlaneseq
      %v3422 = vshrl.u32 %v3421, 7
      %v3423 = vsub.s32 %v3420, %v3422
      %v3424 = vrot.slane %v3416, %v3423
      %v3426 = vunpack.c.l.s4 1966171168
      %v3427 = vunpack.c.0.s8 %v3426
      %v3428 = vlaneseq
      %v3429 = vshrl.u32 %v3428, 7
      %v3430 = vsub.s32 %v3427, %v3429
      %v3431 = vrot.slane %v3417, %v3430
      %v3432 = vcombine.low %v3424, %v3431
      %v3433 = vcombine.low %v2072, %v2076
      %v3434 = vcombine.low %v2080, %v2084
      %v3435 = vcombine.low %v2088, %v2092
      %v3436 = vcombine.low %v2096, %v2100
      %v3438 = vunpack.c.l.s4 1966171168
      %v3439 = vunpack.c.0.s8 %v3438
      %v3440 = vlaneseq
      %v3441 = vshrl.u32 %v3440, 7
      %v3442 = vsub.s32 %v3439, %v3441
      %v3443 = vrot.slane %v3433, %v3442
      %v3445 = vunpack.c.l.s4 1966171168
      %v3446 = vunpack.c.0.s8 %v3445
      %v3447 = vlaneseq
      %v3448 = vshrl.u32 %v3447, 7
      %v3449 = vsub.s32 %v3446, %v3448
      %v3450 = vrot.slane %v3434, %v3449
      %v3452 = vunpack.c.l.s4 1966171168
      %v3453 = vunpack.c.0.s8 %v3452
      %v3454 = vlaneseq
      %v3455 = vshrl.u32 %v3454, 7
      %v3456 = vsub.s32 %v3453, %v3455
      %v3457 = vrot.slane %v3435, %v3456
      %v3459 = vunpack.c.l.s4 1966171168
      %v3460 = vunpack.c.0.s8 %v3459
      %v3461 = vlaneseq
      %v3462 = vshrl.u32 %v3461, 7
      %v3463 = vsub.s32 %v3460, %v3462
      %v3464 = vrot.slane %v3436, %v3463
      %v3465 = vcombine.low %v3443, %v3450
      %v3466 = vcombine.low %v3457, %v3464
      %v3468 = vunpack.c.l.s4 1966171168
      %v3469 = vunpack.c.0.s8 %v3468
      %v3470 = vlaneseq
      %v3471 = vshrl.u32 %v3470, 7
      %v3472 = vsub.s32 %v3469, %v3471
      %v3473 = vrot.slane %v3465, %v3472
      %v3475 = vunpack.c.l.s4 1966171168
      %v3476 = vunpack.c.0.s8 %v3475
      %v3477 = vlaneseq
      %v3478 = vshrl.u32 %v3477, 7
      %v3479 = vsub.s32 %v3476, %v3478
      %v3480 = vrot.slane %v3466, %v3479
      %v3481 = vcombine.low %v3473, %v3480
      %v3482 = vcombine.low %v2104, %v2108
      %v3483 = vcombine.low %v2112, %v2116
      %v3484 = vcombine.low %v2120, %v2124
      %v3485 = vcombine.low %v2128, %v2132
      %v3487 = vunpack.c.l.s4 1966171168
      %v3488 = vunpack.c.0.s8 %v3487
      %v3489 = vlaneseq
      %v3490 = vshrl.u32 %v3489, 7
      %v3491 = vsub.s32 %v3488, %v3490
      %v3492 = vrot.slane %v3482, %v3491
      %v3494 = vunpack.c.l.s4 1966171168
      %v3495 = vunpack.c.0.s8 %v3494
      %v3496 = vlaneseq
      %v3497 = vshrl.u32 %v3496, 7
      %v3498 = vsub.s32 %v3495, %v3497
      %v3499 = vrot.slane %v3483, %v3498
      %v3501 = vunpack.c.l.s4 1966171168
      %v3502 = vunpack.c.0.s8 %v3501
      %v3503 = vlaneseq
      %v3504 = vshrl.u32 %v3503, 7
      %v3505 = vsub.s32 %v3502, %v3504
      %v3506 = vrot.slane %v3484, %v3505
      %v3508 = vunpack.c.l.s4 1966171168
      %v3509 = vunpack.c.0.s8 %v3508
      %v3510 = vlaneseq
      %v3511 = vshrl.u32 %v3510, 7
      %v3512 = vsub.s32 %v3509, %v3511
      %v3513 = vrot.slane %v3485, %v3512
      %v3514 = vcombine.low %v3492, %v3499
      %v3515 = vcombine.low %v3506, %v3513
      %v3517 = vunpack.c.l.s4 1966171168
      %v3518 = vunpack.c.0.s8 %v3517
      %v3519 = vlaneseq
      %v3520 = vshrl.u32 %v3519, 7
      %v3521 = vsub.s32 %v3518, %v3520
      %v3522 = vrot.slane %v3514, %v3521
      %v3524 = vunpack.c.l.s4 1966171168
      %v3525 = vunpack.c.0.s8 %v3524
      %v3526 = vlaneseq
      %v3527 = vshrl.u32 %v3526, 7
      %v3528 = vsub.s32 %v3525, %v3527
      %v3529 = vrot.slane %v3515, %v3528
      %v3530 = vcombine.low %v3522, %v3529
      %v3531 = vcombine.low %v2136, %v2140
      %v3532 = vcombine.low %v2144, %v2148
      %v3533 = vcombine.low %v2152, %v2156
      %v3534 = vcombine.low %v2160, %v2164
      %v3536 = vunpack.c.l.s4 1966171168
      %v3537 = vunpack.c.0.s8 %v3536
      %v3538 = vlaneseq
      %v3539 = vshrl.u32 %v3538, 7
      %v3540 = vsub.s32 %v3537, %v3539
      %v3541 = vrot.slane %v3531, %v3540
      %v3543 = vunpack.c.l.s4 1966171168
      %v3544 = vunpack.c.0.s8 %v3543
      %v3545 = vlaneseq
      %v3546 = vshrl.u32 %v3545, 7
      %v3547 = vsub.s32 %v3544, %v3546
      %v3548 = vrot.slane %v3532, %v3547
      %v3550 = vunpack.c.l.s4 1966171168
      %v3551 = vunpack.c.0.s8 %v3550
      %v3552 = vlaneseq
      %v3553 = vshrl.u32 %v3552, 7
      %v3554 = vsub.s32 %v3551, %v3553
      %v3555 = vrot.slane %v3533, %v3554
      %v3557 = vunpack.c.l.s4 1966171168
      %v3558 = vunpack.c.0.s8 %v3557
      %v3559 = vlaneseq
      %v3560 = vshrl.u32 %v3559, 7
      %v3561 = vsub.s32 %v3558, %v3560
      %v3562 = vrot.slane %v3534, %v3561
      %v3563 = vcombine.low %v3541, %v3548
      %v3564 = vcombine.low %v3555, %v3562
      %v3566 = vunpack.c.l.s4 1966171168
      %v3567 = vunpack.c.0.s8 %v3566
      %v3568 = vlaneseq
      %v3569 = vshrl.u32 %v3568, 7
      %v3570 = vsub.s32 %v3567, %v3569
      %v3571 = vrot.slane %v3563, %v3570
      %v3573 = vunpack.c.l.s4 1966171168
      %v3574 = vunpack.c.0.s8 %v3573
      %v3575 = vlaneseq
      %v3576 = vshrl.u32 %v3575, 7
      %v3577 = vsub.s32 %v3574, %v3576
      %v3578 = vrot.slane %v3564, %v3577
      %v3579 = vcombine.low %v3571, %v3578
      %v3580 = vcombine.low %v2168, %v2172
      %v3581 = vcombine.low %v2176, %v2180
      %v3582 = vcombine.low %v2184, %v2188
      %v3583 = vcombine.low %v2192, %v2196
      %v3585 = vunpack.c.l.s4 1966171168
      %v3586 = vunpack.c.0.s8 %v3585
      %v3587 = vlaneseq
      %v3588 = vshrl.u32 %v3587, 7
      %v3589 = vsub.s32 %v3586, %v3588
      %v3590 = vrot.slane %v3580, %v3589
      %v3592 = vunpack.c.l.s4 1966171168
      %v3593 = vunpack.c.0.s8 %v3592
      %v3594 = vlaneseq
      %v3595 = vshrl.u32 %v3594, 7
      %v3596 = vsub.s32 %v3593, %v3595
      %v3597 = vrot.slane %v3581, %v3596
      %v3599 = vunpack.c.l.s4 1966171168
      %v3600 = vunpack.c.0.s8 %v3599
      %v3601 = vlaneseq
      %v3602 = vshrl.u32 %v3601, 7
      %v3603 = vsub.s32 %v3600, %v3602
      %v3604 = vrot.slane %v3582, %v3603
      %v3606 = vunpack.c.l.s4 1966171168
      %v3607 = vunpack.c.0.s8 %v3606
      %v3608 = vlaneseq
      %v3609 = vshrl.u32 %v3608, 7
      %v3610 = vsub.s32 %v3607, %v3609
      %v3611 = vrot.slane %v3583, %v3610
      %v3612 = vcombine.low %v3590, %v3597
      %v3613 = vcombine.low %v3604, %v3611
      %v3615 = vunpack.c.l.s4 1966171168
      %v3616 = vunpack.c.0.s8 %v3615
      %v3617 = vlaneseq
      %v3618 = vshrl.u32 %v3617, 7
      %v3619 = vsub.s32 %v3616, %v3618
      %v3620 = vrot.slane %v3612, %v3619
      %v3622 = vunpack.c.l.s4 1966171168
      %v3623 = vunpack.c.0.s8 %v3622
      %v3624 = vlaneseq
      %v3625 = vshrl.u32 %v3624, 7
      %v3626 = vsub.s32 %v3623, %v3625
      %v3627 = vrot.slane %v3613, %v3626
      %v3628 = vcombine.low %v3620, %v3627
      %v3629 = vcombine.low %v2200, %v2204
      %v3630 = vcombine.low %v2208, %v2212
      %v3631 = vcombine.low %v2216, %v2220
      %v3632 = vcombine.low %v2224, %v2228
      %v3634 = vunpack.c.l.s4 1966171168
      %v3635 = vunpack.c.0.s8 %v3634
      %v3636 = vlaneseq
      %v3637 = vshrl.u32 %v3636, 7
      %v3638 = vsub.s32 %v3635, %v3637
      %v3639 = vrot.slane %v3629, %v3638
      %v3641 = vunpack.c.l.s4 1966171168
      %v3642 = vunpack.c.0.s8 %v3641
      %v3643 = vlaneseq
      %v3644 = vshrl.u32 %v3643, 7
      %v3645 = vsub.s32 %v3642, %v3644
      %v3646 = vrot.slane %v3630, %v3645
      %v3648 = vunpack.c.l.s4 1966171168
      %v3649 = vunpack.c.0.s8 %v3648
      %v3650 = vlaneseq
      %v3651 = vshrl.u32 %v3650, 7
      %v3652 = vsub.s32 %v3649, %v3651
      %v3653 = vrot.slane %v3631, %v3652
      %v3655 = vunpack.c.l.s4 1966171168
      %v3656 = vunpack.c.0.s8 %v3655
      %v3657 = vlaneseq
      %v3658 = vshrl.u32 %v3657, 7
      %v3659 = vsub.s32 %v3656, %v3658
      %v3660 = vrot.slane %v3632, %v3659
      %v3661 = vcombine.low %v3639, %v3646
      %v3662 = vcombine.low %v3653, %v3660
      %v3664 = vunpack.c.l.s4 1966171168
      %v3665 = vunpack.c.0.s8 %v3664
      %v3666 = vlaneseq
      %v3667 = vshrl.u32 %v3666, 7
      %v3668 = vsub.s32 %v3665, %v3667
      %v3669 = vrot.slane %v3661, %v3668
      %v3671 = vunpack.c.l.s4 1966171168
      %v3672 = vunpack.c.0.s8 %v3671
      %v3673 = vlaneseq
      %v3674 = vshrl.u32 %v3673, 7
      %v3675 = vsub.s32 %v3672, %v3674
      %v3676 = vrot.slane %v3662, %v3675
      %v3677 = vcombine.low %v3669, %v3676
      %v3678 = vcombine.low %v2232, %v2236
      %v3679 = vcombine.low %v2240, %v2244
      %v3680 = vcombine.low %v2248, %v2252
      %v3681 = vcombine.low %v2256, %v2260
      %v3683 = vunpack.c.l.s4 1966171168
      %v3684 = vunpack.c.0.s8 %v3683
      %v3685 = vlaneseq
      %v3686 = vshrl.u32 %v3685, 7
      %v3687 = vsub.s32 %v3684, %v3686
      %v3688 = vrot.slane %v3678, %v3687
      %v3690 = vunpack.c.l.s4 1966171168
      %v3691 = vunpack.c.0.s8 %v3690
      %v3692 = vlaneseq
      %v3693 = vshrl.u32 %v3692, 7
      %v3694 = vsub.s32 %v3691, %v3693
      %v3695 = vrot.slane %v3679, %v3694
      %v3697 = vunpack.c.l.s4 1966171168
      %v3698 = vunpack.c.0.s8 %v3697
      %v3699 = vlaneseq
      %v3700 = vshrl.u32 %v3699, 7
      %v3701 = vsub.s32 %v3698, %v3700
      %v3702 = vrot.slane %v3680, %v3701
      %v3704 = vunpack.c.l.s4 1966171168
      %v3705 = vunpack.c.0.s8 %v3704
      %v3706 = vlaneseq
      %v3707 = vshrl.u32 %v3706, 7
      %v3708 = vsub.s32 %v3705, %v3707
      %v3709 = vrot.slane %v3681, %v3708
      %v3710 = vcombine.low %v3688, %v3695
      %v3711 = vcombine.low %v3702, %v3709
      %v3713 = vunpack.c.l.s4 1966171168
      %v3714 = vunpack.c.0.s8 %v3713
      %v3715 = vlaneseq
      %v3716 = vshrl.u32 %v3715, 7
      %v3717 = vsub.s32 %v3714, %v3716
      %v3718 = vrot.slane %v3710, %v3717
      %v3720 = vunpack.c.l.s4 1966171168
      %v3721 = vunpack.c.0.s8 %v3720
      %v3722 = vlaneseq
      %v3723 = vshrl.u32 %v3722, 7
      %v3724 = vsub.s32 %v3721, %v3723
      %v3725 = vrot.slane %v3711, %v3724
      %v3726 = vcombine.low %v3718, %v3725
      %v3727 = vcombine.low %v2264, %v2268
      %v3728 = vcombine.low %v2272, %v2276
      %v3729 = vcombine.low %v2280, %v2284
      %v3730 = vcombine.low %v2288, %v2292
      %v3732 = vunpack.c.l.s4 1966171168
      %v3733 = vunpack.c.0.s8 %v3732
      %v3734 = vlaneseq
      %v3735 = vshrl.u32 %v3734, 7
      %v3736 = vsub.s32 %v3733, %v3735
      %v3737 = vrot.slane %v3727, %v3736
      %v3739 = vunpack.c.l.s4 1966171168
      %v3740 = vunpack.c.0.s8 %v3739
      %v3741 = vlaneseq
      %v3742 = vshrl.u32 %v3741, 7
      %v3743 = vsub.s32 %v3740, %v3742
      %v3744 = vrot.slane %v3728, %v3743
      %v3746 = vunpack.c.l.s4 1966171168
      %v3747 = vunpack.c.0.s8 %v3746
      %v3748 = vlaneseq
      %v3749 = vshrl.u32 %v3748, 7
      %v3750 = vsub.s32 %v3747, %v3749
      %v3751 = vrot.slane %v3729, %v3750
      %v3753 = vunpack.c.l.s4 1966171168
      %v3754 = vunpack.c.0.s8 %v3753
      %v3755 = vlaneseq
      %v3756 = vshrl.u32 %v3755, 7
      %v3757 = vsub.s32 %v3754, %v3756
      %v3758 = vrot.slane %v3730, %v3757
      %v3759 = vcombine.low %v3737, %v3744
      %v3760 = vcombine.low %v3751, %v3758
      %v3762 = vunpack.c.l.s4 1966171168
      %v3763 = vunpack.c.0.s8 %v3762
      %v3764 = vlaneseq
      %v3765 = vshrl.u32 %v3764, 7
      %v3766 = vsub.s32 %v3763, %v3765
      %v3767 = vrot.slane %v3759, %v3766
      %v3769 = vunpack.c.l.s4 1966171168
      %v3770 = vunpack.c.0.s8 %v3769
      %v3771 = vlaneseq
      %v3772 = vshrl.u32 %v3771, 7
      %v3773 = vsub.s32 %v3770, %v3772
      %v3774 = vrot.slane %v3760, %v3773
      %v3775 = vcombine.low %v3767, %v3774
      %v3776 = vcombine.low %v2296, %v2300
      %v3777 = vcombine.low %v2304, %v2308
      %v3778 = vcombine.low %v2312, %v2316
      %v3779 = vcombine.low %v2320, %v2324
      %v3781 = vunpack.c.l.s4 1966171168
      %v3782 = vunpack.c.0.s8 %v3781
      %v3783 = vlaneseq
      %v3784 = vshrl.u32 %v3783, 7
      %v3785 = vsub.s32 %v3782, %v3784
      %v3786 = vrot.slane %v3776, %v3785
      %v3788 = vunpack.c.l.s4 1966171168
      %v3789 = vunpack.c.0.s8 %v3788
      %v3790 = vlaneseq
      %v3791 = vshrl.u32 %v3790, 7
      %v3792 = vsub.s32 %v3789, %v3791
      %v3793 = vrot.slane %v3777, %v3792
      %v3795 = vunpack.c.l.s4 1966171168
      %v3796 = vunpack.c.0.s8 %v3795
      %v3797 = vlaneseq
      %v3798 = vshrl.u32 %v3797, 7
      %v3799 = vsub.s32 %v3796, %v3798
      %v3800 = vrot.slane %v3778, %v3799
      %v3802 = vunpack.c.l.s4 1966171168
      %v3803 = vunpack.c.0.s8 %v3802
      %v3804 = vlaneseq
      %v3805 = vshrl.u32 %v3804, 7
      %v3806 = vsub.s32 %v3803, %v3805
      %v3807 = vrot.slane %v3779, %v3806
      %v3808 = vcombine.low %v3786, %v3793
      %v3809 = vcombine.low %v3800, %v3807
      %v3811 = vunpack.c.l.s4 1966171168
      %v3812 = vunpack.c.0.s8 %v3811
      %v3813 = vlaneseq
      %v3814 = vshrl.u32 %v3813, 7
      %v3815 = vsub.s32 %v3812, %v3814
      %v3816 = vrot.slane %v3808, %v3815
      %v3818 = vunpack.c.l.s4 1966171168
      %v3819 = vunpack.c.0.s8 %v3818
      %v3820 = vlaneseq
      %v3821 = vshrl.u32 %v3820, 7
      %v3822 = vsub.s32 %v3819, %v3821
      %v3823 = vrot.slane %v3809, %v3822
      %v3824 = vcombine.low %v3816, %v3823
      %v3825 = vcombine.low %v2328, %v2332
      %v3826 = vcombine.low %v2336, %v2340
      %v3827 = vcombine.low %v2344, %v2348
      %v3828 = vcombine.low %v2352, %v2356
      %v3830 = vunpack.c.l.s4 1966171168
      %v3831 = vunpack.c.0.s8 %v3830
      %v3832 = vlaneseq
      %v3833 = vshrl.u32 %v3832, 7
      %v3834 = vsub.s32 %v3831, %v3833
      %v3835 = vrot.slane %v3825, %v3834
      %v3837 = vunpack.c.l.s4 1966171168
      %v3838 = vunpack.c.0.s8 %v3837
      %v3839 = vlaneseq
      %v3840 = vshrl.u32 %v3839, 7
      %v3841 = vsub.s32 %v3838, %v3840
      %v3842 = vrot.slane %v3826, %v3841
      %v3844 = vunpack.c.l.s4 1966171168
      %v3845 = vunpack.c.0.s8 %v3844
      %v3846 = vlaneseq
      %v3847 = vshrl.u32 %v3846, 7
      %v3848 = vsub.s32 %v3845, %v3847
      %v3849 = vrot.slane %v3827, %v3848
      %v3851 = vunpack.c.l.s4 1966171168
      %v3852 = vunpack.c.0.s8 %v3851
      %v3853 = vlaneseq
      %v3854 = vshrl.u32 %v3853, 7
      %v3855 = vsub.s32 %v3852, %v3854
      %v3856 = vrot.slane %v3828, %v3855
      %v3857 = vcombine.low %v3835, %v3842
      %v3858 = vcombine.low %v3849, %v3856
      %v3860 = vunpack.c.l.s4 1966171168
      %v3861 = vunpack.c.0.s8 %v3860
      %v3862 = vlaneseq
      %v3863 = vshrl.u32 %v3862, 7
      %v3864 = vsub.s32 %v3861, %v3863
      %v3865 = vrot.slane %v3857, %v3864
      %v3867 = vunpack.c.l.s4 1966171168
      %v3868 = vunpack.c.0.s8 %v3867
      %v3869 = vlaneseq
      %v3870 = vshrl.u32 %v3869, 7
      %v3871 = vsub.s32 %v3868, %v3870
      %v3872 = vrot.slane %v3858, %v3871
      %v3873 = vcombine.low %v3865, %v3872
      %v3874 = vcombine.low %v2360, %v2364
      %v3875 = vcombine.low %v2368, %v2372
      %v3876 = vcombine.low %v2376, %v2380
      %v3877 = vcombine.low %v2384, %v2388
      %v3879 = vunpack.c.l.s4 1966171168
      %v3880 = vunpack.c.0.s8 %v3879
      %v3881 = vlaneseq
      %v3882 = vshrl.u32 %v3881, 7
      %v3883 = vsub.s32 %v3880, %v3882
      %v3884 = vrot.slane %v3874, %v3883
      %v3886 = vunpack.c.l.s4 1966171168
      %v3887 = vunpack.c.0.s8 %v3886
      %v3888 = vlaneseq
      %v3889 = vshrl.u32 %v3888, 7
      %v3890 = vsub.s32 %v3887, %v3889
      %v3891 = vrot.slane %v3875, %v3890
      %v3893 = vunpack.c.l.s4 1966171168
      %v3894 = vunpack.c.0.s8 %v3893
      %v3895 = vlaneseq
      %v3896 = vshrl.u32 %v3895, 7
      %v3897 = vsub.s32 %v3894, %v3896
      %v3898 = vrot.slane %v3876, %v3897
      %v3900 = vunpack.c.l.s4 1966171168
      %v3901 = vunpack.c.0.s8 %v3900
      %v3902 = vlaneseq
      %v3903 = vshrl.u32 %v3902, 7
      %v3904 = vsub.s32 %v3901, %v3903
      %v3905 = vrot.slane %v3877, %v3904
      %v3906 = vcombine.low %v3884, %v3891
      %v3907 = vcombine.low %v3898, %v3905
      %v3909 = vunpack.c.l.s4 1966171168
      %v3910 = vunpack.c.0.s8 %v3909
      %v3911 = vlaneseq
      %v3912 = vshrl.u32 %v3911, 7
      %v3913 = vsub.s32 %v3910, %v3912
      %v3914 = vrot.slane %v3906, %v3913
      %v3916 = vunpack.c.l.s4 1966171168
      %v3917 = vunpack.c.0.s8 %v3916
      %v3918 = vlaneseq
      %v3919 = vshrl.u32 %v3918, 7
      %v3920 = vsub.s32 %v3917, %v3919
      %v3921 = vrot.slane %v3907, %v3920
      %v3922 = vcombine.low %v3914, %v3921
      %v3923 = vcombine.low %v2392, %v2396
      %v3924 = vcombine.low %v2400, %v2404
      %v3925 = vcombine.low %v2408, %v2412
      %v3926 = vcombine.low %v2416, %v2420
      %v3928 = vunpack.c.l.s4 1966171168
      %v3929 = vunpack.c.0.s8 %v3928
      %v3930 = vlaneseq
      %v3931 = vshrl.u32 %v3930, 7
      %v3932 = vsub.s32 %v3929, %v3931
      %v3933 = vrot.slane %v3923, %v3932
      %v3935 = vunpack.c.l.s4 1966171168
      %v3936 = vunpack.c.0.s8 %v3935
      %v3937 = vlaneseq
      %v3938 = vshrl.u32 %v3937, 7
      %v3939 = vsub.s32 %v3936, %v3938
      %v3940 = vrot.slane %v3924, %v3939
      %v3942 = vunpack.c.l.s4 1966171168
      %v3943 = vunpack.c.0.s8 %v3942
      %v3944 = vlaneseq
      %v3945 = vshrl.u32 %v3944, 7
      %v3946 = vsub.s32 %v3943, %v3945
      %v3947 = vrot.slane %v3925, %v3946
      %v3949 = vunpack.c.l.s4 1966171168
      %v3950 = vunpack.c.0.s8 %v3949
      %v3951 = vlaneseq
      %v3952 = vshrl.u32 %v3951, 7
      %v3953 = vsub.s32 %v3950, %v3952
      %v3954 = vrot.slane %v3926, %v3953
      %v3955 = vcombine.low %v3933, %v3940
      %v3956 = vcombine.low %v3947, %v3954
      %v3958 = vunpack.c.l.s4 1966171168
      %v3959 = vunpack.c.0.s8 %v3958
      %v3960 = vlaneseq
      %v3961 = vshrl.u32 %v3960, 7
      %v3962 = vsub.s32 %v3959, %v3961
      %v3963 = vrot.slane %v3955, %v3962
      %v3965 = vunpack.c.l.s4 1966171168
      %v3966 = vunpack.c.0.s8 %v3965
      %v3967 = vlaneseq
      %v3968 = vshrl.u32 %v3967, 7
      %v3969 = vsub.s32 %v3966, %v3968
      %v3970 = vrot.slane %v3956, %v3969
      %v3971 = vcombine.low %v3963, %v3970
      %v3972 = vcombine.low %v2424, %v2428
      %v3973 = vcombine.low %v2432, %v2436
      %v3974 = vcombine.low %v2440, %v2444
      %v3975 = vcombine.low %v2448, %v2452
      %v3977 = vunpack.c.l.s4 1966171168
      %v3978 = vunpack.c.0.s8 %v3977
      %v3979 = vlaneseq
      %v3980 = vshrl.u32 %v3979, 7
      %v3981 = vsub.s32 %v3978, %v3980
      %v3982 = vrot.slane %v3972, %v3981
      %v3984 = vunpack.c.l.s4 1966171168
      %v3985 = vunpack.c.0.s8 %v3984
      %v3986 = vlaneseq
      %v3987 = vshrl.u32 %v3986, 7
      %v3988 = vsub.s32 %v3985, %v3987
      %v3989 = vrot.slane %v3973, %v3988
      %v3991 = vunpack.c.l.s4 1966171168
      %v3992 = vunpack.c.0.s8 %v3991
      %v3993 = vlaneseq
      %v3994 = vshrl.u32 %v3993, 7
      %v3995 = vsub.s32 %v3992, %v3994
      %v3996 = vrot.slane %v3974, %v3995
      %v3998 = vunpack.c.l.s4 1966171168
      %v3999 = vunpack.c.0.s8 %v3998
      %v4000 = vlaneseq
      %v4001 = vshrl.u32 %v4000, 7
      %v4002 = vsub.s32 %v3999, %v4001
      %v4003 = vrot.slane %v3975, %v4002
      %v4004 = vcombine.low %v3982, %v3989
      %v4005 = vcombine.low %v3996, %v4003
      %v4007 = vunpack.c.l.s4 1966171168
      %v4008 = vunpack.c.0.s8 %v4007
      %v4009 = vlaneseq
      %v4010 = vshrl.u32 %v4009, 7
      %v4011 = vsub.s32 %v4008, %v4010
      %v4012 = vrot.slane %v4004, %v4011
      %v4014 = vunpack.c.l.s4 1966171168
      %v4015 = vunpack.c.0.s8 %v4014
      %v4016 = vlaneseq
      %v4017 = vshrl.u32 %v4016, 7
      %v4018 = vsub.s32 %v4015, %v4017
      %v4019 = vrot.slane %v4005, %v4018
      %v4020 = vcombine.low %v4012, %v4019
      %4021 = vset.pattern.permute.xlu0 0
      %4022 = vperm.xlu0 %4021, %v2501
      %v4023 = vpop.permute.xlu0 %4022
      %4024 = vset.pattern.permute.xlu0 0
      %4025 = vperm.xlu0 %4024, %v2550
      %v4026 = vpop.permute.xlu0 %4025
      %4027 = vset.pattern.permute.xlu0 0
      %4028 = vperm.xlu0 %4027, %v2599
      %v4029 = vpop.permute.xlu0 %4028
      %4030 = vset.pattern.permute.xlu0 0
      %4031 = vperm.xlu0 %4030, %v2648
      %v4032 = vpop.permute.xlu0 %4031
      %4033 = vset.pattern.permute.xlu0 0
      %4034 = vperm.xlu0 %4033, %v2697
      %v4035 = vpop.permute.xlu0 %4034
      %4036 = vset.pattern.permute.xlu0 0
      %4037 = vperm.xlu0 %4036, %v2746
      %v4038 = vpop.permute.xlu0 %4037
      %4039 = vset.pattern.permute.xlu0 0
      %4040 = vperm.xlu0 %4039, %v2795
      %v4041 = vpop.permute.xlu0 %4040
      %4042 = vset.pattern.permute.xlu0 0
      %4043 = vperm.xlu0 %4042, %v2844
      %v4044 = vpop.permute.xlu0 %4043
      %4045 = vset.pattern.permute.xlu0 0
      %4046 = vperm.xlu0 %4045, %v2893
      %v4047 = vpop.permute.xlu0 %4046
      %4048 = vset.pattern.permute.xlu0 0
      %4049 = vperm.xlu0 %4048, %v2942
      %v4050 = vpop.permute.xlu0 %4049
      %4051 = vset.pattern.permute.xlu0 0
      %4052 = vperm.xlu0 %4051, %v2991
      %v4053 = vpop.permute.xlu0 %4052
      %4054 = vset.pattern.permute.xlu0 0
      %4055 = vperm.xlu0 %4054, %v3040
      %v4056 = vpop.permute.xlu0 %4055
      %4057 = vset.pattern.permute.xlu0 0
      %4058 = vperm.xlu0 %4057, %v3089
      %v4059 = vpop.permute.xlu0 %4058
      %4060 = vset.pattern.permute.xlu0 0
      %4061 = vperm.xlu0 %4060, %v3138
      %v4062 = vpop.permute.xlu0 %4061
      %4063 = vset.pattern.permute.xlu0 0
      %4064 = vperm.xlu0 %4063, %v3187
      %v4065 = vpop.permute.xlu0 %4064
      %4066 = vset.pattern.permute.xlu0 0
      %4067 = vperm.xlu0 %4066, %v3236
      %v4068 = vpop.permute.xlu0 %4067
      %4069 = vset.pattern.permute.xlu0 0
      %4070 = vperm.xlu0 %4069, %v3285
      %v4071 = vpop.permute.xlu0 %4070
      %4072 = vset.pattern.permute.xlu0 0
      %4073 = vperm.xlu0 %4072, %v3334
      %v4074 = vpop.permute.xlu0 %4073
      %4075 = vset.pattern.permute.xlu0 0
      %4076 = vperm.xlu0 %4075, %v3383
      %v4077 = vpop.permute.xlu0 %4076
      %4078 = vset.pattern.permute.xlu0 0
      %4079 = vperm.xlu0 %4078, %v3432
      %v4080 = vpop.permute.xlu0 %4079
      %4081 = vset.pattern.permute.xlu0 0
      %4082 = vperm.xlu0 %4081, %v3481
      %v4083 = vpop.permute.xlu0 %4082
      %4084 = vset.pattern.permute.xlu0 0
      %4085 = vperm.xlu0 %4084, %v3530
      %v4086 = vpop.permute.xlu0 %4085
      %4087 = vset.pattern.permute.xlu0 0
      %4088 = vperm.xlu0 %4087, %v3579
      %v4089 = vpop.permute.xlu0 %4088
      %4090 = vset.pattern.permute.xlu0 0
      %4091 = vperm.xlu0 %4090, %v3628
      %v4092 = vpop.permute.xlu0 %4091
      %4093 = vset.pattern.permute.xlu0 0
      %4094 = vperm.xlu0 %4093, %v3677
      %v4095 = vpop.permute.xlu0 %4094
      %4096 = vset.pattern.permute.xlu0 0
      %4097 = vperm.xlu0 %4096, %v3726
      %v4098 = vpop.permute.xlu0 %4097
      %4099 = vset.pattern.permute.xlu0 0
      %4100 = vperm.xlu0 %4099, %v3775
      %v4101 = vpop.permute.xlu0 %4100
      %4102 = vset.pattern.permute.xlu0 0
      %4103 = vperm.xlu0 %4102, %v3824
      %v4104 = vpop.permute.xlu0 %4103
      %4105 = vset.pattern.permute.xlu0 0
      %4106 = vperm.xlu0 %4105, %v3873
      %v4107 = vpop.permute.xlu0 %4106
      %4108 = vset.pattern.permute.xlu0 0
      %4109 = vperm.xlu0 %4108, %v3922
      %v4110 = vpop.permute.xlu0 %4109
      %4111 = vset.pattern.permute.xlu0 0
      %4112 = vperm.xlu0 %4111, %v3971
      %v4113 = vpop.permute.xlu0 %4112
      %4114 = vset.pattern.permute.xlu0 0
      %4115 = vperm.xlu0 %4114, %v4020
      %v4116 = vpop.permute.xlu0 %4115
      %v4117 = vlaneseq
      %v4118 = vand.u32 %v4117, 127
      %v4119 = vlaneseq
      %v4120 = vshrl.u32 %v4119, 7
      %v4121 = vsub.s32 %v4118, %v4120
      %v4122 = vrot.slane %v4023, %v4121
      %v4123 = vadd.s32 %v4118, 4294967288
      %v4124 = vlaneseq
      %v4125 = vshrl.u32 %v4124, 7
      %v4126 = vsub.s32 %v4123, %v4125
      %v4127 = vrot.slane %v4026, %v4126
      %vm4128 = vcmask 130112
      %v4129 = vsel %vm4128, %v4127, %v4122
      %v4130 = vadd.s32 %v4118, 4294967280
      %v4131 = vlaneseq
      %v4132 = vshrl.u32 %v4131, 7
      %v4133 = vsub.s32 %v4130, %v4132
      %v4134 = vrot.slane %v4029, %v4133
      %vm4135 = vcmask 195712
      %v4136 = vsel %vm4135, %v4134, %v4129
      %v4137 = vadd.s32 %v4118, 4294967272
      %v4138 = vlaneseq
      %v4139 = vshrl.u32 %v4138, 7
      %v4140 = vsub.s32 %v4137, %v4139
      %v4141 = vrot.slane %v4032, %v4140
      %vm4142 = vcmask 261312
      %v4143 = vsel %vm4142, %v4141, %v4136
      %v4144 = vadd.s32 %v4118, 4294967264
      %v4145 = vlaneseq
      %v4146 = vshrl.u32 %v4145, 7
      %v4147 = vsub.s32 %v4144, %v4146
      %v4148 = vrot.slane %v4035, %v4147
      %vm4149 = vcmask 326912
      %v4150 = vsel %vm4149, %v4148, %v4143
      %v4151 = vadd.s32 %v4118, 4294967256
      %v4152 = vlaneseq
      %v4153 = vshrl.u32 %v4152, 7
      %v4154 = vsub.s32 %v4151, %v4153
      %v4155 = vrot.slane %v4038, %v4154
      %vm4156 = vcmask 392512
      %v4157 = vsel %vm4156, %v4155, %v4150
      %v4158 = vadd.s32 %v4118, 4294967248
      %v4159 = vlaneseq
      %v4160 = vshrl.u32 %v4159, 7
      %v4161 = vsub.s32 %v4158, %v4160
      %v4162 = vrot.slane %v4041, %v4161
      %vm4163 = vcmask 458112
      %v4164 = vsel %vm4163, %v4162, %v4157
      %v4165 = vadd.s32 %v4118, 4294967240
      %v4166 = vlaneseq
      %v4167 = vshrl.u32 %v4166, 7
      %v4168 = vsub.s32 %v4165, %v4167
      %v4169 = vrot.slane %v4044, %v4168
      %vm4170 = vcmask 523712
      %v4171 = vsel %vm4170, %v4169, %v4164
      %v4172 = vadd.s32 %v4118, 4294967232
      %v4173 = vlaneseq
      %v4174 = vshrl.u32 %v4173, 7
      %v4175 = vsub.s32 %v4172, %v4174
      %v4176 = vrot.slane %v4047, %v4175
      %vm4177 = vcmask 589312
      %v4178 = vsel %vm4177, %v4176, %v4171
      %v4179 = vadd.s32 %v4118, 4294967224
      %v4180 = vlaneseq
      %v4181 = vshrl.u32 %v4180, 7
      %v4182 = vsub.s32 %v4179, %v4181
      %v4183 = vrot.slane %v4050, %v4182
      %vm4184 = vcmask 654912
      %v4185 = vsel %vm4184, %v4183, %v4178
      %v4186 = vadd.s32 %v4118, 4294967216
      %v4187 = vlaneseq
      %v4188 = vshrl.u32 %v4187, 7
      %v4189 = vsub.s32 %v4186, %v4188
      %v4190 = vrot.slane %v4053, %v4189
      %vm4191 = vcmask 720512
      %v4192 = vsel %vm4191, %v4190, %v4185
      %v4193 = vadd.s32 %v4118, 4294967208
      %v4194 = vlaneseq
      %v4195 = vshrl.u32 %v4194, 7
      %v4196 = vsub.s32 %v4193, %v4195
      %v4197 = vrot.slane %v4056, %v4196
      %vm4198 = vcmask 786112
      %v4199 = vsel %vm4198, %v4197, %v4192
      %v4200 = vadd.s32 %v4118, 4294967200
      %v4201 = vlaneseq
      %v4202 = vshrl.u32 %v4201, 7
      %v4203 = vsub.s32 %v4200, %v4202
      %v4204 = vrot.slane %v4059, %v4203
      %vm4205 = vcmask 851712
      %v4206 = vsel %vm4205, %v4204, %v4199
      %v4207 = vadd.s32 %v4118, 4294967192
      %v4208 = vlaneseq
      %v4209 = vshrl.u32 %v4208, 7
      %v4210 = vsub.s32 %v4207, %v4209
      %v4211 = vrot.slane %v4062, %v4210
      %vm4212 = vcmask 917312
      %v4213 = vsel %vm4212, %v4211, %v4206
      %v4214 = vadd.s32 %v4118, 4294967184
      %v4215 = vlaneseq
      %v4216 = vshrl.u32 %v4215, 7
      %v4217 = vsub.s32 %v4214, %v4216
      %v4218 = vrot.slane %v4065, %v4217
      %vm4219 = vcmask 982912
      %v4220 = vsel %vm4219, %v4218, %v4213
      %v4221 = vadd.s32 %v4118, 4294967176
      %v4222 = vlaneseq
      %v4223 = vshrl.u32 %v4222, 7
      %v4224 = vsub.s32 %v4221, %v4223
      %v4225 = vrot.slane %v4068, %v4224
      %vm4226 = vcmask 1048512
      %v4227 = vsel %vm4226, %v4225, %v4220
      %v4228 = vlaneseq
      %v4229 = vshrl.u32 %v4228, 7
      %v4230 = vsub.s32 %v4118, %v4229
      %v4231 = vrot.slane %v4071, %v4230
      %v4232 = vlaneseq
      %v4233 = vshrl.u32 %v4232, 7
      %v4234 = vsub.s32 %v4123, %v4233
      %v4235 = vrot.slane %v4074, %v4234
      %v4236 = vsel %vm4128, %v4235, %v4231
      %v4237 = vlaneseq
      %v4238 = vshrl.u32 %v4237, 7
      %v4239 = vsub.s32 %v4130, %v4238
      %v4240 = vrot.slane %v4077, %v4239
      %v4241 = vsel %vm4135, %v4240, %v4236
      %v4242 = vlaneseq
      %v4243 = vshrl.u32 %v4242, 7
      %v4244 = vsub.s32 %v4137, %v4243
      %v4245 = vrot.slane %v4080, %v4244
      %v4246 = vsel %vm4142, %v4245, %v4241
      %v4247 = vlaneseq
      %v4248 = vshrl.u32 %v4247, 7
      %v4249 = vsub.s32 %v4144, %v4248
      %v4250 = vrot.slane %v4083, %v4249
      %v4251 = vsel %vm4149, %v4250, %v4246
      %v4252 = vlaneseq
      %v4253 = vshrl.u32 %v4252, 7
      %v4254 = vsub.s32 %v4151, %v4253
      %v4255 = vrot.slane %v4086, %v4254
      %v4256 = vsel %vm4156, %v4255, %v4251
      %v4257 = vlaneseq
      %v4258 = vshrl.u32 %v4257, 7
      %v4259 = vsub.s32 %v4158, %v4258
      %v4260 = vrot.slane %v4089, %v4259
      %v4261 = vsel %vm4163, %v4260, %v4256
      %v4262 = vlaneseq
      %v4263 = vshrl.u32 %v4262, 7
      %v4264 = vsub.s32 %v4165, %v4263
      %v4265 = vrot.slane %v4092, %v4264
      %v4266 = vsel %vm4170, %v4265, %v4261
      %v4267 = vlaneseq
      %v4268 = vshrl.u32 %v4267, 7
      %v4269 = vsub.s32 %v4172, %v4268
      %v4270 = vrot.slane %v4095, %v4269
      %v4271 = vsel %vm4177, %v4270, %v4266
      %v4272 = vlaneseq
      %v4273 = vshrl.u32 %v4272, 7
      %v4274 = vsub.s32 %v4179, %v4273
      %v4275 = vrot.slane %v4098, %v4274
      %v4276 = vsel %vm4184, %v4275, %v4271
      %v4277 = vlaneseq
      %v4278 = vshrl.u32 %v4277, 7
      %v4279 = vsub.s32 %v4186, %v4278
      %v4280 = vrot.slane %v4101, %v4279
      %v4281 = vsel %vm4191, %v4280, %v4276
      %v4282 = vlaneseq
      %v4283 = vshrl.u32 %v4282, 7
      %v4284 = vsub.s32 %v4193, %v4283
      %v4285 = vrot.slane %v4104, %v4284
      %v4286 = vsel %vm4198, %v4285, %v4281
      %v4287 = vlaneseq
      %v4288 = vshrl.u32 %v4287, 7
      %v4289 = vsub.s32 %v4200, %v4288
      %v4290 = vrot.slane %v4107, %v4289
      %v4291 = vsel %vm4205, %v4290, %v4286
      %v4292 = vlaneseq
      %v4293 = vshrl.u32 %v4292, 7
      %v4294 = vsub.s32 %v4207, %v4293
      %v4295 = vrot.slane %v4110, %v4294
      %v4296 = vsel %vm4212, %v4295, %v4291
      %v4297 = vlaneseq
      %v4298 = vshrl.u32 %v4297, 7
      %v4299 = vsub.s32 %v4214, %v4298
      %v4300 = vrot.slane %v4113, %v4299
      %v4301 = vsel %vm4219, %v4300, %v4296
      %v4302 = vlaneseq
      %v4303 = vshrl.u32 %v4302, 7
      %v4304 = vsub.s32 %v4221, %v4303
      %v4305 = vrot.slane %v4116, %v4304
      %v4306 = vsel %vm4226, %v4305, %v4301
      %v4307 = vcombine.low %v4227, %v4306
      %v4309 = vunpack.c.l.s4 1966171168
      %v4310 = vunpack.c.0.s8 %v4309
      %v4311 = vlaneseq
      %v4312 = vshrl.u32 %v4311, 7
      %v4313 = vsub.s32 %v4310, %v4312
      %v4314 = vrot.slane %v4307, %v4313
      %v4316 = vunpack.c.l.s4 1966171168
      %v4317 = vunpack.c.0.s8 %v4316
      %v4318 = vlaneseq
      %v4319 = vshrl.u32 %v4318, 7
      %v4320 = vsub.s32 %v4317, %v4319
      %v4321 = vrot.slane %v4314, %v4320
      %v4323 = vlaneseq
      %vm4324 = vcmp.ge.s32.totalorder %v4323, 0
      %vm4325 = vcmp.lt.s32.totalorder %v4323, 256
      %vm4326 = vmand %vm4324, %vm4325
      %4327 = vst.msk [vmem:[%s273] sm:$0x3] %vm4326, %v4321
      %s4328 = smul.u32 2, %s17
      %p4329 = scmp.lt.s32.totalorder %s4328, 7
      %s4330 = scalar_select %p4329, %s4328, 7
      %s4331 = scalar_lea.vmem %s6, %s4330
      // Predicated region
      $region45: #{edge_emb_reconstruction.1} parent=43 // pred_check
        %p4332 = pneg %p171
      $region46: #{edge_emb_reconstruction.1} parent=43 // pred_check_branch
        %4334 = sbr.rel (%p4332) target = $region48
      $region47: #{edge_emb_reconstruction.1} parent=43 // pred_region
        %s4335 = smul.u32 2, %s17
      $region48: #{edge_emb_reconstruction.1} parent=43 // pred_fallthru
        _
    $region44: #{edge_emb_reconstruction.1} parent=5 // pred_fallthru
      _
    %p4336 = scmp.le.s32.totalorder 2, %s12
    // Predicated region
    $region49: #{edge_emb_reconstruction.1} parent=5 // pred_check
      %p4337 = pneg %p4336
    $region50: #{edge_emb_reconstruction.1} parent=5 // pred_check_branch
      %4339 = sbr.rel (%p4337) target = $region52
    $region51: #{edge_emb_reconstruction.1} parent=5 // pred_region
      %s4340 = ssub.s32 %s12, 2
      // Predicated region
      $region53: #{edge_emb_reconstruction.1} parent=51 // pred_check
        %p4341 = pneg %p177
      $region54: #{edge_emb_reconstruction.1} parent=51 // pred_check_branch
        %4343 = sbr.rel (%p4341) target = $region56
      $region55: #{edge_emb_reconstruction.1} parent=51 // pred_region
        %s4344 = smul.u32 2, %s18
        %p4345 = scmp.lt.s32.totalorder %s4344, 7
        %s4346 = scalar_select %p4345, %s4344, 7
        %s4347 = scalar_lea.vmem %s6, %s4346
      $region56: #{edge_emb_reconstruction.1} parent=51 // pred_fallthru
        _
    $region52: #{edge_emb_reconstruction.1} parent=5 // pred_fallthru
      _
  $region6: #{edge_emb_reconstruction.1} parent=0 // loop_footer
    %s16 = sadd.s32 1, %s12
  $region7: #{edge_emb_reconstruction.1} parent=0 // loop_footer_branch
    %11 = sbr.rel target = $region3
  $region8: #{edge_emb_reconstruction.1} parent=0 // loop_exit
    _

</llo_original>
